<compile_context>
chip_gen: v7x
topology: tpu7x:2x2x1
jax: 0.10.0
libtpu: 0.0.40
codegen_flags: <defaults>
</compile_context>

<pallas_src>
import functools
import math

import jax
import jax.numpy as jnp
from jax.experimental import pallas as pl
from jax.experimental.pallas import tpu as pltpu


def _layernorm(x, gamma, beta, eps=1e-5):
    # f32 elementwise path on all generations.
    mu = jnp.mean(x, axis=-1, keepdims=True)
    var = jnp.mean((x - mu) ** 2, axis=-1, keepdims=True)
    return (x - mu) * jax.lax.rsqrt(var + eps) * gamma + beta


def _largest_divisor_leq(n, target):
    d = max(1, min(n, target))
    while n % d != 0:
        d -= 1
    return d


def decoder_block_kernel(x_ref,
                         ln1_g_ref, ln1_b_ref,
                         wqkv_ref, bqkv_ref,
                         wproj_ref, bproj_ref,
                         ln2_g_ref, ln2_b_ref,
                         w1_ref, b1_ref,
                         w2_ref, b2_ref,
                         o_ref,
                         attn_buf,
                         *, heads, q_tile, n_tile):
    bb, T, C = x_ref.shape
    hd = C // heads
    scale = 1.0 / math.sqrt(hd)
    cdt = wqkv_ref.dtype                    # MXU input dtype (bf16 or f32); accumulation is f32.
    M = bb * T

    # Pack all batch rows of this block into one big M dimension for the MXU.
    x = x_ref[...].astype(jnp.float32).reshape(M, C)

    # ---------------- attention branch: x + proj(attn(LN1(x))) ----------------
    h = _layernorm(x, ln1_g_ref[...], ln1_b_ref[...])
    qkv = jnp.dot(h.astype(cdt), wqkv_ref[...],
                  preferred_element_type=jnp.float32) + bqkv_ref[...]
    # Cast k/v to the MXU dtype right away; fold 1/sqrt(hd) into q before its cast.
    q = (qkv[:, :C] * scale).reshape(bb, T, C).astype(cdt)
    k = qkv[:, C:2 * C].reshape(bb, T, C).astype(cdt)
    v = qkv[:, 2 * C:].reshape(bb, T, C).astype(cdt)

    # NOTE(synk): hd should ideally be a multiple of 128 so the per-head lane slices below
    # are unmasked full-vreg accesses; sub-width hd is correct but pays masked-store cost.
    nq = T // q_tile
    for qi in range(nq):                     # static Python loop: shapes per q tile are static
        q0 = qi * q_tile
        kv_end = q0 + q_tile                 # causal: tiles strictly above the diagonal skipped
        row = jax.lax.broadcasted_iota(jnp.int32, (q_tile, kv_end), 0) + q0
        col = jax.lax.broadcasted_iota(jnp.int32, (q_tile, kv_end), 1)
        mask = jnp.where(col <= row, 0.0, -1e30).astype(jnp.float32)  # finite, no NaN risk
        for hi in range(heads):
            hs = hi * hd
            qh = q[:, q0:q0 + q_tile, hs:hs + hd]
            kh = k[:, :kv_end, hs:hs + hd]
            vh = v[:, :kv_end, hs:hs + hd]
            s = jnp.einsum('bqd,bkd->bqk', qh, kh,
                           preferred_element_type=jnp.float32) + mask
            s = s - jnp.max(s, axis=-1, keepdims=True)
            p = jnp.exp(s)                  # f32 exp (v5e has no bf16 EUP path)
            p = p * pl.reciprocal(jnp.sum(p, axis=-1, keepdims=True), approx=True)
            oh = jnp.einsum('bqk,bkd->bqd', p.astype(cdt), vh,
                            preferred_element_type=jnp.float32)
            # Stash this head's output at its lane offset; projection happens once below.
            attn_buf[:, q0:q0 + q_tile, hs:hs + hd] = oh.astype(attn_buf.dtype)

    # Single output projection with a full K=C contraction (MXU-efficient).
    attn = jnp.dot(attn_buf[...].reshape(M, C), wproj_ref[...],
                   preferred_element_type=jnp.float32)
    x = x + attn + bproj_ref[...]

    # ---------------- feed-forward branch: x + W2(relu(W1(LN2(x)))) ----------------
    h2 = _layernorm(x, ln2_g_ref[...], ln2_b_ref[...]).astype(cdt)
    N = w1_ref.shape[1]
    ff = jnp.zeros((M, C), jnp.float32)
    for nt in range(N // n_tile):            # N-tiled: (M, N) relu intermediate never resident
        n0 = nt * n_tile
        a = jnp.dot(h2, w1_ref[:, n0:n0 + n_tile],
                    preferred_element_type=jnp.float32) + b1_ref[:, n0:n0 + n_tile]
        a = jnp.maximum(a, 0.0)
        ff = ff + jnp.dot(a.astype(cdt), w2_ref[n0:n0 + n_tile, :],
                          preferred_element_type=jnp.float32)

    o_ref[...] = (x + ff + b2_ref[...]).reshape(bb, T, C).astype(o_ref.dtype)


def decoder_block(x, params, *, heads, mxu_dtype=jnp.bfloat16, batch_block=None):
    B, T, C = x.shape
    N = params["w1"].shape[1]
    assert C % heads == 0

    if batch_block is None:
        # Pack batch rows so flattened M = batch_block*T fills the MXU (target ~512 rows) ...
        batch_block = max(1, min(B, max(1, 512 // max(T, 1))))
        while B % batch_block != 0:
            batch_block -= 1
        # ... but keep >=2 parallel grid points when B allows it (v7x has 2 TensorCores).
        while batch_block > 1 and B // batch_block < 2:
            batch_block -= 1
            while B % batch_block != 0:
                batch_block -= 1
    assert B % batch_block == 0
    grid = (B // batch_block,)

    q_tile = _largest_divisor_leq(T, 256)    # attention q-tile (causal KV skipping granularity)
    n_tile = _largest_divisor_leq(N, 512)    # FFN hidden-dim tile

    # Weights stored in HBM in the MXU input dtype (bf16 halves weight DMA + VMEM footprint);
    # biases / LN params stay f32 for the f32 elementwise path.
    wqkv = params["wqkv"].astype(mxu_dtype)
    wproj = params["wproj"].astype(mxu_dtype)
    w1 = params["w1"].astype(mxu_dtype)
    w2 = params["w2"].astype(mxu_dtype)

    # Per-generation VMEM budget: physical capacity minus headroom (no flat 64 MiB cap).
    phys_vmem = 64 << 20                     # conservative fallback (v7x per-TC)
    try:
        phys_vmem = int(getattr(pltpu.get_tpu_info(), "vmem_capacity_bytes", phys_vmem))
    except Exception:
        pass
    vmem_limit = max(32 << 20, phys_vmem - (8 << 20))

    # Cost estimate: 4 big linears + causal (~half) attention matmuls; exp/rsqrt counts.
    w_bytes = int((wqkv.size + wproj.size + w1.size + w2.size) * jnp.dtype(mxu_dtype).itemsize)
    act_bytes = int(2 * B * T * C * x.dtype.itemsize)
    flops = 2 * B * T * (C * 3 * C + C * C + 2 * C * N) + 2 * B * T * T * C
    transcendentals = B * heads * T * T // 2 + 4 * B * T
    cost = pl.CostEstimate(flops=int(flops), transcendentals=int(transcendentals),
                           bytes_accessed=w_bytes + act_bytes)

    kernel = functools.partial(decoder_block_kernel, heads=heads,
                               q_tile=q_tile, n_tile=n_tile)
    args = (x,
            params["ln1_g"], params["ln1_b"],
            wqkv, params["bqkv"],
            wproj, params["bproj"],
            params["ln2_g"], params["ln2_b"],
            w1, params["b1"],
            w2, params["b2"])

    def _build(single_buffer_weights):
        def const_spec(shape):
            nd = len(shape)
            idx = lambda i, _n=nd: (0,) * _n
            if single_buffer_weights:
                # Constant index_map => single-buffer: no duplicate weight copy in VMEM.
                return pl.BlockSpec(shape, idx, pipeline_mode=pl.Buffered(1))
            return pl.BlockSpec(shape, idx)

        in_specs = [
            pl.BlockSpec((batch_block, T, C), lambda i: (i, 0, 0)),   # x
            const_spec((1, C)), const_spec((1, C)),                   # ln1 gamma/beta
            const_spec((C, 3 * C)), const_spec((1, 3 * C)),           # qkv weight/bias
            const_spec((C, C)), const_spec((1, C)),                   # proj weight/bias
            const_spec((1, C)), const_spec((1, C)),                   # ln2 gamma/beta
            const_spec((C, N)), const_spec((1, N)),                   # ffn w1/b1
            const_spec((N, C)), const_spec((1, C)),                   # ffn w2/b2
        ]
        out_specs = pl.BlockSpec((batch_block, T, C), lambda i: (i, 0, 0))
        return pl.pallas_call(
            kernel,
            out_shape=jax.ShapeDtypeStruct((B, T, C), x.dtype),
            grid=grid,
            in_specs=in_specs,
            out_specs=out_specs,
            scratch_shapes=[pltpu.VMEM((batch_block, T, C), mxu_dtype)],  # per-head attn outputs
            compiler_params=pltpu.CompilerParams(
                dimension_semantics=("parallel",),
                vmem_limit_bytes=int(vmem_limit)),
            cost_estimate=cost,
        )

    try:
        return _build(True)(*args)
    except Exception:
        # pipeline_mode=pl.Buffered(1) not accepted by this jax version: fall back to
        # default double-buffering of the constant weight inputs.
        return _build(False)(*args)


def decoder_block_ref(x, params, *, heads):
    """Pure-JAX f32 reference for correctness checking."""
    B, T, C = x.shape
    hd = C // heads

    def ln(v, g, b, eps=1e-5):
        mu = jnp.mean(v, -1, keepdims=True)
        var = jnp.mean((v - mu) ** 2, -1, keepdims=True)
        return (v - mu) * jax.lax.rsqrt(var + eps) * g + b

    h = ln(x, params["ln1_g"], params["ln1_b"])
    qkv = h @ params["wqkv"] + params["bqkv"]
    q, k, v = jnp.split(qkv, 3, axis=-1)
    q = q.reshape(B, T, heads, hd).transpose(0, 2, 1, 3)
    k = k.reshape(B, T, heads, hd).transpose(0, 2, 1, 3)
    v = v.reshape(B, T, heads, hd).transpose(0, 2, 1, 3)
    s = jnp.einsum("bhqd,bhkd->bhqk", q, k) / jnp.sqrt(float(hd))
    mask = jnp.tril(jnp.ones((T, T), bool))
    s = jnp.where(mask, s, -jnp.inf)
    p = jax.nn.softmax(s, axis=-1)
    o = jnp.einsum("bhqk,bhkd->bhqd", p, v).transpose(0, 2, 1, 3).reshape(B, T, C)
    x = x + o @ params["wproj"] + params["bproj"]
    h2 = ln(x, params["ln2_g"], params["ln2_b"])
    ff = jnp.maximum(h2 @ params["w1"] + params["b1"], 0.0) @ params["w2"] + params["b2"]
    return x + ff


def init_params(key, C, N):
    ks = jax.random.split(key, 8)

    def linear(k, fan_in, shape):
        bound = 1.0 / (fan_in ** 0.5)
        return jax.random.uniform(k, shape, jnp.float32, -bound, bound)

    return {
        "ln1_g": jnp.ones((1, C), jnp.float32),
        "ln1_b": jnp.zeros((1, C), jnp.float32),
        "wqkv": linear(ks[0], C, (C, 3 * C)),
        "bqkv": linear(ks[1], C, (1, 3 * C)),
        "wproj": linear(ks[2], C, (C, C)),
        "bproj": linear(ks[3], C, (1, C)),
        "ln2_g": jnp.ones((1, C), jnp.float32),
        "ln2_b": jnp.zeros((1, C), jnp.float32),
        "w1": linear(ks[4], C, (C, N)),
        "b1": linear(ks[5], C, (1, N)),
        "w2": linear(ks[6], N, (N, C)),
        "b2": linear(ks[7], N, (1, C)),
    }


if __name__ == "__main__":
    B, T, C, HEADS, NEURONS = 2, 8, 32, 4, 64
    key = jax.random.PRNGKey(0)
    kx, kp = jax.random.split(key)
    x = jax.random.normal(kx, (B, T, C), jnp.float32)
    params = init_params(kp, C, NEURONS)

    ref = decoder_block_ref(x, params, heads=HEADS)

    # f32 MXU path: tight correctness check vs. the pure-JAX reference.
    out_f32 = jax.block_until_ready(
        decoder_block(x, params, heads=HEADS, mxu_dtype=jnp.float32))
    assert out_f32.shape == (B, T, C)
    assert jnp.allclose(out_f32, ref, atol=5e-3, rtol=5e-3), "f32 kernel mismatch vs JAX reference"

    # bf16 MXU path (default; f32 accumulation): coarse check.
    out_bf16 = jax.block_until_ready(
        decoder_block(x, params, heads=HEADS, mxu_dtype=jnp.bfloat16))
    assert out_bf16.shape == (B, T, C)
    assert jnp.allclose(out_bf16, ref, atol=1.5e-1, rtol=1e-1), "bf16 kernel mismatch vs JAX reference"

    print("KERNEL_OK")
</pallas_src>

<mosaic_0001>
module attributes {stable_mosaic.version = 11 : i64} {
  func.func @decoder_block_kernel(%arg0: i32, %arg1: memref<1x8x32xf32, #tpu.memory_space<vmem>>, %arg2: memref<1x32xf32, #tpu.memory_space<vmem>>, %arg3: memref<1x32xf32, #tpu.memory_space<vmem>>, %arg4: memref<32x96xf32, #tpu.memory_space<vmem>>, %arg5: memref<1x96xf32, #tpu.memory_space<vmem>>, %arg6: memref<32x32xf32, #tpu.memory_space<vmem>>, %arg7: memref<1x32xf32, #tpu.memory_space<vmem>>, %arg8: memref<1x32xf32, #tpu.memory_space<vmem>>, %arg9: memref<1x32xf32, #tpu.memory_space<vmem>>, %arg10: memref<32x64xf32, #tpu.memory_space<vmem>>, %arg11: memref<1x64xf32, #tpu.memory_space<vmem>>, %arg12: memref<64x32xf32, #tpu.memory_space<vmem>>, %arg13: memref<1x32xf32, #tpu.memory_space<vmem>>, %arg14: memref<1x8x32xf32, #tpu.memory_space<vmem>>, %arg15: memref<1x8x32xf32, #tpu.memory_space<vmem>>) attributes {dimension_semantics = [#tpu.dimension_semantics<parallel>], iteration_bounds = array<i64: 2>, scalar_prefetch = 0 : i64, scratch_operands = 1 : i64, tpu.core_type = #tpu.core_type<tc>, window_params = [{transform_indices = @transform_0, window_bounds = array<i64: 1, 8, 32>}, {pipeline_mode = #tpu.pipeline_mode<synchronous>, transform_indices = @transform_1, window_bounds = array<i64: 1, 32>}, {pipeline_mode = #tpu.pipeline_mode<synchronous>, transform_indices = @transform_2, window_bounds = array<i64: 1, 32>}, {pipeline_mode = #tpu.pipeline_mode<synchronous>, transform_indices = @transform_3, window_bounds = array<i64: 32, 96>}, {pipeline_mode = #tpu.pipeline_mode<synchronous>, transform_indices = @transform_4, window_bounds = array<i64: 1, 96>}, {pipeline_mode = #tpu.pipeline_mode<synchronous>, transform_indices = @transform_5, window_bounds = array<i64: 32, 32>}, {pipeline_mode = #tpu.pipeline_mode<synchronous>, transform_indices = @transform_6, window_bounds = array<i64: 1, 32>}, {pipeline_mode = #tpu.pipeline_mode<synchronous>, transform_indices = @transform_7, window_bounds = array<i64: 1, 32>}, {pipeline_mode = #tpu.pipeline_mode<synchronous>, transform_indices = @transform_8, window_bounds = array<i64: 1, 32>}, {pipeline_mode = #tpu.pipeline_mode<synchronous>, transform_indices = @transform_9, window_bounds = array<i64: 32, 64>}, {pipeline_mode = #tpu.pipeline_mode<synchronous>, transform_indices = @transform_10, window_bounds = array<i64: 1, 64>}, {pipeline_mode = #tpu.pipeline_mode<synchronous>, transform_indices = @transform_11, window_bounds = array<i64: 64, 32>}, {pipeline_mode = #tpu.pipeline_mode<synchronous>, transform_indices = @transform_12, window_bounds = array<i64: 1, 32>}, {transform_indices = @transform_13, window_bounds = array<i64: 1, 8, 32>}]} {
    %c0 = arith.constant 0 : index
    %c0_0 = arith.constant 0 : index
    %c0_1 = arith.constant 0 : index
    %0 = vector.load %arg1[%c0, %c0_0, %c0_1] : memref<1x8x32xf32, #tpu.memory_space<vmem>>, vector<1x8x32xf32>
    %1 = vector.shape_cast %0 : vector<1x8x32xf32> to vector<8x32xf32>
    %c0_2 = arith.constant 0 : index
    %c0_3 = arith.constant 0 : index
    %2 = vector.load %arg2[%c0_2, %c0_3] : memref<1x32xf32, #tpu.memory_space<vmem>>, vector<1x32xf32>
    %c0_4 = arith.constant 0 : index
    %c0_5 = arith.constant 0 : index
    %3 = vector.load %arg3[%c0_4, %c0_5] : memref<1x32xf32, #tpu.memory_space<vmem>>, vector<1x32xf32>
    %cst = arith.constant dense<0.000000e+00> : vector<8xf32>
    %4 = vector.multi_reduction <add>, %1, %cst [1] : vector<8x32xf32> to vector<8xf32>
    %5 = vector.shape_cast %4 : vector<8xf32> to vector<8x1xf32>
    %cst_6 = arith.constant 3.200000e+01 : f32
    %6 = vector.broadcast %cst_6 : f32 to vector<8x1xf32>
    %7 = arith.divf %5, %6 : vector<8x1xf32>
    %8 = vector.broadcast %7 : vector<8x1xf32> to vector<8x32xf32>
    %9 = arith.subf %1, %8 : vector<8x32xf32>
    %10 = arith.mulf %9, %9 : vector<8x32xf32>
    %cst_7 = arith.constant dense<0.000000e+00> : vector<8xf32>
    %11 = vector.multi_reduction <add>, %10, %cst_7 [1] : vector<8x32xf32> to vector<8xf32>
    %12 = vector.shape_cast %11 : vector<8xf32> to vector<8x1xf32>
    %cst_8 = arith.constant 3.200000e+01 : f32
    %13 = vector.broadcast %cst_8 : f32 to vector<8x1xf32>
    %14 = arith.divf %12, %13 : vector<8x1xf32>
    %15 = vector.broadcast %7 : vector<8x1xf32> to vector<8x32xf32>
    %16 = arith.subf %1, %15 : vector<8x32xf32>
    %cst_9 = arith.constant 9.99999974E-6 : f32
    %17 = vector.broadcast %cst_9 : f32 to vector<8x1xf32>
    %18 = arith.addf %14, %17 : vector<8x1xf32>
    %19 = math.rsqrt %18 : vector<8x1xf32>
    %20 = vector.broadcast %19 : vector<8x1xf32> to vector<8x32xf32>
    %21 = arith.mulf %16, %20 : vector<8x32xf32>
    %22 = vector.broadcast %2 : vector<1x32xf32> to vector<8x32xf32>
    %23 = arith.mulf %21, %22 : vector<8x32xf32>
    %24 = vector.broadcast %3 : vector<1x32xf32> to vector<8x32xf32>
    %25 = arith.addf %23, %24 : vector<8x32xf32>
    %c0_10 = arith.constant 0 : index
    %c0_11 = arith.constant 0 : index
    %26 = vector.load %arg4[%c0_10, %c0_11] : memref<32x96xf32, #tpu.memory_space<vmem>>, vector<32x96xf32>
    %cst_12 = arith.constant dense<0.000000e+00> : vector<8x96xf32>
    %27 = tpu.matmul %25, %26, %cst_12 {dimension_numbers = #tpu.dot_dimension_numbers<[1], [0], [0], [1], [0, 0, 1, 1], [], []>} : vector<8x32xf32>, vector<32x96xf32>, vector<8x96xf32> -> vector<8x96xf32>
    %c0_13 = arith.constant 0 : index
    %c0_14 = arith.constant 0 : index
    %28 = vector.load %arg5[%c0_13, %c0_14] : memref<1x96xf32, #tpu.memory_space<vmem>>, vector<1x96xf32>
    %29 = vector.broadcast %28 : vector<1x96xf32> to vector<8x96xf32>
    %30 = arith.addf %27, %29 : vector<8x96xf32>
    %31 = vector.extract_strided_slice %30 {offsets = [0, 0], sizes = [8, 32], strides = [1, 1]} : vector<8x96xf32> to vector<8x32xf32>
    %cst_15 = arith.constant 0.353553385 : f32
    %32 = vector.broadcast %cst_15 : f32 to vector<8x32xf32>
    %33 = arith.mulf %31, %32 : vector<8x32xf32>
    %34 = vector.shape_cast %33 : vector<8x32xf32> to vector<1x8x32xf32>
    %35 = vector.extract_strided_slice %30 {offsets = [0, 32], sizes = [8, 32], strides = [1, 1]} : vector<8x96xf32> to vector<8x32xf32>
    %36 = vector.shape_cast %35 : vector<8x32xf32> to vector<1x8x32xf32>
    %37 = vector.extract_strided_slice %30 {offsets = [0, 64], sizes = [8, 32], strides = [1, 1]} : vector<8x96xf32> to vector<8x32xf32>
    %38 = vector.shape_cast %37 : vector<8x32xf32> to vector<1x8x32xf32>
    %39 = tpu.iota {dimensions = array<i32: 0>} : vector<8x8xi32>
    %c0_i32 = arith.constant 0 : i32
    %40 = vector.broadcast %c0_i32 : i32 to vector<8x8xi32>
    %41 = arith.addi %39, %40 : vector<8x8xi32>
    %42 = tpu.iota {dimensions = array<i32: 1>} : vector<8x8xi32>
    %43 = arith.cmpi sle, %42, %41 : vector<8x8xi32>
    %cst_16 = arith.constant 0.000000e+00 : f32
    %cst_17 = arith.constant -1.000000e+30 : f32
    %44 = vector.broadcast %cst_16 : f32 to vector<8x8xf32>
    %45 = vector.broadcast %cst_17 : f32 to vector<8x8xf32>
    %46 = arith.select %43, %44, %45 : vector<8x8xi1>, vector<8x8xf32>
    %47 = vector.extract_strided_slice %34 {offsets = [0, 0, 0], sizes = [1, 8, 8], strides = [1, 1, 1]} : vector<1x8x32xf32> to vector<1x8x8xf32>
    %48 = vector.extract_strided_slice %36 {offsets = [0, 0, 0], sizes = [1, 8, 8], strides = [1, 1, 1]} : vector<1x8x32xf32> to vector<1x8x8xf32>
    %49 = vector.extract_strided_slice %38 {offsets = [0, 0, 0], sizes = [1, 8, 8], strides = [1, 1, 1]} : vector<1x8x32xf32> to vector<1x8x8xf32>
    "tpu.trace_start"() <{level = 10 : i32, message = "bqd,bkd->bqk"}> : () -> ()
    %cst_18 = arith.constant dense<0.000000e+00> : vector<1x8x8xf32>
    %50 = tpu.matmul %47, %48, %cst_18 {dimension_numbers = #tpu.dot_dimension_numbers<[2], [2], [1], [1], [0, 0, 0, 1, 1, 1], [0], [0]>} : vector<1x8x8xf32>, vector<1x8x8xf32>, vector<1x8x8xf32> -> vector<1x8x8xf32>
    "tpu.trace_stop"() : () -> ()
    %51 = vector.shape_cast %46 : vector<8x8xf32> to vector<1x8x8xf32>
    %52 = arith.addf %50, %51 : vector<1x8x8xf32>
    %cst_19 = arith.constant dense<0xFF800000> : vector<1x8xf32>
    %53 = vector.multi_reduction <maximumf>, %52, %cst_19 [2] : vector<1x8x8xf32> to vector<1x8xf32>
    %54 = vector.shape_cast %53 : vector<1x8xf32> to vector<1x8x1xf32>
    %55 = vector.broadcast %54 : vector<1x8x1xf32> to vector<1x8x8xf32>
    %56 = arith.subf %52, %55 : vector<1x8x8xf32>
    %57 = math.exp %56 : vector<1x8x8xf32>
    %cst_20 = arith.constant dense<0.000000e+00> : vector<1x8xf32>
    %58 = vector.multi_reduction <add>, %57, %cst_20 [2] : vector<1x8x8xf32> to vector<1x8xf32>
    %59 = vector.shape_cast %58 : vector<1x8xf32> to vector<1x8x1xf32>
    %60 = tpu.reciprocal %59 {approx = true} : vector<1x8x1xf32> -> vector<1x8x1xf32>
    %61 = vector.broadcast %60 : vector<1x8x1xf32> to vector<1x8x8xf32>
    %62 = arith.mulf %57, %61 : vector<1x8x8xf32>
    "tpu.trace_start"() <{level = 10 : i32, message = "bqk,bkd->bqd"}> : () -> ()
    %cst_21 = arith.constant dense<0.000000e+00> : vector<1x8x8xf32>
    %63 = tpu.matmul %62, %49, %cst_21 {dimension_numbers = #tpu.dot_dimension_numbers<[2], [1], [1], [2], [0, 0, 0, 1, 1, 2], [0], [0]>} : vector<1x8x8xf32>, vector<1x8x8xf32>, vector<1x8x8xf32> -> vector<1x8x8xf32>
    "tpu.trace_stop"() : () -> ()
    %c0_22 = arith.constant 0 : index
    %c0_23 = arith.constant 0 : index
    %c0_24 = arith.constant 0 : index
    %64 = vector.load %arg15[%c0_22, %c0_23, %c0_24] : memref<1x8x32xf32, #tpu.memory_space<vmem>>, vector<1x8x8xf32>
    tpu.vector_store %arg15[%c0_22, %c0_23, %c0_24], %63 {strides = array<i32>} : memref<1x8x32xf32, #tpu.memory_space<vmem>>, vector<1x8x8xf32>,
    %65 = vector.extract_strided_slice %34 {offsets = [0, 0, 8], sizes = [1, 8, 8], strides = [1, 1, 1]} : vector<1x8x32xf32> to vector<1x8x8xf32>
    %66 = vector.extract_strided_slice %36 {offsets = [0, 0, 8], sizes = [1, 8, 8], strides = [1, 1, 1]} : vector<1x8x32xf32> to vector<1x8x8xf32>
    %67 = vector.extract_strided_slice %38 {offsets = [0, 0, 8], sizes = [1, 8, 8], strides = [1, 1, 1]} : vector<1x8x32xf32> to vector<1x8x8xf32>
    "tpu.trace_start"() <{level = 10 : i32, message = "bqd,bkd->bqk"}> : () -> ()
    %cst_25 = arith.constant dense<0.000000e+00> : vector<1x8x8xf32>
    %68 = tpu.matmul %65, %66, %cst_25 {dimension_numbers = #tpu.dot_dimension_numbers<[2], [2], [1], [1], [0, 0, 0, 1, 1, 1], [0], [0]>} : vector<1x8x8xf32>, vector<1x8x8xf32>, vector<1x8x8xf32> -> vector<1x8x8xf32>
    "tpu.trace_stop"() : () -> ()
    %69 = vector.shape_cast %46 : vector<8x8xf32> to vector<1x8x8xf32>
    %70 = arith.addf %68, %69 : vector<1x8x8xf32>
    %cst_26 = arith.constant dense<0xFF800000> : vector<1x8xf32>
    %71 = vector.multi_reduction <maximumf>, %70, %cst_26 [2] : vector<1x8x8xf32> to vector<1x8xf32>
    %72 = vector.shape_cast %71 : vector<1x8xf32> to vector<1x8x1xf32>
    %73 = vector.broadcast %72 : vector<1x8x1xf32> to vector<1x8x8xf32>
    %74 = arith.subf %70, %73 : vector<1x8x8xf32>
    %75 = math.exp %74 : vector<1x8x8xf32>
    %cst_27 = arith.constant dense<0.000000e+00> : vector<1x8xf32>
    %76 = vector.multi_reduction <add>, %75, %cst_27 [2] : vector<1x8x8xf32> to vector<1x8xf32>
    %77 = vector.shape_cast %76 : vector<1x8xf32> to vector<1x8x1xf32>
    %78 = tpu.reciprocal %77 {approx = true} : vector<1x8x1xf32> -> vector<1x8x1xf32>
    %79 = vector.broadcast %78 : vector<1x8x1xf32> to vector<1x8x8xf32>
    %80 = arith.mulf %75, %79 : vector<1x8x8xf32>
    "tpu.trace_start"() <{level = 10 : i32, message = "bqk,bkd->bqd"}> : () -> ()
    %cst_28 = arith.constant dense<0.000000e+00> : vector<1x8x8xf32>
    %81 = tpu.matmul %80, %67, %cst_28 {dimension_numbers = #tpu.dot_dimension_numbers<[2], [1], [1], [2], [0, 0, 0, 1, 1, 2], [0], [0]>} : vector<1x8x8xf32>, vector<1x8x8xf32>, vector<1x8x8xf32> -> vector<1x8x8xf32>
    "tpu.trace_stop"() : () -> ()
    %c0_29 = arith.constant 0 : index
    %c0_30 = arith.constant 0 : index
    %c8 = arith.constant 8 : index
    %82 = vector.load %arg15[%c0_29, %c0_30, %c8] : memref<1x8x32xf32, #tpu.memory_space<vmem>>, vector<1x8x8xf32>
    tpu.vector_store %arg15[%c0_29, %c0_30, %c8], %81 {strides = array<i32>} : memref<1x8x32xf32, #tpu.memory_space<vmem>>, vector<1x8x8xf32>,
    %83 = vector.extract_strided_slice %34 {offsets = [0, 0, 16], sizes = [1, 8, 8], strides = [1, 1, 1]} : vector<1x8x32xf32> to vector<1x8x8xf32>
    %84 = vector.extract_strided_slice %36 {offsets = [0, 0, 16], sizes = [1, 8, 8], strides = [1, 1, 1]} : vector<1x8x32xf32> to vector<1x8x8xf32>
    %85 = vector.extract_strided_slice %38 {offsets = [0, 0, 16], sizes = [1, 8, 8], strides = [1, 1, 1]} : vector<1x8x32xf32> to vector<1x8x8xf32>
    "tpu.trace_start"() <{level = 10 : i32, message = "bqd,bkd->bqk"}> : () -> ()
    %cst_31 = arith.constant dense<0.000000e+00> : vector<1x8x8xf32>
    %86 = tpu.matmul %83, %84, %cst_31 {dimension_numbers = #tpu.dot_dimension_numbers<[2], [2], [1], [1], [0, 0, 0, 1, 1, 1], [0], [0]>} : vector<1x8x8xf32>, vector<1x8x8xf32>, vector<1x8x8xf32> -> vector<1x8x8xf32>
    "tpu.trace_stop"() : () -> ()
    %87 = vector.shape_cast %46 : vector<8x8xf32> to vector<1x8x8xf32>
    %88 = arith.addf %86, %87 : vector<1x8x8xf32>
    %cst_32 = arith.constant dense<0xFF800000> : vector<1x8xf32>
    %89 = vector.multi_reduction <maximumf>, %88, %cst_32 [2] : vector<1x8x8xf32> to vector<1x8xf32>
    %90 = vector.shape_cast %89 : vector<1x8xf32> to vector<1x8x1xf32>
    %91 = vector.broadcast %90 : vector<1x8x1xf32> to vector<1x8x8xf32>
    %92 = arith.subf %88, %91 : vector<1x8x8xf32>
    %93 = math.exp %92 : vector<1x8x8xf32>
    %cst_33 = arith.constant dense<0.000000e+00> : vector<1x8xf32>
    %94 = vector.multi_reduction <add>, %93, %cst_33 [2] : vector<1x8x8xf32> to vector<1x8xf32>
    %95 = vector.shape_cast %94 : vector<1x8xf32> to vector<1x8x1xf32>
    %96 = tpu.reciprocal %95 {approx = true} : vector<1x8x1xf32> -> vector<1x8x1xf32>
    %97 = vector.broadcast %96 : vector<1x8x1xf32> to vector<1x8x8xf32>
    %98 = arith.mulf %93, %97 : vector<1x8x8xf32>
    "tpu.trace_start"() <{level = 10 : i32, message = "bqk,bkd->bqd"}> : () -> ()
    %cst_34 = arith.constant dense<0.000000e+00> : vector<1x8x8xf32>
    %99 = tpu.matmul %98, %85, %cst_34 {dimension_numbers = #tpu.dot_dimension_numbers<[2], [1], [1], [2], [0, 0, 0, 1, 1, 2], [0], [0]>} : vector<1x8x8xf32>, vector<1x8x8xf32>, vector<1x8x8xf32> -> vector<1x8x8xf32>
    "tpu.trace_stop"() : () -> ()
    %c0_35 = arith.constant 0 : index
    %c0_36 = arith.constant 0 : index
    %c16 = arith.constant 16 : index
    %100 = vector.load %arg15[%c0_35, %c0_36, %c16] : memref<1x8x32xf32, #tpu.memory_space<vmem>>, vector<1x8x8xf32>
    tpu.vector_store %arg15[%c0_35, %c0_36, %c16], %99 {strides = array<i32>} : memref<1x8x32xf32, #tpu.memory_space<vmem>>, vector<1x8x8xf32>,
    %101 = vector.extract_strided_slice %34 {offsets = [0, 0, 24], sizes = [1, 8, 8], strides = [1, 1, 1]} : vector<1x8x32xf32> to vector<1x8x8xf32>
    %102 = vector.extract_strided_slice %36 {offsets = [0, 0, 24], sizes = [1, 8, 8], strides = [1, 1, 1]} : vector<1x8x32xf32> to vector<1x8x8xf32>
    %103 = vector.extract_strided_slice %38 {offsets = [0, 0, 24], sizes = [1, 8, 8], strides = [1, 1, 1]} : vector<1x8x32xf32> to vector<1x8x8xf32>
    "tpu.trace_start"() <{level = 10 : i32, message = "bqd,bkd->bqk"}> : () -> ()
    %cst_37 = arith.constant dense<0.000000e+00> : vector<1x8x8xf32>
    %104 = tpu.matmul %101, %102, %cst_37 {dimension_numbers = #tpu.dot_dimension_numbers<[2], [2], [1], [1], [0, 0, 0, 1, 1, 1], [0], [0]>} : vector<1x8x8xf32>, vector<1x8x8xf32>, vector<1x8x8xf32> -> vector<1x8x8xf32>
    "tpu.trace_stop"() : () -> ()
    %105 = vector.shape_cast %46 : vector<8x8xf32> to vector<1x8x8xf32>
    %106 = arith.addf %104, %105 : vector<1x8x8xf32>
    %cst_38 = arith.constant dense<0xFF800000> : vector<1x8xf32>
    %107 = vector.multi_reduction <maximumf>, %106, %cst_38 [2] : vector<1x8x8xf32> to vector<1x8xf32>
    %108 = vector.shape_cast %107 : vector<1x8xf32> to vector<1x8x1xf32>
    %109 = vector.broadcast %108 : vector<1x8x1xf32> to vector<1x8x8xf32>
    %110 = arith.subf %106, %109 : vector<1x8x8xf32>
    %111 = math.exp %110 : vector<1x8x8xf32>
    %cst_39 = arith.constant dense<0.000000e+00> : vector<1x8xf32>
    %112 = vector.multi_reduction <add>, %111, %cst_39 [2] : vector<1x8x8xf32> to vector<1x8xf32>
    %113 = vector.shape_cast %112 : vector<1x8xf32> to vector<1x8x1xf32>
    %114 = tpu.reciprocal %113 {approx = true} : vector<1x8x1xf32> -> vector<1x8x1xf32>
    %115 = vector.broadcast %114 : vector<1x8x1xf32> to vector<1x8x8xf32>
    %116 = arith.mulf %111, %115 : vector<1x8x8xf32>
    "tpu.trace_start"() <{level = 10 : i32, message = "bqk,bkd->bqd"}> : () -> ()
    %cst_40 = arith.constant dense<0.000000e+00> : vector<1x8x8xf32>
    %117 = tpu.matmul %116, %103, %cst_40 {dimension_numbers = #tpu.dot_dimension_numbers<[2], [1], [1], [2], [0, 0, 0, 1, 1, 2], [0], [0]>} : vector<1x8x8xf32>, vector<1x8x8xf32>, vector<1x8x8xf32> -> vector<1x8x8xf32>
    "tpu.trace_stop"() : () -> ()
    %c0_41 = arith.constant 0 : index
    %c0_42 = arith.constant 0 : index
    %c24 = arith.constant 24 : index
    %118 = vector.load %arg15[%c0_41, %c0_42, %c24] : memref<1x8x32xf32, #tpu.memory_space<vmem>>, vector<1x8x8xf32>
    tpu.vector_store %arg15[%c0_41, %c0_42, %c24], %117 {strides = array<i32>} : memref<1x8x32xf32, #tpu.memory_space<vmem>>, vector<1x8x8xf32>,
    %c0_43 = arith.constant 0 : index
    %c0_44 = arith.constant 0 : index
    %c0_45 = arith.constant 0 : index
    %119 = vector.load %arg15[%c0_43, %c0_44, %c0_45] : memref<1x8x32xf32, #tpu.memory_space<vmem>>, vector<1x8x32xf32>
    %120 = vector.shape_cast %119 : vector<1x8x32xf32> to vector<8x32xf32>
    %c0_46 = arith.constant 0 : index
    %c0_47 = arith.constant 0 : index
    %121 = vector.load %arg6[%c0_46, %c0_47] : memref<32x32xf32, #tpu.memory_space<vmem>>, vector<32x32xf32>
    %cst_48 = arith.constant dense<0.000000e+00> : vector<8x32xf32>
    %122 = tpu.matmul %120, %121, %cst_48 {dimension_numbers = #tpu.dot_dimension_numbers<[1], [0], [0], [1], [0, 0, 1, 1], [], []>} : vector<8x32xf32>, vector<32x32xf32>, vector<8x32xf32> -> vector<8x32xf32>
    %123 = arith.addf %1, %122 : vector<8x32xf32>
    %c0_49 = arith.constant 0 : index
    %c0_50 = arith.constant 0 : index
    %124 = vector.load %arg7[%c0_49, %c0_50] : memref<1x32xf32, #tpu.memory_space<vmem>>, vector<1x32xf32>
    %125 = vector.broadcast %124 : vector<1x32xf32> to vector<8x32xf32>
    %126 = arith.addf %123, %125 : vector<8x32xf32>
    %c0_51 = arith.constant 0 : index
    %c0_52 = arith.constant 0 : index
    %127 = vector.load %arg8[%c0_51, %c0_52] : memref<1x32xf32, #tpu.memory_space<vmem>>, vector<1x32xf32>
    %c0_53 = arith.constant 0 : index
    %c0_54 = arith.constant 0 : index
    %128 = vector.load %arg9[%c0_53, %c0_54] : memref<1x32xf32, #tpu.memory_space<vmem>>, vector<1x32xf32>
    %cst_55 = arith.constant dense<0.000000e+00> : vector<8xf32>
    %129 = vector.multi_reduction <add>, %126, %cst_55 [1] : vector<8x32xf32> to vector<8xf32>
    %130 = vector.shape_cast %129 : vector<8xf32> to vector<8x1xf32>
    %cst_56 = arith.constant 3.200000e+01 : f32
    %131 = vector.broadcast %cst_56 : f32 to vector<8x1xf32>
    %132 = arith.divf %130, %131 : vector<8x1xf32>
    %133 = vector.broadcast %132 : vector<8x1xf32> to vector<8x32xf32>
    %134 = arith.subf %126, %133 : vector<8x32xf32>
    %135 = arith.mulf %134, %134 : vector<8x32xf32>
    %cst_57 = arith.constant dense<0.000000e+00> : vector<8xf32>
    %136 = vector.multi_reduction <add>, %135, %cst_57 [1] : vector<8x32xf32> to vector<8xf32>
    %137 = vector.shape_cast %136 : vector<8xf32> to vector<8x1xf32>
    %cst_58 = arith.constant 3.200000e+01 : f32
    %138 = vector.broadcast %cst_58 : f32 to vector<8x1xf32>
    %139 = arith.divf %137, %138 : vector<8x1xf32>
    %140 = vector.broadcast %132 : vector<8x1xf32> to vector<8x32xf32>
    %141 = arith.subf %126, %140 : vector<8x32xf32>
    %cst_59 = arith.constant 9.99999974E-6 : f32
    %142 = vector.broadcast %cst_59 : f32 to vector<8x1xf32>
    %143 = arith.addf %139, %142 : vector<8x1xf32>
    %144 = math.rsqrt %143 : vector<8x1xf32>
    %145 = vector.broadcast %144 : vector<8x1xf32> to vector<8x32xf32>
    %146 = arith.mulf %141, %145 : vector<8x32xf32>
    %147 = vector.broadcast %127 : vector<1x32xf32> to vector<8x32xf32>
    %148 = arith.mulf %146, %147 : vector<8x32xf32>
    %149 = vector.broadcast %128 : vector<1x32xf32> to vector<8x32xf32>
    %150 = arith.addf %148, %149 : vector<8x32xf32>
    %cst_60 = arith.constant 0.000000e+00 : f32
    %151 = vector.broadcast %cst_60 : f32 to vector<8x32xf32>
    %c0_61 = arith.constant 0 : index
    %c0_62 = arith.constant 0 : index
    %152 = vector.load %arg10[%c0_61, %c0_62] : memref<32x64xf32, #tpu.memory_space<vmem>>, vector<32x64xf32>
    %cst_63 = arith.constant dense<0.000000e+00> : vector<8x64xf32>
    %153 = tpu.matmul %150, %152, %cst_63 {dimension_numbers = #tpu.dot_dimension_numbers<[1], [0], [0], [1], [0, 0, 1, 1], [], []>} : vector<8x32xf32>, vector<32x64xf32>, vector<8x64xf32> -> vector<8x64xf32>
    %c0_64 = arith.constant 0 : index
    %c0_65 = arith.constant 0 : index
    %154 = vector.load %arg11[%c0_64, %c0_65] : memref<1x64xf32, #tpu.memory_space<vmem>>, vector<1x64xf32>
    %155 = vector.broadcast %154 : vector<1x64xf32> to vector<8x64xf32>
    %156 = arith.addf %153, %155 : vector<8x64xf32>
    %cst_66 = arith.constant 0.000000e+00 : f32
    %157 = vector.broadcast %cst_66 : f32 to vector<8x64xf32>
    %158 = arith.maximumf %156, %157 : vector<8x64xf32>
    %c0_67 = arith.constant 0 : index
    %c0_68 = arith.constant 0 : index
    %159 = vector.load %arg12[%c0_67, %c0_68] : memref<64x32xf32, #tpu.memory_space<vmem>>, vector<64x32xf32>
    %cst_69 = arith.constant dense<0.000000e+00> : vector<8x32xf32>
    %160 = tpu.matmul %158, %159, %cst_69 {dimension_numbers = #tpu.dot_dimension_numbers<[1], [0], [0], [1], [0, 0, 1, 1], [], []>} : vector<8x64xf32>, vector<64x32xf32>, vector<8x32xf32> -> vector<8x32xf32>
    %161 = arith.addf %151, %160 : vector<8x32xf32>
    %162 = arith.addf %126, %161 : vector<8x32xf32>
    %c0_70 = arith.constant 0 : index
    %c0_71 = arith.constant 0 : index
    %163 = vector.load %arg13[%c0_70, %c0_71] : memref<1x32xf32, #tpu.memory_space<vmem>>, vector<1x32xf32>
    %164 = vector.broadcast %163 : vector<1x32xf32> to vector<8x32xf32>
    %165 = arith.addf %162, %164 : vector<8x32xf32>
    %166 = vector.shape_cast %165 : vector<8x32xf32> to vector<1x8x32xf32>
    %c0_72 = arith.constant 0 : index
    %c0_73 = arith.constant 0 : index
    %c0_74 = arith.constant 0 : index
    %167 = vector.load %arg14[%c0_72, %c0_73, %c0_74] : memref<1x8x32xf32, #tpu.memory_space<vmem>>, vector<1x8x32xf32>
    tpu.vector_store %arg14[%c0_72, %c0_73, %c0_74], %166 {strides = array<i32>} : memref<1x8x32xf32, #tpu.memory_space<vmem>>, vector<1x8x32xf32>,
    return
  }
  func.func @transform_0(%arg0: i32) -> (i32, i32, i32) {
    %c0_i32 = arith.constant 0 : i32
    %c0_i32_0 = arith.constant 0 : i32
    %c0_i32_1 = arith.constant 0 : i32
    return %arg0, %c0_i32, %c0_i32_0 : i32, i32, i32
  }
  func.func @transform_1(%arg0: i32) -> (i32, i32) {
    %c0_i32 = arith.constant 0 : i32
    %c0_i32_0 = arith.constant 0 : i32
    %c0_i32_1 = arith.constant 0 : i32
    return %c0_i32, %c0_i32_0 : i32, i32
  }
  func.func @transform_2(%arg0: i32) -> (i32, i32) {
    %c0_i32 = arith.constant 0 : i32
    %c0_i32_0 = arith.constant 0 : i32
    %c0_i32_1 = arith.constant 0 : i32
    return %c0_i32, %c0_i32_0 : i32, i32
  }
  func.func @transform_3(%arg0: i32) -> (i32, i32) {
    %c0_i32 = arith.constant 0 : i32
    %c0_i32_0 = arith.constant 0 : i32
    %c0_i32_1 = arith.constant 0 : i32
    return %c0_i32, %c0_i32_0 : i32, i32
  }
  func.func @transform_4(%arg0: i32) -> (i32, i32) {
    %c0_i32 = arith.constant 0 : i32
    %c0_i32_0 = arith.constant 0 : i32
    %c0_i32_1 = arith.constant 0 : i32
    return %c0_i32, %c0_i32_0 : i32, i32
  }
  func.func @transform_5(%arg0: i32) -> (i32, i32) {
    %c0_i32 = arith.constant 0 : i32
    %c0_i32_0 = arith.constant 0 : i32
    %c0_i32_1 = arith.constant 0 : i32
    return %c0_i32, %c0_i32_0 : i32, i32
  }
  func.func @transform_6(%arg0: i32) -> (i32, i32) {
    %c0_i32 = arith.constant 0 : i32
    %c0_i32_0 = arith.constant 0 : i32
    %c0_i32_1 = arith.constant 0 : i32
    return %c0_i32, %c0_i32_0 : i32, i32
  }
  func.func @transform_7(%arg0: i32) -> (i32, i32) {
    %c0_i32 = arith.constant 0 : i32
    %c0_i32_0 = arith.constant 0 : i32
    %c0_i32_1 = arith.constant 0 : i32
    return %c0_i32, %c0_i32_0 : i32, i32
  }
  func.func @transform_8(%arg0: i32) -> (i32, i32) {
    %c0_i32 = arith.constant 0 : i32
    %c0_i32_0 = arith.constant 0 : i32
    %c0_i32_1 = arith.constant 0 : i32
    return %c0_i32, %c0_i32_0 : i32, i32
  }
  func.func @transform_9(%arg0: i32) -> (i32, i32) {
    %c0_i32 = arith.constant 0 : i32
    %c0_i32_0 = arith.constant 0 : i32
    %c0_i32_1 = arith.constant 0 : i32
    return %c0_i32, %c0_i32_0 : i32, i32
  }
  func.func @transform_10(%arg0: i32) -> (i32, i32) {
    %c0_i32 = arith.constant 0 : i32
    %c0_i32_0 = arith.constant 0 : i32
    %c0_i32_1 = arith.constant 0 : i32
    return %c0_i32, %c0_i32_0 : i32, i32
  }
  func.func @transform_11(%arg0: i32) -> (i32, i32) {
    %c0_i32 = arith.constant 0 : i32
    %c0_i32_0 = arith.constant 0 : i32
    %c0_i32_1 = arith.constant 0 : i32
    return %c0_i32, %c0_i32_0 : i32, i32
  }
  func.func @transform_12(%arg0: i32) -> (i32, i32) {
    %c0_i32 = arith.constant 0 : i32
    %c0_i32_0 = arith.constant 0 : i32
    %c0_i32_1 = arith.constant 0 : i32
    return %c0_i32, %c0_i32_0 : i32, i32
  }
  func.func @transform_13(%arg0: i32) -> (i32, i32, i32) {
    %c0_i32 = arith.constant 0 : i32
    %c0_i32_0 = arith.constant 0 : i32
    %c0_i32_1 = arith.constant 0 : i32
    return %arg0, %c0_i32, %c0_i32_0 : i32, i32, i32
  }
}

module attributes {stable_mosaic.version = 11 : i64} {
  func.func @decoder_block_kernel(%arg0: i32, %arg1: memref<1x8x32xf32, #tpu.memory_space<vmem>>, %arg2: memref<1x32xf32, #tpu.memory_space<vmem>>, %arg3: memref<1x32xf32, #tpu.memory_space<vmem>>, %arg4: memref<32x96xf32, #tpu.memory_space<vmem>>, %arg5: memref<1x96xf32, #tpu.memory_space<vmem>>, %arg6: memref<32x32xf32, #tpu.memory_space<vmem>>, %arg7: memref<1x32xf32, #tpu.memory_space<vmem>>, %arg8: memref<1x32xf32, #tpu.memory_space<vmem>>, %arg9: memref<1x32xf32, #tpu.memory_space<vmem>>, %arg10: memref<32x64xf32, #tpu.memory_space<vmem>>, %arg11: memref<1x64xf32, #tpu.memory_space<vmem>>, %arg12: memref<64x32xf32, #tpu.memory_space<vmem>>, %arg13: memref<1x32xf32, #tpu.memory_space<vmem>>, %arg14: memref<1x8x32xf32, #tpu.memory_space<vmem>>, %arg15: memref<1x8x32xf32, #tpu.memory_space<vmem>>) attributes {dimension_semantics = [#tpu.dimension_semantics<parallel>], iteration_bounds = array<i64: 2>, scalar_prefetch = 0 : i64, scratch_operands = 1 : i64, tpu.core_type = #tpu.core_type<tc>, window_params = [{transform_indices = @transform_0, window_bounds = array<i64: 1, 8, 32>}, {pipeline_mode = #tpu.pipeline_mode<synchronous>, transform_indices = @transform_1, window_bounds = array<i64: 1, 32>}, {pipeline_mode = #tpu.pipeline_mode<synchronous>, transform_indices = @transform_2, window_bounds = array<i64: 1, 32>}, {pipeline_mode = #tpu.pipeline_mode<synchronous>, transform_indices = @transform_3, window_bounds = array<i64: 32, 96>}, {pipeline_mode = #tpu.pipeline_mode<synchronous>, transform_indices = @transform_4, window_bounds = array<i64: 1, 96>}, {pipeline_mode = #tpu.pipeline_mode<synchronous>, transform_indices = @transform_5, window_bounds = array<i64: 32, 32>}, {pipeline_mode = #tpu.pipeline_mode<synchronous>, transform_indices = @transform_6, window_bounds = array<i64: 1, 32>}, {pipeline_mode = #tpu.pipeline_mode<synchronous>, transform_indices = @transform_7, window_bounds = array<i64: 1, 32>}, {pipeline_mode = #tpu.pipeline_mode<synchronous>, transform_indices = @transform_8, window_bounds = array<i64: 1, 32>}, {pipeline_mode = #tpu.pipeline_mode<synchronous>, transform_indices = @transform_9, window_bounds = array<i64: 32, 64>}, {pipeline_mode = #tpu.pipeline_mode<synchronous>, transform_indices = @transform_10, window_bounds = array<i64: 1, 64>}, {pipeline_mode = #tpu.pipeline_mode<synchronous>, transform_indices = @transform_11, window_bounds = array<i64: 64, 32>}, {pipeline_mode = #tpu.pipeline_mode<synchronous>, transform_indices = @transform_12, window_bounds = array<i64: 1, 32>}, {transform_indices = @transform_13, window_bounds = array<i64: 1, 8, 32>}]} {
    %c0 = arith.constant 0 : index
    %c0_0 = arith.constant 0 : index
    %c0_1 = arith.constant 0 : index
    %0 = vector.load %arg1[%c0, %c0_0, %c0_1] : memref<1x8x32xf32, #tpu.memory_space<vmem>>, vector<1x8x32xf32>
    %1 = vector.shape_cast %0 : vector<1x8x32xf32> to vector<8x32xf32>
    %c0_2 = arith.constant 0 : index
    %c0_3 = arith.constant 0 : index
    %2 = vector.load %arg2[%c0_2, %c0_3] : memref<1x32xf32, #tpu.memory_space<vmem>>, vector<1x32xf32>
    %c0_4 = arith.constant 0 : index
    %c0_5 = arith.constant 0 : index
    %3 = vector.load %arg3[%c0_4, %c0_5] : memref<1x32xf32, #tpu.memory_space<vmem>>, vector<1x32xf32>
    %cst = arith.constant dense<0.000000e+00> : vector<8xf32>
    %4 = vector.multi_reduction <add>, %1, %cst [1] : vector<8x32xf32> to vector<8xf32>
    %5 = vector.shape_cast %4 : vector<8xf32> to vector<8x1xf32>
    %cst_6 = arith.constant 3.200000e+01 : f32
    %6 = vector.broadcast %cst_6 : f32 to vector<8x1xf32>
    %7 = arith.divf %5, %6 : vector<8x1xf32>
    %8 = vector.broadcast %7 : vector<8x1xf32> to vector<8x32xf32>
    %9 = arith.subf %1, %8 : vector<8x32xf32>
    %10 = arith.mulf %9, %9 : vector<8x32xf32>
    %cst_7 = arith.constant dense<0.000000e+00> : vector<8xf32>
    %11 = vector.multi_reduction <add>, %10, %cst_7 [1] : vector<8x32xf32> to vector<8xf32>
    %12 = vector.shape_cast %11 : vector<8xf32> to vector<8x1xf32>
    %cst_8 = arith.constant 3.200000e+01 : f32
    %13 = vector.broadcast %cst_8 : f32 to vector<8x1xf32>
    %14 = arith.divf %12, %13 : vector<8x1xf32>
    %15 = vector.broadcast %7 : vector<8x1xf32> to vector<8x32xf32>
    %16 = arith.subf %1, %15 : vector<8x32xf32>
    %cst_9 = arith.constant 9.99999974E-6 : f32
    %17 = vector.broadcast %cst_9 : f32 to vector<8x1xf32>
    %18 = arith.addf %14, %17 : vector<8x1xf32>
    %19 = math.rsqrt %18 : vector<8x1xf32>
    %20 = vector.broadcast %19 : vector<8x1xf32> to vector<8x32xf32>
    %21 = arith.mulf %16, %20 : vector<8x32xf32>
    %22 = vector.broadcast %2 : vector<1x32xf32> to vector<8x32xf32>
    %23 = arith.mulf %21, %22 : vector<8x32xf32>
    %24 = vector.broadcast %3 : vector<1x32xf32> to vector<8x32xf32>
    %25 = arith.addf %23, %24 : vector<8x32xf32>
    %c0_10 = arith.constant 0 : index
    %c0_11 = arith.constant 0 : index
    %26 = vector.load %arg4[%c0_10, %c0_11] : memref<32x96xf32, #tpu.memory_space<vmem>>, vector<32x96xf32>
    %cst_12 = arith.constant dense<0.000000e+00> : vector<8x96xf32>
    %27 = tpu.matmul %25, %26, %cst_12 {dimension_numbers = #tpu.dot_dimension_numbers<[1], [0], [0], [1], [0, 0, 1, 1], [], []>} : vector<8x32xf32>, vector<32x96xf32>, vector<8x96xf32> -> vector<8x96xf32>
    %c0_13 = arith.constant 0 : index
    %c0_14 = arith.constant 0 : index
    %28 = vector.load %arg5[%c0_13, %c0_14] : memref<1x96xf32, #tpu.memory_space<vmem>>, vector<1x96xf32>
    %29 = vector.broadcast %28 : vector<1x96xf32> to vector<8x96xf32>
    %30 = arith.addf %27, %29 : vector<8x96xf32>
    %31 = vector.extract_strided_slice %30 {offsets = [0, 0], sizes = [8, 32], strides = [1, 1]} : vector<8x96xf32> to vector<8x32xf32>
    %cst_15 = arith.constant 0.353553385 : f32
    %32 = vector.broadcast %cst_15 : f32 to vector<8x32xf32>
    %33 = arith.mulf %31, %32 : vector<8x32xf32>
    %34 = vector.shape_cast %33 : vector<8x32xf32> to vector<1x8x32xf32>
    %35 = vector.extract_strided_slice %30 {offsets = [0, 32], sizes = [8, 32], strides = [1, 1]} : vector<8x96xf32> to vector<8x32xf32>
    %36 = vector.shape_cast %35 : vector<8x32xf32> to vector<1x8x32xf32>
    %37 = vector.extract_strided_slice %30 {offsets = [0, 64], sizes = [8, 32], strides = [1, 1]} : vector<8x96xf32> to vector<8x32xf32>
    %38 = vector.shape_cast %37 : vector<8x32xf32> to vector<1x8x32xf32>
    %39 = tpu.iota {dimensions = array<i32: 0>} : vector<8x8xi32>
    %c0_i32 = arith.constant 0 : i32
    %40 = vector.broadcast %c0_i32 : i32 to vector<8x8xi32>
    %41 = arith.addi %39, %40 : vector<8x8xi32>
    %42 = tpu.iota {dimensions = array<i32: 1>} : vector<8x8xi32>
    %43 = arith.cmpi sle, %42, %41 : vector<8x8xi32>
    %cst_16 = arith.constant 0.000000e+00 : f32
    %cst_17 = arith.constant -1.000000e+30 : f32
    %44 = vector.broadcast %cst_16 : f32 to vector<8x8xf32>
    %45 = vector.broadcast %cst_17 : f32 to vector<8x8xf32>
    %46 = arith.select %43, %44, %45 : vector<8x8xi1>, vector<8x8xf32>
    %47 = vector.extract_strided_slice %34 {offsets = [0, 0, 0], sizes = [1, 8, 8], strides = [1, 1, 1]} : vector<1x8x32xf32> to vector<1x8x8xf32>
    %48 = vector.extract_strided_slice %36 {offsets = [0, 0, 0], sizes = [1, 8, 8], strides = [1, 1, 1]} : vector<1x8x32xf32> to vector<1x8x8xf32>
    %49 = vector.extract_strided_slice %38 {offsets = [0, 0, 0], sizes = [1, 8, 8], strides = [1, 1, 1]} : vector<1x8x32xf32> to vector<1x8x8xf32>
    "tpu.trace_start"() <{level = 10 : i32, message = "bqd,bkd->bqk"}> : () -> ()
    %cst_18 = arith.constant dense<0.000000e+00> : vector<1x8x8xf32>
    %50 = tpu.matmul %47, %48, %cst_18 {dimension_numbers = #tpu.dot_dimension_numbers<[2], [2], [1], [1], [0, 0, 0, 1, 1, 1], [0], [0]>} : vector<1x8x8xf32>, vector<1x8x8xf32>, vector<1x8x8xf32> -> vector<1x8x8xf32>
    "tpu.trace_stop"() : () -> ()
    %51 = vector.shape_cast %46 : vector<8x8xf32> to vector<1x8x8xf32>
    %52 = arith.addf %50, %51 : vector<1x8x8xf32>
    %cst_19 = arith.constant dense<0xFF800000> : vector<1x8xf32>
    %53 = vector.multi_reduction <maximumf>, %52, %cst_19 [2] : vector<1x8x8xf32> to vector<1x8xf32>
    %54 = vector.shape_cast %53 : vector<1x8xf32> to vector<1x8x1xf32>
    %55 = vector.broadcast %54 : vector<1x8x1xf32> to vector<1x8x8xf32>
    %56 = arith.subf %52, %55 : vector<1x8x8xf32>
    %57 = math.exp %56 : vector<1x8x8xf32>
    %cst_20 = arith.constant dense<0.000000e+00> : vector<1x8xf32>
    %58 = vector.multi_reduction <add>, %57, %cst_20 [2] : vector<1x8x8xf32> to vector<1x8xf32>
    %59 = vector.shape_cast %58 : vector<1x8xf32> to vector<1x8x1xf32>
    %60 = tpu.reciprocal %59 {approx = true} : vector<1x8x1xf32> -> vector<1x8x1xf32>
    %61 = vector.broadcast %60 : vector<1x8x1xf32> to vector<1x8x8xf32>
    %62 = arith.mulf %57, %61 : vector<1x8x8xf32>
    "tpu.trace_start"() <{level = 10 : i32, message = "bqk,bkd->bqd"}> : () -> ()
    %cst_21 = arith.constant dense<0.000000e+00> : vector<1x8x8xf32>
    %63 = tpu.matmul %62, %49, %cst_21 {dimension_numbers = #tpu.dot_dimension_numbers<[2], [1], [1], [2], [0, 0, 0, 1, 1, 2], [0], [0]>} : vector<1x8x8xf32>, vector<1x8x8xf32>, vector<1x8x8xf32> -> vector<1x8x8xf32>
    "tpu.trace_stop"() : () -> ()
    %c0_22 = arith.constant 0 : index
    %c0_23 = arith.constant 0 : index
    %c0_24 = arith.constant 0 : index
    %64 = vector.load %arg15[%c0_22, %c0_23, %c0_24] : memref<1x8x32xf32, #tpu.memory_space<vmem>>, vector<1x8x8xf32>
    tpu.vector_store %arg15[%c0_22, %c0_23, %c0_24], %63 {strides = array<i32>} : memref<1x8x32xf32, #tpu.memory_space<vmem>>, vector<1x8x8xf32>,
    %65 = vector.extract_strided_slice %34 {offsets = [0, 0, 8], sizes = [1, 8, 8], strides = [1, 1, 1]} : vector<1x8x32xf32> to vector<1x8x8xf32>
    %66 = vector.extract_strided_slice %36 {offsets = [0, 0, 8], sizes = [1, 8, 8], strides = [1, 1, 1]} : vector<1x8x32xf32> to vector<1x8x8xf32>
    %67 = vector.extract_strided_slice %38 {offsets = [0, 0, 8], sizes = [1, 8, 8], strides = [1, 1, 1]} : vector<1x8x32xf32> to vector<1x8x8xf32>
    "tpu.trace_start"() <{level = 10 : i32, message = "bqd,bkd->bqk"}> : () -> ()
    %cst_25 = arith.constant dense<0.000000e+00> : vector<1x8x8xf32>
    %68 = tpu.matmul %65, %66, %cst_25 {dimension_numbers = #tpu.dot_dimension_numbers<[2], [2], [1], [1], [0, 0, 0, 1, 1, 1], [0], [0]>} : vector<1x8x8xf32>, vector<1x8x8xf32>, vector<1x8x8xf32> -> vector<1x8x8xf32>
    "tpu.trace_stop"() : () -> ()
    %69 = vector.shape_cast %46 : vector<8x8xf32> to vector<1x8x8xf32>
    %70 = arith.addf %68, %69 : vector<1x8x8xf32>
    %cst_26 = arith.constant dense<0xFF800000> : vector<1x8xf32>
    %71 = vector.multi_reduction <maximumf>, %70, %cst_26 [2] : vector<1x8x8xf32> to vector<1x8xf32>
    %72 = vector.shape_cast %71 : vector<1x8xf32> to vector<1x8x1xf32>
    %73 = vector.broadcast %72 : vector<1x8x1xf32> to vector<1x8x8xf32>
    %74 = arith.subf %70, %73 : vector<1x8x8xf32>
    %75 = math.exp %74 : vector<1x8x8xf32>
    %cst_27 = arith.constant dense<0.000000e+00> : vector<1x8xf32>
    %76 = vector.multi_reduction <add>, %75, %cst_27 [2] : vector<1x8x8xf32> to vector<1x8xf32>
    %77 = vector.shape_cast %76 : vector<1x8xf32> to vector<1x8x1xf32>
    %78 = tpu.reciprocal %77 {approx = true} : vector<1x8x1xf32> -> vector<1x8x1xf32>
    %79 = vector.broadcast %78 : vector<1x8x1xf32> to vector<1x8x8xf32>
    %80 = arith.mulf %75, %79 : vector<1x8x8xf32>
    "tpu.trace_start"() <{level = 10 : i32, message = "bqk,bkd->bqd"}> : () -> ()
    %cst_28 = arith.constant dense<0.000000e+00> : vector<1x8x8xf32>
    %81 = tpu.matmul %80, %67, %cst_28 {dimension_numbers = #tpu.dot_dimension_numbers<[2], [1], [1], [2], [0, 0, 0, 1, 1, 2], [0], [0]>} : vector<1x8x8xf32>, vector<1x8x8xf32>, vector<1x8x8xf32> -> vector<1x8x8xf32>
    "tpu.trace_stop"() : () -> ()
    %c0_29 = arith.constant 0 : index
    %c0_30 = arith.constant 0 : index
    %c8 = arith.constant 8 : index
    %82 = vector.load %arg15[%c0_29, %c0_30, %c8] : memref<1x8x32xf32, #tpu.memory_space<vmem>>, vector<1x8x8xf32>
    tpu.vector_store %arg15[%c0_29, %c0_30, %c8], %81 {strides = array<i32>} : memref<1x8x32xf32, #tpu.memory_space<vmem>>, vector<1x8x8xf32>,
    %83 = vector.extract_strided_slice %34 {offsets = [0, 0, 16], sizes = [1, 8, 8], strides = [1, 1, 1]} : vector<1x8x32xf32> to vector<1x8x8xf32>
    %84 = vector.extract_strided_slice %36 {offsets = [0, 0, 16], sizes = [1, 8, 8], strides = [1, 1, 1]} : vector<1x8x32xf32> to vector<1x8x8xf32>
    %85 = vector.extract_strided_slice %38 {offsets = [0, 0, 16], sizes = [1, 8, 8], strides = [1, 1, 1]} : vector<1x8x32xf32> to vector<1x8x8xf32>
    "tpu.trace_start"() <{level = 10 : i32, message = "bqd,bkd->bqk"}> : () -> ()
    %cst_31 = arith.constant dense<0.000000e+00> : vector<1x8x8xf32>
    %86 = tpu.matmul %83, %84, %cst_31 {dimension_numbers = #tpu.dot_dimension_numbers<[2], [2], [1], [1], [0, 0, 0, 1, 1, 1], [0], [0]>} : vector<1x8x8xf32>, vector<1x8x8xf32>, vector<1x8x8xf32> -> vector<1x8x8xf32>
    "tpu.trace_stop"() : () -> ()
    %87 = vector.shape_cast %46 : vector<8x8xf32> to vector<1x8x8xf32>
    %88 = arith.addf %86, %87 : vector<1x8x8xf32>
    %cst_32 = arith.constant dense<0xFF800000> : vector<1x8xf32>
    %89 = vector.multi_reduction <maximumf>, %88, %cst_32 [2] : vector<1x8x8xf32> to vector<1x8xf32>
    %90 = vector.shape_cast %89 : vector<1x8xf32> to vector<1x8x1xf32>
    %91 = vector.broadcast %90 : vector<1x8x1xf32> to vector<1x8x8xf32>
    %92 = arith.subf %88, %91 : vector<1x8x8xf32>
    %93 = math.exp %92 : vector<1x8x8xf32>
    %cst_33 = arith.constant dense<0.000000e+00> : vector<1x8xf32>
    %94 = vector.multi_reduction <add>, %93, %cst_33 [2] : vector<1x8x8xf32> to vector<1x8xf32>
    %95 = vector.shape_cast %94 : vector<1x8xf32> to vector<1x8x1xf32>
    %96 = tpu.reciprocal %95 {approx = true} : vector<1x8x1xf32> -> vector<1x8x1xf32>
    %97 = vector.broadcast %96 : vector<1x8x1xf32> to vector<1x8x8xf32>
    %98 = arith.mulf %93, %97 : vector<1x8x8xf32>
    "tpu.trace_start"() <{level = 10 : i32, message = "bqk,bkd->bqd"}> : () -> ()
    %cst_34 = arith.constant dense<0.000000e+00> : vector<1x8x8xf32>
    %99 = tpu.matmul %98, %85, %cst_34 {dimension_numbers = #tpu.dot_dimension_numbers<[2], [1], [1], [2], [0, 0, 0, 1, 1, 2], [0], [0]>} : vector<1x8x8xf32>, vector<1x8x8xf32>, vector<1x8x8xf32> -> vector<1x8x8xf32>
    "tpu.trace_stop"() : () -> ()
    %c0_35 = arith.constant 0 : index
    %c0_36 = arith.constant 0 : index
    %c16 = arith.constant 16 : index
    %100 = vector.load %arg15[%c0_35, %c0_36, %c16] : memref<1x8x32xf32, #tpu.memory_space<vmem>>, vector<1x8x8xf32>
    tpu.vector_store %arg15[%c0_35, %c0_36, %c16], %99 {strides = array<i32>} : memref<1x8x32xf32, #tpu.memory_space<vmem>>, vector<1x8x8xf32>,
    %101 = vector.extract_strided_slice %34 {offsets = [0, 0, 24], sizes = [1, 8, 8], strides = [1, 1, 1]} : vector<1x8x32xf32> to vector<1x8x8xf32>
    %102 = vector.extract_strided_slice %36 {offsets = [0, 0, 24], sizes = [1, 8, 8], strides = [1, 1, 1]} : vector<1x8x32xf32> to vector<1x8x8xf32>
    %103 = vector.extract_strided_slice %38 {offsets = [0, 0, 24], sizes = [1, 8, 8], strides = [1, 1, 1]} : vector<1x8x32xf32> to vector<1x8x8xf32>
    "tpu.trace_start"() <{level = 10 : i32, message = "bqd,bkd->bqk"}> : () -> ()
    %cst_37 = arith.constant dense<0.000000e+00> : vector<1x8x8xf32>
    %104 = tpu.matmul %101, %102, %cst_37 {dimension_numbers = #tpu.dot_dimension_numbers<[2], [2], [1], [1], [0, 0, 0, 1, 1, 1], [0], [0]>} : vector<1x8x8xf32>, vector<1x8x8xf32>, vector<1x8x8xf32> -> vector<1x8x8xf32>
    "tpu.trace_stop"() : () -> ()
    %105 = vector.shape_cast %46 : vector<8x8xf32> to vector<1x8x8xf32>
    %106 = arith.addf %104, %105 : vector<1x8x8xf32>
    %cst_38 = arith.constant dense<0xFF800000> : vector<1x8xf32>
    %107 = vector.multi_reduction <maximumf>, %106, %cst_38 [2] : vector<1x8x8xf32> to vector<1x8xf32>
    %108 = vector.shape_cast %107 : vector<1x8xf32> to vector<1x8x1xf32>
    %109 = vector.broadcast %108 : vector<1x8x1xf32> to vector<1x8x8xf32>
    %110 = arith.subf %106, %109 : vector<1x8x8xf32>
    %111 = math.exp %110 : vector<1x8x8xf32>
    %cst_39 = arith.constant dense<0.000000e+00> : vector<1x8xf32>
    %112 = vector.multi_reduction <add>, %111, %cst_39 [2] : vector<1x8x8xf32> to vector<1x8xf32>
    %113 = vector.shape_cast %112 : vector<1x8xf32> to vector<1x8x1xf32>
    %114 = tpu.reciprocal %113 {approx = true} : vector<1x8x1xf32> -> vector<1x8x1xf32>
    %115 = vector.broadcast %114 : vector<1x8x1xf32> to vector<1x8x8xf32>
    %116 = arith.mulf %111, %115 : vector<1x8x8xf32>
    "tpu.trace_start"() <{level = 10 : i32, message = "bqk,bkd->bqd"}> : () -> ()
    %cst_40 = arith.constant dense<0.000000e+00> : vector<1x8x8xf32>
    %117 = tpu.matmul %116, %103, %cst_40 {dimension_numbers = #tpu.dot_dimension_numbers<[2], [1], [1], [2], [0, 0, 0, 1, 1, 2], [0], [0]>} : vector<1x8x8xf32>, vector<1x8x8xf32>, vector<1x8x8xf32> -> vector<1x8x8xf32>
    "tpu.trace_stop"() : () -> ()
    %c0_41 = arith.constant 0 : index
    %c0_42 = arith.constant 0 : index
    %c24 = arith.constant 24 : index
    %118 = vector.load %arg15[%c0_41, %c0_42, %c24] : memref<1x8x32xf32, #tpu.memory_space<vmem>>, vector<1x8x8xf32>
    tpu.vector_store %arg15[%c0_41, %c0_42, %c24], %117 {strides = array<i32>} : memref<1x8x32xf32, #tpu.memory_space<vmem>>, vector<1x8x8xf32>,
    %c0_43 = arith.constant 0 : index
    %c0_44 = arith.constant 0 : index
    %c0_45 = arith.constant 0 : index
    %119 = vector.load %arg15[%c0_43, %c0_44, %c0_45] : memref<1x8x32xf32, #tpu.memory_space<vmem>>, vector<1x8x32xf32>
    %120 = vector.shape_cast %119 : vector<1x8x32xf32> to vector<8x32xf32>
    %c0_46 = arith.constant 0 : index
    %c0_47 = arith.constant 0 : index
    %121 = vector.load %arg6[%c0_46, %c0_47] : memref<32x32xf32, #tpu.memory_space<vmem>>, vector<32x32xf32>
    %cst_48 = arith.constant dense<0.000000e+00> : vector<8x32xf32>
    %122 = tpu.matmul %120, %121, %cst_48 {dimension_numbers = #tpu.dot_dimension_numbers<[1], [0], [0], [1], [0, 0, 1, 1], [], []>} : vector<8x32xf32>, vector<32x32xf32>, vector<8x32xf32> -> vector<8x32xf32>
    %123 = arith.addf %1, %122 : vector<8x32xf32>
    %c0_49 = arith.constant 0 : index
    %c0_50 = arith.constant 0 : index
    %124 = vector.load %arg7[%c0_49, %c0_50] : memref<1x32xf32, #tpu.memory_space<vmem>>, vector<1x32xf32>
    %125 = vector.broadcast %124 : vector<1x32xf32> to vector<8x32xf32>
    %126 = arith.addf %123, %125 : vector<8x32xf32>
    %c0_51 = arith.constant 0 : index
    %c0_52 = arith.constant 0 : index
    %127 = vector.load %arg8[%c0_51, %c0_52] : memref<1x32xf32, #tpu.memory_space<vmem>>, vector<1x32xf32>
    %c0_53 = arith.constant 0 : index
    %c0_54 = arith.constant 0 : index
    %128 = vector.load %arg9[%c0_53, %c0_54] : memref<1x32xf32, #tpu.memory_space<vmem>>, vector<1x32xf32>
    %cst_55 = arith.constant dense<0.000000e+00> : vector<8xf32>
    %129 = vector.multi_reduction <add>, %126, %cst_55 [1] : vector<8x32xf32> to vector<8xf32>
    %130 = vector.shape_cast %129 : vector<8xf32> to vector<8x1xf32>
    %cst_56 = arith.constant 3.200000e+01 : f32
    %131 = vector.broadcast %cst_56 : f32 to vector<8x1xf32>
    %132 = arith.divf %130, %131 : vector<8x1xf32>
    %133 = vector.broadcast %132 : vector<8x1xf32> to vector<8x32xf32>
    %134 = arith.subf %126, %133 : vector<8x32xf32>
    %135 = arith.mulf %134, %134 : vector<8x32xf32>
    %cst_57 = arith.constant dense<0.000000e+00> : vector<8xf32>
    %136 = vector.multi_reduction <add>, %135, %cst_57 [1] : vector<8x32xf32> to vector<8xf32>
    %137 = vector.shape_cast %136 : vector<8xf32> to vector<8x1xf32>
    %cst_58 = arith.constant 3.200000e+01 : f32
    %138 = vector.broadcast %cst_58 : f32 to vector<8x1xf32>
    %139 = arith.divf %137, %138 : vector<8x1xf32>
    %140 = vector.broadcast %132 : vector<8x1xf32> to vector<8x32xf32>
    %141 = arith.subf %126, %140 : vector<8x32xf32>
    %cst_59 = arith.constant 9.99999974E-6 : f32
    %142 = vector.broadcast %cst_59 : f32 to vector<8x1xf32>
    %143 = arith.addf %139, %142 : vector<8x1xf32>
    %144 = math.rsqrt %143 : vector<8x1xf32>
    %145 = vector.broadcast %144 : vector<8x1xf32> to vector<8x32xf32>
    %146 = arith.mulf %141, %145 : vector<8x32xf32>
    %147 = vector.broadcast %127 : vector<1x32xf32> to vector<8x32xf32>
    %148 = arith.mulf %146, %147 : vector<8x32xf32>
    %149 = vector.broadcast %128 : vector<1x32xf32> to vector<8x32xf32>
    %150 = arith.addf %148, %149 : vector<8x32xf32>
    %cst_60 = arith.constant 0.000000e+00 : f32
    %151 = vector.broadcast %cst_60 : f32 to vector<8x32xf32>
    %c0_61 = arith.constant 0 : index
    %c0_62 = arith.constant 0 : index
    %152 = vector.load %arg10[%c0_61, %c0_62] : memref<32x64xf32, #tpu.memory_space<vmem>>, vector<32x64xf32>
    %cst_63 = arith.constant dense<0.000000e+00> : vector<8x64xf32>
    %153 = tpu.matmul %150, %152, %cst_63 {dimension_numbers = #tpu.dot_dimension_numbers<[1], [0], [0], [1], [0, 0, 1, 1], [], []>} : vector<8x32xf32>, vector<32x64xf32>, vector<8x64xf32> -> vector<8x64xf32>
    %c0_64 = arith.constant 0 : index
    %c0_65 = arith.constant 0 : index
    %154 = vector.load %arg11[%c0_64, %c0_65] : memref<1x64xf32, #tpu.memory_space<vmem>>, vector<1x64xf32>
    %155 = vector.broadcast %154 : vector<1x64xf32> to vector<8x64xf32>
    %156 = arith.addf %153, %155 : vector<8x64xf32>
    %cst_66 = arith.constant 0.000000e+00 : f32
    %157 = vector.broadcast %cst_66 : f32 to vector<8x64xf32>
    %158 = arith.maximumf %156, %157 : vector<8x64xf32>
    %c0_67 = arith.constant 0 : index
    %c0_68 = arith.constant 0 : index
    %159 = vector.load %arg12[%c0_67, %c0_68] : memref<64x32xf32, #tpu.memory_space<vmem>>, vector<64x32xf32>
    %cst_69 = arith.constant dense<0.000000e+00> : vector<8x32xf32>
    %160 = tpu.matmul %158, %159, %cst_69 {dimension_numbers = #tpu.dot_dimension_numbers<[1], [0], [0], [1], [0, 0, 1, 1], [], []>} : vector<8x64xf32>, vector<64x32xf32>, vector<8x32xf32> -> vector<8x32xf32>
    %161 = arith.addf %151, %160 : vector<8x32xf32>
    %162 = arith.addf %126, %161 : vector<8x32xf32>
    %c0_70 = arith.constant 0 : index
    %c0_71 = arith.constant 0 : index
    %163 = vector.load %arg13[%c0_70, %c0_71] : memref<1x32xf32, #tpu.memory_space<vmem>>, vector<1x32xf32>
    %164 = vector.broadcast %163 : vector<1x32xf32> to vector<8x32xf32>
    %165 = arith.addf %162, %164 : vector<8x32xf32>
    %166 = vector.shape_cast %165 : vector<8x32xf32> to vector<1x8x32xf32>
    %c0_72 = arith.constant 0 : index
    %c0_73 = arith.constant 0 : index
    %c0_74 = arith.constant 0 : index
    %167 = vector.load %arg14[%c0_72, %c0_73, %c0_74] : memref<1x8x32xf32, #tpu.memory_space<vmem>>, vector<1x8x32xf32>
    tpu.vector_store %arg14[%c0_72, %c0_73, %c0_74], %166 {strides = array<i32>} : memref<1x8x32xf32, #tpu.memory_space<vmem>>, vector<1x8x32xf32>,
    return
  }
  func.func @transform_0(%arg0: i32) -> (i32, i32, i32) {
    %c0_i32 = arith.constant 0 : i32
    %c0_i32_0 = arith.constant 0 : i32
    %c0_i32_1 = arith.constant 0 : i32
    return %arg0, %c0_i32, %c0_i32_0 : i32, i32, i32
  }
  func.func @transform_1(%arg0: i32) -> (i32, i32) {
    %c0_i32 = arith.constant 0 : i32
    %c0_i32_0 = arith.constant 0 : i32
    %c0_i32_1 = arith.constant 0 : i32
    return %c0_i32, %c0_i32_0 : i32, i32
  }
  func.func @transform_2(%arg0: i32) -> (i32, i32) {
    %c0_i32 = arith.constant 0 : i32
    %c0_i32_0 = arith.constant 0 : i32
    %c0_i32_1 = arith.constant 0 : i32
    return %c0_i32, %c0_i32_0 : i32, i32
  }
  func.func @transform_3(%arg0: i32) -> (i32, i32) {
    %c0_i32 = arith.constant 0 : i32
    %c0_i32_0 = arith.constant 0 : i32
    %c0_i32_1 = arith.constant 0 : i32
    return %c0_i32, %c0_i32_0 : i32, i32
  }
  func.func @transform_4(%arg0: i32) -> (i32, i32) {
    %c0_i32 = arith.constant 0 : i32
    %c0_i32_0 = arith.constant 0 : i32
    %c0_i32_1 = arith.constant 0 : i32
    return %c0_i32, %c0_i32_0 : i32, i32
  }
  func.func @transform_5(%arg0: i32) -> (i32, i32) {
    %c0_i32 = arith.constant 0 : i32
    %c0_i32_0 = arith.constant 0 : i32
    %c0_i32_1 = arith.constant 0 : i32
    return %c0_i32, %c0_i32_0 : i32, i32
  }
  func.func @transform_6(%arg0: i32) -> (i32, i32) {
    %c0_i32 = arith.constant 0 : i32
    %c0_i32_0 = arith.constant 0 : i32
    %c0_i32_1 = arith.constant 0 : i32
    return %c0_i32, %c0_i32_0 : i32, i32
  }
  func.func @transform_7(%arg0: i32) -> (i32, i32) {
    %c0_i32 = arith.constant 0 : i32
    %c0_i32_0 = arith.constant 0 : i32
    %c0_i32_1 = arith.constant 0 : i32
    return %c0_i32, %c0_i32_0 : i32, i32
  }
  func.func @transform_8(%arg0: i32) -> (i32, i32) {
    %c0_i32 = arith.constant 0 : i32
    %c0_i32_0 = arith.constant 0 : i32
    %c0_i32_1 = arith.constant 0 : i32
    return %c0_i32, %c0_i32_0 : i32, i32
  }
  func.func @transform_9(%arg0: i32) -> (i32, i32) {
    %c0_i32 = arith.constant 0 : i32
    %c0_i32_0 = arith.constant 0 : i32
    %c0_i32_1 = arith.constant 0 : i32
    return %c0_i32, %c0_i32_0 : i32, i32
  }
  func.func @transform_10(%arg0: i32) -> (i32, i32) {
    %c0_i32 = arith.constant 0 : i32
    %c0_i32_0 = arith.constant 0 : i32
    %c0_i32_1 = arith.constant 0 : i32
    return %c0_i32, %c0_i32_0 : i32, i32
  }
  func.func @transform_11(%arg0: i32) -> (i32, i32) {
    %c0_i32 = arith.constant 0 : i32
    %c0_i32_0 = arith.constant 0 : i32
    %c0_i32_1 = arith.constant 0 : i32
    return %c0_i32, %c0_i32_0 : i32, i32
  }
  func.func @transform_12(%arg0: i32) -> (i32, i32) {
    %c0_i32 = arith.constant 0 : i32
    %c0_i32_0 = arith.constant 0 : i32
    %c0_i32_1 = arith.constant 0 : i32
    return %c0_i32, %c0_i32_0 : i32, i32
  }
  func.func @transform_13(%arg0: i32) -> (i32, i32, i32) {
    %c0_i32 = arith.constant 0 : i32
    %c0_i32_0 = arith.constant 0 : i32
    %c0_i32_1 = arith.constant 0 : i32
    return %arg0, %c0_i32, %c0_i32_0 : i32, i32, i32
  }
}

</mosaic_0001>

<llo_original>
// kernel: tpu_custom_call.1
$region0: #{tpu_custom_call.1}
  #allocation0 [shape = 'u32[]', space=smem, size = 0x4, offset = 0x4, fixed_abs, tag = 'smem constant byte address 0x4 - core index']
  #allocation1 [shape = 'u32[144,128]{1,0:T(1,128)}', space=vmem, size = 0x12000, scoped, tag = 'internal scratch']
  #allocation2 [shape = 'f32[1,8,32]{2,1,0:T(8,128)}', space=vmem, size = 0x1000, scoped, tag = 'scratch operand']
  %s0 = inlined_call_operand.hbm [shape: f32[2,8,32], index: 0, kind: input, shape index: {}]
  %s1 = inlined_call_operand.vmem [shape: f32[1,32], index: 1, kind: input, shape index: {}]
  %s2 = inlined_call_operand.vmem [shape: f32[1,32], index: 2, kind: input, shape index: {}]
  %s3 = inlined_call_operand.vmem [shape: f32[32,96], index: 3, kind: input, shape index: {}]
  %s4 = inlined_call_operand.vmem [shape: f32[1,96], index: 4, kind: input, shape index: {}]
  %s5 = inlined_call_operand.vmem [shape: f32[32,32], index: 5, kind: input, shape index: {}]
  %s6 = inlined_call_operand.vmem [shape: f32[1,32], index: 6, kind: input, shape index: {}]
  %s7 = inlined_call_operand.vmem [shape: f32[1,32], index: 7, kind: input, shape index: {}]
  %s8 = inlined_call_operand.vmem [shape: f32[1,32], index: 8, kind: input, shape index: {}]
  %s9 = inlined_call_operand.vmem [shape: f32[32,64], index: 9, kind: input, shape index: {}]
  %s10 = inlined_call_operand.vmem [shape: f32[1,64], index: 10, kind: input, shape index: {}]
  %s11 = inlined_call_operand.vmem [shape: f32[64,32], index: 11, kind: input, shape index: {}]
  %s12 = inlined_call_operand.vmem [shape: f32[1,32], index: 12, kind: input, shape index: {}]
  %s13 = inlined_call_operand.hbm [shape: f32[2,8,32], index: 13, kind: output, shape index: {}]
  %s14 = sld [smem:[#allocation0]]
  $region89: #{tpu_custom_call.1} parent=0
    _
  %s16 = ssub.s32 1, %s14
  %s17 = scalar_select 0, %s16, %s14
  $region1: #{tpu_custom_call.1} parent=0
    #allocation3 [shape = 'u8[8192]{0}', space=vmem, size = 0x2000, scoped, tag = 'input window, operand 0']
    #allocation4 [shape = 's32[2]{0}', space=sflag, size = 0x8, scoped, tag = 'scoped memory for tpu_custom_call.1']
    #allocation5 [shape = 's32[2]{0}', space=sflag, size = 0x8, scoped, tag = 'scoped memory for tpu_custom_call.1']
    #allocation6 [shape = 'u8[8192]{0}', space=vmem, size = 0x2000, scoped, tag = 'output window, operand 0']
    %18 = vsyncpa [#allocation4], 0
    %s19 = scalar_lea.sflag [#allocation4], 1
    %20 = vsyncpa %s19, 0
    %21 = vsyncpa [#allocation5], 0
    %s22 = scalar_lea.sflag [#allocation5], 1
    %23 = vsyncpa %s22, 0
    loop: start=0, step=1, limit=4
    $region2: #{tpu_custom_call.1} parent=1 // loop_pre_header
      _
    $region3: #{tpu_custom_call.1} parent=1 // loop_header
      %s25 = sphi 0, %s29
      %p26 = scmp.ge.s32.totalorder %s25, 4
      %s35 = sphi 0, %s37
      %s38 = sphi 0, %s35
      %s39 = sphi 0, %s38
      %s55 = sphi 0, %s39
      %s59 = sphi 0, %s59
      %s61 = sphi 0, %s59
      %s62 = sphi 0, %s61
      %s76 = sphi 0, %s62
      %s80 = sphi 0, %s80
      %s82 = sphi 0, %s80
      %s83 = sphi 0, %s82
      %s97 = sphi 0, %s83
      %s101 = sphi 0, %s101
      %s103 = sphi 0, %s101
      %s104 = sphi 0, %s103
      %s118 = sphi 0, %s104
      %s122 = sphi 0, %s122
      %s124 = sphi 0, %s122
      %s125 = sphi 0, %s124
      %s139 = sphi 0, %s125
      %s143 = sphi 0, %s143
      %s145 = sphi 0, %s143
      %s146 = sphi 0, %s145
      %s160 = sphi 0, %s146
      %s164 = sphi 0, %s164
      %s166 = sphi 0, %s164
      %s167 = sphi 0, %s166
      %s181 = sphi 0, %s167
      %s185 = sphi 0, %s185
      %s187 = sphi 0, %s185
      %s188 = sphi 0, %s187
      %s202 = sphi 0, %s188
      %s206 = sphi 0, %s206
      %s208 = sphi 0, %s206
      %s209 = sphi 0, %s208
      %s223 = sphi 0, %s209
      %s227 = sphi 0, %s227
      %s229 = sphi 0, %s227
      %s230 = sphi 0, %s229
      %s244 = sphi 0, %s230
      %s248 = sphi 0, %s248
      %s250 = sphi 0, %s248
      %s251 = sphi 0, %s250
      %s265 = sphi 0, %s251
      %s269 = sphi 0, %s269
      %s271 = sphi 0, %s269
      %s272 = sphi 0, %s271
      %s286 = sphi 0, %s272
      %s290 = sphi 0, %s290
      %s292 = sphi 0, %s290
      %s293 = sphi 0, %s292
      %s307 = sphi 0, %s293
      %s313 = sphi 0, %s315
      %s316 = sphi 0, %s313
      %s317 = sphi 0, %s316
      %s333 = sphi 0, %s317
    $region4: #{tpu_custom_call.1} parent=1 // loop_header_branch
      %28 = sbr.rel (%p26) target = $region8
    $region5: #{tpu_custom_call.1} parent=1 // loop_body
      %s30 = ssub.s32 %s25, 1
      %s31 = ssub.s32 %s25, 2
      %s32 = sadd.s32 %s25, 1
      %s33 = ssub.s32 %s25, %s32
      %p34 = scmp.eq.s32.totalorder %s33, 0
      %s36 = sadd.s32 %s35, 1
      %s37 = scalar_select %p34, %s35, %s36
      %p40 = pneg %p34
      %p41 = scmp.eq.s32.totalorder %s25, 1
      %p42 = por %p40, %p41
      %p43 = scmp.ne.s32.totalorder %s35, %s38
      %p44 = scmp.eq.s32.totalorder %s25, 0
      %p45 = por %p43, %p44
      %p46 = scmp.ne.s32.totalorder %s35, %s38
      %p47 = scmp.eq.s32.totalorder %s30, 1
      %p48 = por %p46, %p47
      %p49 = scmp.ne.s32.totalorder %s38, %s39
      %p50 = scmp.eq.s32.totalorder %s30, 0
      %p51 = por %p49, %p50
      %p52 = scmp.ne.s32.totalorder %s38, %s39
      %p53 = scmp.eq.s32.totalorder %s31, 1
      %p54 = por %p52, %p53
      %p56 = scmp.ne.s32.totalorder %s39, %s55
      %p57 = scmp.eq.s32.totalorder %s31, 0
      %p58 = por %p56, %p57
      %s60 = sadd.s32 %s59, 1
      %p63 = scmp.eq.s32.totalorder %s25, 1
      %p64 = scmp.ne.s32.totalorder %s59, %s61
      %p65 = scmp.eq.s32.totalorder %s25, 0
      %p66 = por %p64, %p65
      %p67 = scmp.ne.s32.totalorder %s59, %s61
      %p68 = scmp.eq.s32.totalorder %s30, 1
      %p69 = por %p67, %p68
      %p70 = scmp.ne.s32.totalorder %s61, %s62
      %p71 = scmp.eq.s32.totalorder %s30, 0
      %p72 = por %p70, %p71
      %p73 = scmp.ne.s32.totalorder %s61, %s62
      %p74 = scmp.eq.s32.totalorder %s31, 1
      %p75 = por %p73, %p74
      %p77 = scmp.ne.s32.totalorder %s62, %s76
      %p78 = scmp.eq.s32.totalorder %s31, 0
      %p79 = por %p77, %p78
      %s81 = sadd.s32 %s80, 1
      %p84 = scmp.eq.s32.totalorder %s25, 1
      %p85 = scmp.ne.s32.totalorder %s80, %s82
      %p86 = scmp.eq.s32.totalorder %s25, 0
      %p87 = por %p85, %p86
      %p88 = scmp.ne.s32.totalorder %s80, %s82
      %p89 = scmp.eq.s32.totalorder %s30, 1
      %p90 = por %p88, %p89
      %p91 = scmp.ne.s32.totalorder %s82, %s83
      %p92 = scmp.eq.s32.totalorder %s30, 0
      %p93 = por %p91, %p92
      %p94 = scmp.ne.s32.totalorder %s82, %s83
      %p95 = scmp.eq.s32.totalorder %s31, 1
      %p96 = por %p94, %p95
      %p98 = scmp.ne.s32.totalorder %s83, %s97
      %p99 = scmp.eq.s32.totalorder %s31, 0
      %p100 = por %p98, %p99
      %s102 = sadd.s32 %s101, 1
      %p105 = scmp.eq.s32.totalorder %s25, 1
      %p106 = scmp.ne.s32.totalorder %s101, %s103
      %p107 = scmp.eq.s32.totalorder %s25, 0
      %p108 = por %p106, %p107
      %p109 = scmp.ne.s32.totalorder %s101, %s103
      %p110 = scmp.eq.s32.totalorder %s30, 1
      %p111 = por %p109, %p110
      %p112 = scmp.ne.s32.totalorder %s103, %s104
      %p113 = scmp.eq.s32.totalorder %s30, 0
      %p114 = por %p112, %p113
      %p115 = scmp.ne.s32.totalorder %s103, %s104
      %p116 = scmp.eq.s32.totalorder %s31, 1
      %p117 = por %p115, %p116
      %p119 = scmp.ne.s32.totalorder %s104, %s118
      %p120 = scmp.eq.s32.totalorder %s31, 0
      %p121 = por %p119, %p120
      %s123 = sadd.s32 %s122, 1
      %p126 = scmp.eq.s32.totalorder %s25, 1
      %p127 = scmp.ne.s32.totalorder %s122, %s124
      %p128 = scmp.eq.s32.totalorder %s25, 0
      %p129 = por %p127, %p128
      %p130 = scmp.ne.s32.totalorder %s122, %s124
      %p131 = scmp.eq.s32.totalorder %s30, 1
      %p132 = por %p130, %p131
      %p133 = scmp.ne.s32.totalorder %s124, %s125
      %p134 = scmp.eq.s32.totalorder %s30, 0
      %p135 = por %p133, %p134
      %p136 = scmp.ne.s32.totalorder %s124, %s125
      %p137 = scmp.eq.s32.totalorder %s31, 1
      %p138 = por %p136, %p137
      %p140 = scmp.ne.s32.totalorder %s125, %s139
      %p141 = scmp.eq.s32.totalorder %s31, 0
      %p142 = por %p140, %p141
      %s144 = sadd.s32 %s143, 1
      %p147 = scmp.eq.s32.totalorder %s25, 1
      %p148 = scmp.ne.s32.totalorder %s143, %s145
      %p149 = scmp.eq.s32.totalorder %s25, 0
      %p150 = por %p148, %p149
      %p151 = scmp.ne.s32.totalorder %s143, %s145
      %p152 = scmp.eq.s32.totalorder %s30, 1
      %p153 = por %p151, %p152
      %p154 = scmp.ne.s32.totalorder %s145, %s146
      %p155 = scmp.eq.s32.totalorder %s30, 0
      %p156 = por %p154, %p155
      %p157 = scmp.ne.s32.totalorder %s145, %s146
      %p158 = scmp.eq.s32.totalorder %s31, 1
      %p159 = por %p157, %p158
      %p161 = scmp.ne.s32.totalorder %s146, %s160
      %p162 = scmp.eq.s32.totalorder %s31, 0
      %p163 = por %p161, %p162
      %s165 = sadd.s32 %s164, 1
      %p168 = scmp.eq.s32.totalorder %s25, 1
      %p169 = scmp.ne.s32.totalorder %s164, %s166
      %p170 = scmp.eq.s32.totalorder %s25, 0
      %p171 = por %p169, %p170
      %p172 = scmp.ne.s32.totalorder %s164, %s166
      %p173 = scmp.eq.s32.totalorder %s30, 1
      %p174 = por %p172, %p173
      %p175 = scmp.ne.s32.totalorder %s166, %s167
      %p176 = scmp.eq.s32.totalorder %s30, 0
      %p177 = por %p175, %p176
      %p178 = scmp.ne.s32.totalorder %s166, %s167
      %p179 = scmp.eq.s32.totalorder %s31, 1
      %p180 = por %p178, %p179
      %p182 = scmp.ne.s32.totalorder %s167, %s181
      %p183 = scmp.eq.s32.totalorder %s31, 0
      %p184 = por %p182, %p183
      %s186 = sadd.s32 %s185, 1
      %p189 = scmp.eq.s32.totalorder %s25, 1
      %p190 = scmp.ne.s32.totalorder %s185, %s187
      %p191 = scmp.eq.s32.totalorder %s25, 0
      %p192 = por %p190, %p191
      %p193 = scmp.ne.s32.totalorder %s185, %s187
      %p194 = scmp.eq.s32.totalorder %s30, 1
      %p195 = por %p193, %p194
      %p196 = scmp.ne.s32.totalorder %s187, %s188
      %p197 = scmp.eq.s32.totalorder %s30, 0
      %p198 = por %p196, %p197
      %p199 = scmp.ne.s32.totalorder %s187, %s188
      %p200 = scmp.eq.s32.totalorder %s31, 1
      %p201 = por %p199, %p200
      %p203 = scmp.ne.s32.totalorder %s188, %s202
      %p204 = scmp.eq.s32.totalorder %s31, 0
      %p205 = por %p203, %p204
      %s207 = sadd.s32 %s206, 1
      %p210 = scmp.eq.s32.totalorder %s25, 1
      %p211 = scmp.ne.s32.totalorder %s206, %s208
      %p212 = scmp.eq.s32.totalorder %s25, 0
      %p213 = por %p211, %p212
      %p214 = scmp.ne.s32.totalorder %s206, %s208
      %p215 = scmp.eq.s32.totalorder %s30, 1
      %p216 = por %p214, %p215
      %p217 = scmp.ne.s32.totalorder %s208, %s209
      %p218 = scmp.eq.s32.totalorder %s30, 0
      %p219 = por %p217, %p218
      %p220 = scmp.ne.s32.totalorder %s208, %s209
      %p221 = scmp.eq.s32.totalorder %s31, 1
      %p222 = por %p220, %p221
      %p224 = scmp.ne.s32.totalorder %s209, %s223
      %p225 = scmp.eq.s32.totalorder %s31, 0
      %p226 = por %p224, %p225
      %s228 = sadd.s32 %s227, 1
      %p231 = scmp.eq.s32.totalorder %s25, 1
      %p232 = scmp.ne.s32.totalorder %s227, %s229
      %p233 = scmp.eq.s32.totalorder %s25, 0
      %p234 = por %p232, %p233
      %p235 = scmp.ne.s32.totalorder %s227, %s229
      %p236 = scmp.eq.s32.totalorder %s30, 1
      %p237 = por %p235, %p236
      %p238 = scmp.ne.s32.totalorder %s229, %s230
      %p239 = scmp.eq.s32.totalorder %s30, 0
      %p240 = por %p238, %p239
      %p241 = scmp.ne.s32.totalorder %s229, %s230
      %p242 = scmp.eq.s32.totalorder %s31, 1
      %p243 = por %p241, %p242
      %p245 = scmp.ne.s32.totalorder %s230, %s244
      %p246 = scmp.eq.s32.totalorder %s31, 0
      %p247 = por %p245, %p246
      %s249 = sadd.s32 %s248, 1
      %p252 = scmp.eq.s32.totalorder %s25, 1
      %p253 = scmp.ne.s32.totalorder %s248, %s250
      %p254 = scmp.eq.s32.totalorder %s25, 0
      %p255 = por %p253, %p254
      %p256 = scmp.ne.s32.totalorder %s248, %s250
      %p257 = scmp.eq.s32.totalorder %s30, 1
      %p258 = por %p256, %p257
      %p259 = scmp.ne.s32.totalorder %s250, %s251
      %p260 = scmp.eq.s32.totalorder %s30, 0
      %p261 = por %p259, %p260
      %p262 = scmp.ne.s32.totalorder %s250, %s251
      %p263 = scmp.eq.s32.totalorder %s31, 1
      %p264 = por %p262, %p263
      %p266 = scmp.ne.s32.totalorder %s251, %s265
      %p267 = scmp.eq.s32.totalorder %s31, 0
      %p268 = por %p266, %p267
      %s270 = sadd.s32 %s269, 1
      %p273 = scmp.eq.s32.totalorder %s25, 1
      %p274 = scmp.ne.s32.totalorder %s269, %s271
      %p275 = scmp.eq.s32.totalorder %s25, 0
      %p276 = por %p274, %p275
      %p277 = scmp.ne.s32.totalorder %s269, %s271
      %p278 = scmp.eq.s32.totalorder %s30, 1
      %p279 = por %p277, %p278
      %p280 = scmp.ne.s32.totalorder %s271, %s272
      %p281 = scmp.eq.s32.totalorder %s30, 0
      %p282 = por %p280, %p281
      %p283 = scmp.ne.s32.totalorder %s271, %s272
      %p284 = scmp.eq.s32.totalorder %s31, 1
      %p285 = por %p283, %p284
      %p287 = scmp.ne.s32.totalorder %s272, %s286
      %p288 = scmp.eq.s32.totalorder %s31, 0
      %p289 = por %p287, %p288
      %s291 = sadd.s32 %s290, 1
      %p294 = scmp.eq.s32.totalorder %s25, 1
      %p295 = scmp.ne.s32.totalorder %s290, %s292
      %p296 = scmp.eq.s32.totalorder %s25, 0
      %p297 = por %p295, %p296
      %p298 = scmp.ne.s32.totalorder %s290, %s292
      %p299 = scmp.eq.s32.totalorder %s30, 1
      %p300 = por %p298, %p299
      %p301 = scmp.ne.s32.totalorder %s292, %s293
      %p302 = scmp.eq.s32.totalorder %s30, 0
      %p303 = por %p301, %p302
      %p304 = scmp.ne.s32.totalorder %s292, %s293
      %p305 = scmp.eq.s32.totalorder %s31, 1
      %p306 = por %p304, %p305
      %p308 = scmp.ne.s32.totalorder %s293, %s307
      %p309 = scmp.eq.s32.totalorder %s31, 0
      %p310 = por %p308, %p309
      %s311 = ssub.s32 %s25, %s32
      %p312 = scmp.eq.s32.totalorder %s311, 0
      %s314 = sadd.s32 %s313, 1
      %s315 = scalar_select %p312, %s313, %s314
      %p318 = pneg %p312
      %p319 = scmp.eq.s32.totalorder %s25, 1
      %p320 = por %p318, %p319
      %p321 = scmp.ne.s32.totalorder %s313, %s316
      %p322 = scmp.eq.s32.totalorder %s25, 0
      %p323 = por %p321, %p322
      %p324 = scmp.ne.s32.totalorder %s313, %s316
      %p325 = scmp.eq.s32.totalorder %s30, 1
      %p326 = por %p324, %p325
      %p327 = scmp.ne.s32.totalorder %s316, %s317
      %p328 = scmp.eq.s32.totalorder %s30, 0
      %p329 = por %p327, %p328
      %p330 = scmp.ne.s32.totalorder %s316, %s317
      %p331 = scmp.eq.s32.totalorder %s31, 1
      %p332 = por %p330, %p331
      %p334 = scmp.ne.s32.totalorder %s317, %s333
      %p335 = scmp.eq.s32.totalorder %s31, 0
      %p336 = por %p334, %p335
      %p337 = scmp.le.s32.totalorder 1, %s25
      %p338 = scmp.lt.s32.totalorder %s25, 3
      %p339 = pnand %p337, %p338
      %p340 = pneg %p339
      // Predicated region
      $region9: #{tpu_custom_call.1} parent=5 // pred_check
        _
      $region10: #{tpu_custom_call.1} parent=5 // pred_check_branch
        %342 = sbr.rel (%p339) target = $region12
      $region11: #{tpu_custom_call.1} parent=5 // pred_region
        %s343 = ssub.s32 %s25, 1
        // Predicated region
        $region13: #{tpu_custom_call.1} parent=11 // pred_check
          %p344 = pneg %p72
        $region14: #{tpu_custom_call.1} parent=11 // pred_check_branch
          %346 = sbr.rel (%p344) target = $region16
        $region15: #{tpu_custom_call.1} parent=11 // pred_region
          _
        $region16: #{tpu_custom_call.1} parent=11 // pred_fallthru
          _
        // Predicated region
        $region17: #{tpu_custom_call.1} parent=11 // pred_check
          %p347 = pneg %p93
        $region18: #{tpu_custom_call.1} parent=11 // pred_check_branch
          %349 = sbr.rel (%p347) target = $region20
        $region19: #{tpu_custom_call.1} parent=11 // pred_region
          _
        $region20: #{tpu_custom_call.1} parent=11 // pred_fallthru
          _
        // Predicated region
        $region21: #{tpu_custom_call.1} parent=11 // pred_check
          %p350 = pneg %p114
        $region22: #{tpu_custom_call.1} parent=11 // pred_check_branch
          %352 = sbr.rel (%p350) target = $region24
        $region23: #{tpu_custom_call.1} parent=11 // pred_region
          _
        $region24: #{tpu_custom_call.1} parent=11 // pred_fallthru
          _
        // Predicated region
        $region25: #{tpu_custom_call.1} parent=11 // pred_check
          %p353 = pneg %p135
        $region26: #{tpu_custom_call.1} parent=11 // pred_check_branch
          %355 = sbr.rel (%p353) target = $region28
        $region27: #{tpu_custom_call.1} parent=11 // pred_region
          _
        $region28: #{tpu_custom_call.1} parent=11 // pred_fallthru
          _
        // Predicated region
        $region29: #{tpu_custom_call.1} parent=11 // pred_check
          %p356 = pneg %p156
        $region30: #{tpu_custom_call.1} parent=11 // pred_check_branch
          %358 = sbr.rel (%p356) target = $region32
        $region31: #{tpu_custom_call.1} parent=11 // pred_region
          _
        $region32: #{tpu_custom_call.1} parent=11 // pred_fallthru
          _
        // Predicated region
        $region33: #{tpu_custom_call.1} parent=11 // pred_check
          %p359 = pneg %p177
        $region34: #{tpu_custom_call.1} parent=11 // pred_check_branch
          %361 = sbr.rel (%p359) target = $region36
        $region35: #{tpu_custom_call.1} parent=11 // pred_region
          _
        $region36: #{tpu_custom_call.1} parent=11 // pred_fallthru
          _
        // Predicated region
        $region37: #{tpu_custom_call.1} parent=11 // pred_check
          %p362 = pneg %p198
        $region38: #{tpu_custom_call.1} parent=11 // pred_check_branch
          %364 = sbr.rel (%p362) target = $region40
        $region39: #{tpu_custom_call.1} parent=11 // pred_region
          _
        $region40: #{tpu_custom_call.1} parent=11 // pred_fallthru
          _
        // Predicated region
        $region41: #{tpu_custom_call.1} parent=11 // pred_check
          %p365 = pneg %p219
        $region42: #{tpu_custom_call.1} parent=11 // pred_check_branch
          %367 = sbr.rel (%p365) target = $region44
        $region43: #{tpu_custom_call.1} parent=11 // pred_region
          _
        $region44: #{tpu_custom_call.1} parent=11 // pred_fallthru
          _
        // Predicated region
        $region45: #{tpu_custom_call.1} parent=11 // pred_check
          %p368 = pneg %p240
        $region46: #{tpu_custom_call.1} parent=11 // pred_check_branch
          %370 = sbr.rel (%p368) target = $region48
        $region47: #{tpu_custom_call.1} parent=11 // pred_region
          _
        $region48: #{tpu_custom_call.1} parent=11 // pred_fallthru
          _
        // Predicated region
        $region49: #{tpu_custom_call.1} parent=11 // pred_check
          %p371 = pneg %p261
        $region50: #{tpu_custom_call.1} parent=11 // pred_check_branch
          %373 = sbr.rel (%p371) target = $region52
        $region51: #{tpu_custom_call.1} parent=11 // pred_region
          _
        $region52: #{tpu_custom_call.1} parent=11 // pred_fallthru
          _
        // Predicated region
        $region53: #{tpu_custom_call.1} parent=11 // pred_check
          %p374 = pneg %p282
        $region54: #{tpu_custom_call.1} parent=11 // pred_check_branch
          %376 = sbr.rel (%p374) target = $region56
        $region55: #{tpu_custom_call.1} parent=11 // pred_region
          _
        $region56: #{tpu_custom_call.1} parent=11 // pred_fallthru
          _
        // Predicated region
        $region57: #{tpu_custom_call.1} parent=11 // pred_check
          %p377 = pneg %p303
        $region58: #{tpu_custom_call.1} parent=11 // pred_check_branch
          %379 = sbr.rel (%p377) target = $region60
        $region59: #{tpu_custom_call.1} parent=11 // pred_region
          _
        $region60: #{tpu_custom_call.1} parent=11 // pred_fallthru
          _
      $region12: #{tpu_custom_call.1} parent=5 // pred_fallthru
        _
      %p380 = scmp.lt.s32.totalorder %s25, 2
      // Predicated region
      $region61: #{tpu_custom_call.1} parent=5 // pred_check
        %p381 = pneg %p380
      $region62: #{tpu_custom_call.1} parent=5 // pred_check_branch
        %383 = sbr.rel (%p381) target = $region64
      $region63: #{tpu_custom_call.1} parent=5 // pred_region
        // Predicated region
        $region65: #{tpu_custom_call.1} parent=63 // pred_check
          %p384 = pneg %p45
        $region66: #{tpu_custom_call.1} parent=63 // pred_check_branch
          %386 = sbr.rel (%p384) target = $region68
        $region67: #{tpu_custom_call.1} parent=63 // pred_region
          %s387 = sand.u32 %s35, 1
          %s388 = scalar_lea.sflag [#allocation4], %s387
          %s389 = sand.u32 %s35, 1
          %s390 = smul.addr %s389, 8
          %s391 = scalar_lea.vmem [#allocation3], %s390
          %s393 = ssub.s32 128, 128
          %394 = vsyncadd %s388, %s393
          %s395 = smul.addr %s25, 128
          %s396 = scalar_lea.hbm %s0, %s395
          %s398 = sshll.u32 %s391, 4
          %s399 = int_to_ptr.vmem [resolvable:$true] %s398
          %401 = dma.hbm_to_vmem [thread:$0]  %s396, 128, %s399, %s388
        $region68: #{tpu_custom_call.1} parent=63 // pred_fallthru
          _
      $region64: #{tpu_custom_call.1} parent=5 // pred_fallthru
        _
      %p402 = scmp.le.s32.totalorder 1, %s25
      %p403 = scmp.lt.s32.totalorder %s25, 3
      %p404 = pnand %p402, %p403
      %p405 = pneg %p404
      // Predicated region
      $region69: #{tpu_custom_call.1} parent=5 // pred_check
        _
      $region70: #{tpu_custom_call.1} parent=5 // pred_check_branch
        %407 = sbr.rel (%p404) target = $region72
      $region71: #{tpu_custom_call.1} parent=5 // pred_region
        %s408 = ssub.s32 %s25, 1
        %s409 = sand.u32 %s38, 1
        %s410 = scalar_lea.sflag [#allocation4], %s409
        %s411 = sand.u32 %s38, 1
        %s412 = smul.addr %s411, 8
        %s413 = scalar_lea.vmem [#allocation3], %s412
        // Predicated region
        $region73: #{tpu_custom_call.1} parent=71 // pred_check
          %p414 = pneg %p51
        $region74: #{tpu_custom_call.1} parent=71 // pred_check_branch
          %416 = sbr.rel (%p414) target = $region76
        $region75: #{tpu_custom_call.1} parent=71 // pred_region
          %417 = dma.done %s410, 128
        $region76: #{tpu_custom_call.1} parent=71 // pred_fallthru
          _
        %s418 = sand.u32 %s38, 1
        %s419 = scalar_lea.sflag [#allocation4], %s418
        %s420 = sand.u32 %s38, 1
        %s421 = smul.addr %s420, 8
        %s422 = scalar_lea.vmem [#allocation3], %s421
        %p423 = pneg %p51
        %p424 = pneg %p48
        %p425 = pneg %p72
        %p426 = pneg %p69
        %p427 = pneg %p93
        %p428 = pneg %p90
        %p429 = pneg %p114
        %p430 = pneg %p111
        %p431 = pneg %p135
        %p432 = pneg %p132
        %p433 = pneg %p156
        %p434 = pneg %p153
        %p435 = pneg %p177
        %p436 = pneg %p174
        %p437 = pneg %p198
        %p438 = pneg %p195
        %p439 = pneg %p219
        %p440 = pneg %p216
        %p441 = pneg %p240
        %p442 = pneg %p237
        %p443 = pneg %p261
        %p444 = pneg %p258
        %p445 = pneg %p282
        %p446 = pneg %p279
        %p447 = pneg %p303
        %p448 = pneg %p300
        %p449 = pneg %p329
        %p450 = pneg %p326
        %s451 = sand.u32 %s316, 1
        %s452 = scalar_lea.sflag [#allocation5], %s451
        %s453 = sand.u32 %s316, 1
        %s454 = smul.addr %s453, 8
        %s455 = scalar_lea.vmem [#allocation6], %s454
        %v456 = vld [vmem:[%s413] sm:$0xff]
        %v457 = vld [vmem:[%s1] sm:$0x1]
        %v458 = vld [vmem:[%s2] sm:$0x1]
        %vm459 = vcmask 261120
        %v460 = vsel %vm459, %v456, 0.0
        %461 = vadd.xlane.f32.xlu0 %v460
        %v462 = vpop.xlane.xlu0 %461
        %v463 = vrcp.pop 32.0
        %v464 = vmul.f32 %v462, %v463
        %v465 = vsub.f32 %v456, %v464
        %v466 = vmul.f32 %v465, %v465
        %v467 = vsel %vm459, %v466, 0.0
        %468 = vadd.xlane.f32.xlu0 %v467
        %v469 = vpop.xlane.xlu0 %468
        %v470 = vmul.f32 %v469, %v463
        %v471 = vadd.f32 %v470, 1e-05
        %v472 = vrsqrt.pop %v471
        %v473 = vmul.f32 %v465, %v472
        %v475 = vlaneseq
        %v476 = vshrl.u32 %v475, 7
        %v477 = vsub.s32 0, %v476
        %v478 = vrot.slane %v457, %v477
        %v480 = vmul.f32 %v473, %v478
        %v482 = vlaneseq
        %v483 = vshrl.u32 %v482, 7
        %v484 = vsub.s32 0, %v483
        %v485 = vrot.slane %v458, %v484
        %v487 = vadd.f32 %v480, %v485
        %v488 = vld [vmem:[%s3] sm:$0xff]
        %v489 = vld [vmem:[%s3 + $0x8] sm:$0xff]
        %v490 = vld [vmem:[%s3 + $0x10] sm:$0xff]
        %v491 = vld [vmem:[%s3 + $0x18] sm:$0xff]
        %v492 = vld [vmem:[%s4] sm:$0x1]
        %v494 = vlaneseq
        %v495 = vshrl.u32 %v494, 7
        %v496 = vsub.s32 0, %v495
        %v497 = vrot.slane %v492, %v496
        %v500 = vsel %vm459, %v487, 0
        %502 = vmatprep.subr.mxu0 0.0
        %503 = vmatpush1.msra.mxu0 %v488
        %504 = vmatprep.subr.mxu0 0.0
        %505 = vmatpush1.msra.mxu0 %v489
        %506 = vmatprep.subr.mxu0 0.0
        %507 = vmatpush1.msra.mxu0 %v490
        %508 = vmatprep.subr.mxu0 0.0
        %509 = vmatpush1.msra.mxu0 %v491
        %510 = vmatprep.subr.mxu0 0.0
        %511 = vmatpush1.msra.mxu0 0.0
        %512 = vmatprep.subr.mxu0 0.0
        %513 = vmatpush1.msra.mxu0 0.0
        %514 = vmatprep.subr.mxu0 0.0
        %515 = vmatpush1.msra.mxu0 0.0
        %516 = vmatprep.subr.mxu0 0.0
        %517 = vmatpush1.msra.mxu0 0.0
        %518 = vmatprep.subr.mxu0 0.0
        %519 = vmatpush1.msra.mxu0 0.0
        %520 = vmatprep.subr.mxu0 0.0
        %521 = vmatpush1.msra.mxu0 0.0
        %522 = vmatprep.subr.mxu0 0.0
        %523 = vmatpush1.msra.mxu0 0.0
        %524 = vmatprep.subr.mxu0 0.0
        %525 = vmatpush1.msra.mxu0 0.0
        %526 = vmatprep.subr.mxu0 0.0
        %527 = vmatpush1.msra.mxu0 0.0
        %528 = vmatprep.subr.mxu0 0.0
        %529 = vmatpush1.msra.mxu0 0.0
        %530 = vmatprep.subr.mxu0 0.0
        %531 = vmatpush1.msra.mxu0 0.0
        %532 = vmatprep.subr.mxu0 0.0
        %533 = vmatpush1.msra.mxu0 0.0
        %534 = vmatprep.subr.mxu0 0.0
        %535 = vmatpush1.msra.mxu0 0.0
        %536 = vmatprep.subr.mxu0 0.0
        %537 = vmatpush1.msra.mxu0 0.0
        %538 = vmatprep.subr.mxu0 0.0
        %539 = vmatpush1.msra.mxu0 0.0
        %540 = vmatprep.subr.mxu0 0.0
        %541 = vmatpush1.msra.mxu0 0.0
        %542 = vmatprep.subr.mxu0 0.0
        %543 = vmatpush1.msra.mxu0 0.0
        %544 = vmatprep.subr.mxu0 0.0
        %545 = vmatpush1.msra.mxu0 0.0
        %546 = vmatprep.subr.mxu0 0.0
        %547 = vmatpush1.msra.mxu0 0.0
        %548 = vmatprep.subr.mxu0 0.0
        %549 = vmatpush1.msra.mxu0 0.0
        %550 = vmatprep.subr.mxu0 0.0
        %551 = vmatpush1.msra.mxu0 0.0
        %552 = vmatprep.subr.mxu0 0.0
        %553 = vmatpush1.msra.mxu0 0.0
        %554 = vmatprep.subr.mxu0 0.0
        %555 = vmatpush1.msra.mxu0 0.0
        %556 = vmatprep.subr.mxu0 0.0
        %557 = vmatpush1.msra.mxu0 0.0
        %558 = vmatprep.subr.mxu0 0.0
        %559 = vmatpush1.msra.mxu0 0.0
        %560 = vmatprep.subr.mxu0 0.0
        %561 = vmatpush1.msra.mxu0 0.0
        %562 = vmatprep.subr.mxu0 0.0
        %563 = vmatpush1.msra.mxu0 0.0
        %564 = vmatprep.subr.mxu0 0.0
        %565 = vmatpush1.msra.mxu0 0.0
        %566 = vmatprep.mubr.f32.mxu0 0.0
        %567 = vmatmul.mubr.f32.gmra.mrb[0].mxu0 %v500
        %v568 = vpop.f32.mrb[0].mxu0
        %v569 = vadd.f32 %v497, %v568
        %v570 = vpop.f32.mrb[0].mxu0
        %571 = vdwg.mxu0
        %v572 = vmul.f32 %v569, 0.35355338
        %v573 = vlaneseq
        %v574 = vshrl.u32 %v573, 7
        %v575 = vlaneseq
        %v576 = vand.u32 %v575, 127
        %vm577 = vcmp.le.s32.totalorder %v576, %v574
        %v578 = vsel %vm577, 0.0, -1e+30
        %580 = vrot.lane.b32.xlu0 %v569, 96
        %v581 = vpop.permute.xlu0 %580
        %vm582 = vcmask 64512
        %v584 = vsel %vm582, %v572, 0
        %v586 = vsel %vm582, %v581, 0
        %588 = vmatprep.subr.mxu0 0.0
        %589 = vmatpush1.xpose.msra.mxu0 %v586
        %590 = vmatprep.subr.mxu0 0.0
        %591 = vmatpush1.xpose.msra.mxu0 0.0
        %592 = vmatprep.subr.mxu0 0.0
        %593 = vmatpush1.xpose.msra.mxu0 0.0
        %594 = vmatprep.subr.mxu0 0.0
        %595 = vmatpush1.xpose.msra.mxu0 0.0
        %596 = vmatprep.subr.mxu0 0.0
        %597 = vmatpush1.xpose.msra.mxu0 0.0
        %598 = vmatprep.subr.mxu0 0.0
        %599 = vmatpush1.xpose.msra.mxu0 0.0
        %600 = vmatprep.subr.mxu0 0.0
        %601 = vmatpush1.xpose.msra.mxu0 0.0
        %602 = vmatprep.subr.mxu0 0.0
        %603 = vmatpush1.xpose.msra.mxu0 0.0
        %604 = vmatprep.subr.mxu0 0.0
        %605 = vmatpush1.xpose.msra.mxu0 0.0
        %606 = vmatprep.subr.mxu0 0.0
        %607 = vmatpush1.xpose.msra.mxu0 0.0
        %608 = vmatprep.subr.mxu0 0.0
        %609 = vmatpush1.xpose.msra.mxu0 0.0
        %610 = vmatprep.subr.mxu0 0.0
        %611 = vmatpush1.xpose.msra.mxu0 0.0
        %612 = vmatprep.subr.mxu0 0.0
        %613 = vmatpush1.xpose.msra.mxu0 0.0
        %614 = vmatprep.subr.mxu0 0.0
        %615 = vmatpush1.xpose.msra.mxu0 0.0
        %616 = vmatprep.subr.mxu0 0.0
        %617 = vmatpush1.xpose.msra.mxu0 0.0
        %618 = vmatprep.subr.mxu0 0.0
        %619 = vmatpush1.xpose.msra.mxu0 0.0
        %620 = vmatprep.subr.mxu0 0.0
        %621 = vmatpush1.xpose.msra.mxu0 0.0
        %622 = vmatprep.subr.mxu0 0.0
        %623 = vmatpush1.xpose.msra.mxu0 0.0
        %624 = vmatprep.subr.mxu0 0.0
        %625 = vmatpush1.xpose.msra.mxu0 0.0
        %626 = vmatprep.subr.mxu0 0.0
        %627 = vmatpush1.xpose.msra.mxu0 0.0
        %628 = vmatprep.subr.mxu0 0.0
        %629 = vmatpush1.xpose.msra.mxu0 0.0
        %630 = vmatprep.subr.mxu0 0.0
        %631 = vmatpush1.xpose.msra.mxu0 0.0
        %632 = vmatprep.subr.mxu0 0.0
        %633 = vmatpush1.xpose.msra.mxu0 0.0
        %634 = vmatprep.subr.mxu0 0.0
        %635 = vmatpush1.xpose.msra.mxu0 0.0
        %636 = vmatprep.subr.mxu0 0.0
        %637 = vmatpush1.xpose.msra.mxu0 0.0
        %638 = vmatprep.subr.mxu0 0.0
        %639 = vmatpush1.xpose.msra.mxu0 0.0
        %640 = vmatprep.subr.mxu0 0.0
        %641 = vmatpush1.xpose.msra.mxu0 0.0
        %642 = vmatprep.subr.mxu0 0.0
        %643 = vmatpush1.xpose.msra.mxu0 0.0
        %644 = vmatprep.subr.mxu0 0.0
        %645 = vmatpush1.xpose.msra.mxu0 0.0
        %646 = vmatprep.subr.mxu0 0.0
        %647 = vmatpush1.xpose.msra.mxu0 0.0
        %648 = vmatprep.subr.mxu0 0.0
        %649 = vmatpush1.xpose.msra.mxu0 0.0
        %650 = vmatprep.subr.mxu0 0.0
        %651 = vmatpush1.xpose.msra.mxu0 0.0
        %652 = vmatprep.mubr.f32.mxu0 0.0
        %653 = vmatmul.mubr.f32.gmra.mrb[0].mxu0 %v584
        %v654 = vpop.f32.mrb[0].mxu0
        %v655 = vadd.f32 %v578, %v654
        %v656 = vpop.f32.mrb[0].mxu0
        %657 = vdwg.mxu0
        %v658 = vsel %vm582, %v655, -inf
        %659 = vmax.xlane.f32.xlu0 %v658
        %v660 = vpop.xlane.xlu0 %659
        %v661 = vsub.f32 %v655, %v660
        %v662 = vmul.f32 %v661, 1.442695
        %v663 = vpow.pop %v662
        %v664 = vsel %vm582, %v663, 0.0
        %665 = vadd.xlane.f32.xlu0 %v664
        %v666 = vpop.xlane.xlu0 %665
        %v667 = vrcp.pop %v666
        %v668 = vmul.f32 %v663, %v667
        %669 = vrot.lane.b32.xlu0 %v569, 64
        %v670 = vpop.permute.xlu0 %669
        %v673 = vsel %vm582, %v668, 0
        %675 = vmatprep.subr.mxu0 0.0
        %676 = vmatpush1.msra.mxu0 %v670
        %677 = vmatprep.subr.mxu0 0.0
        %678 = vmatpush1.msra.mxu0 0.0
        %679 = vmatprep.subr.mxu0 0.0
        %680 = vmatpush1.msra.mxu0 0.0
        %681 = vmatprep.subr.mxu0 0.0
        %682 = vmatpush1.msra.mxu0 0.0
        %683 = vmatprep.subr.mxu0 0.0
        %684 = vmatpush1.msra.mxu0 0.0
        %685 = vmatprep.subr.mxu0 0.0
        %686 = vmatpush1.msra.mxu0 0.0
        %687 = vmatprep.subr.mxu0 0.0
        %688 = vmatpush1.msra.mxu0 0.0
        %689 = vmatprep.subr.mxu0 0.0
        %690 = vmatpush1.msra.mxu0 0.0
        %691 = vmatprep.subr.mxu0 0.0
        %692 = vmatpush1.msra.mxu0 0.0
        %693 = vmatprep.subr.mxu0 0.0
        %694 = vmatpush1.msra.mxu0 0.0
        %695 = vmatprep.subr.mxu0 0.0
        %696 = vmatpush1.msra.mxu0 0.0
        %697 = vmatprep.subr.mxu0 0.0
        %698 = vmatpush1.msra.mxu0 0.0
        %699 = vmatprep.subr.mxu0 0.0
        %700 = vmatpush1.msra.mxu0 0.0
        %701 = vmatprep.subr.mxu0 0.0
        %702 = vmatpush1.msra.mxu0 0.0
        %703 = vmatprep.subr.mxu0 0.0
        %704 = vmatpush1.msra.mxu0 0.0
        %705 = vmatprep.subr.mxu0 0.0
        %706 = vmatpush1.msra.mxu0 0.0
        %707 = vmatprep.subr.mxu0 0.0
        %708 = vmatpush1.msra.mxu0 0.0
        %709 = vmatprep.subr.mxu0 0.0
        %710 = vmatpush1.msra.mxu0 0.0
        %711 = vmatprep.subr.mxu0 0.0
        %712 = vmatpush1.msra.mxu0 0.0
        %713 = vmatprep.subr.mxu0 0.0
        %714 = vmatpush1.msra.mxu0 0.0
        %715 = vmatprep.subr.mxu0 0.0
        %716 = vmatpush1.msra.mxu0 0.0
        %717 = vmatprep.subr.mxu0 0.0
        %718 = vmatpush1.msra.mxu0 0.0
        %719 = vmatprep.subr.mxu0 0.0
        %720 = vmatpush1.msra.mxu0 0.0
        %721 = vmatprep.subr.mxu0 0.0
        %722 = vmatpush1.msra.mxu0 0.0
        %723 = vmatprep.subr.mxu0 0.0
        %724 = vmatpush1.msra.mxu0 0.0
        %725 = vmatprep.subr.mxu0 0.0
        %726 = vmatpush1.msra.mxu0 0.0
        %727 = vmatprep.subr.mxu0 0.0
        %728 = vmatpush1.msra.mxu0 0.0
        %729 = vmatprep.subr.mxu0 0.0
        %730 = vmatpush1.msra.mxu0 0.0
        %731 = vmatprep.subr.mxu0 0.0
        %732 = vmatpush1.msra.mxu0 0.0
        %733 = vmatprep.subr.mxu0 0.0
        %734 = vmatpush1.msra.mxu0 0.0
        %735 = vmatprep.subr.mxu0 0.0
        %736 = vmatpush1.msra.mxu0 0.0
        %737 = vmatprep.subr.mxu0 0.0
        %738 = vmatpush1.msra.mxu0 0.0
        %739 = vmatprep.mubr.f32.mxu0 0.0
        %740 = vmatmul.mubr.f32.gmra.mrb[0].mxu0 %v673
        %v741 = vpop.f32.mrb[0].mxu0
        %v742 = vadd.f32 0.0, %v741
        %v743 = vpop.f32.mrb[0].mxu0
        %744 = vdwg.mxu0
        %745 = vst.msk [vmem:[#allocation2] sm:$0xff] %vm582, %v742
        %746 = vrot.lane.b32.xlu0 %v572, 120
        %v747 = vpop.permute.xlu0 %746
        %748 = vrot.lane.b32.xlu0 %v569, 88
        %v749 = vpop.permute.xlu0 %748
        %v750 = vsel %vm582, %v747, 0
        %v752 = vsel %vm582, %v749, 0
        %754 = vmatprep.subr.mxu0 0.0
        %755 = vmatpush1.xpose.msra.mxu0 %v752
        %756 = vmatprep.subr.mxu0 0.0
        %757 = vmatpush1.xpose.msra.mxu0 0.0
        %758 = vmatprep.subr.mxu0 0.0
        %759 = vmatpush1.xpose.msra.mxu0 0.0
        %760 = vmatprep.subr.mxu0 0.0
        %761 = vmatpush1.xpose.msra.mxu0 0.0
        %762 = vmatprep.subr.mxu0 0.0
        %763 = vmatpush1.xpose.msra.mxu0 0.0
        %764 = vmatprep.subr.mxu0 0.0
        %765 = vmatpush1.xpose.msra.mxu0 0.0
        %766 = vmatprep.subr.mxu0 0.0
        %767 = vmatpush1.xpose.msra.mxu0 0.0
        %768 = vmatprep.subr.mxu0 0.0
        %769 = vmatpush1.xpose.msra.mxu0 0.0
        %770 = vmatprep.subr.mxu0 0.0
        %771 = vmatpush1.xpose.msra.mxu0 0.0
        %772 = vmatprep.subr.mxu0 0.0
        %773 = vmatpush1.xpose.msra.mxu0 0.0
        %774 = vmatprep.subr.mxu0 0.0
        %775 = vmatpush1.xpose.msra.mxu0 0.0
        %776 = vmatprep.subr.mxu0 0.0
        %777 = vmatpush1.xpose.msra.mxu0 0.0
        %778 = vmatprep.subr.mxu0 0.0
        %779 = vmatpush1.xpose.msra.mxu0 0.0
        %780 = vmatprep.subr.mxu0 0.0
        %781 = vmatpush1.xpose.msra.mxu0 0.0
        %782 = vmatprep.subr.mxu0 0.0
        %783 = vmatpush1.xpose.msra.mxu0 0.0
        %784 = vmatprep.subr.mxu0 0.0
        %785 = vmatpush1.xpose.msra.mxu0 0.0
        %786 = vmatprep.subr.mxu0 0.0
        %787 = vmatpush1.xpose.msra.mxu0 0.0
        %788 = vmatprep.subr.mxu0 0.0
        %789 = vmatpush1.xpose.msra.mxu0 0.0
        %790 = vmatprep.subr.mxu0 0.0
        %791 = vmatpush1.xpose.msra.mxu0 0.0
        %792 = vmatprep.subr.mxu0 0.0
        %793 = vmatpush1.xpose.msra.mxu0 0.0
        %794 = vmatprep.subr.mxu0 0.0
        %795 = vmatpush1.xpose.msra.mxu0 0.0
        %796 = vmatprep.subr.mxu0 0.0
        %797 = vmatpush1.xpose.msra.mxu0 0.0
        %798 = vmatprep.subr.mxu0 0.0
        %799 = vmatpush1.xpose.msra.mxu0 0.0
        %800 = vmatprep.subr.mxu0 0.0
        %801 = vmatpush1.xpose.msra.mxu0 0.0
        %802 = vmatprep.subr.mxu0 0.0
        %803 = vmatpush1.xpose.msra.mxu0 0.0
        %804 = vmatprep.subr.mxu0 0.0
        %805 = vmatpush1.xpose.msra.mxu0 0.0
        %806 = vmatprep.subr.mxu0 0.0
        %807 = vmatpush1.xpose.msra.mxu0 0.0
        %808 = vmatprep.subr.mxu0 0.0
        %809 = vmatpush1.xpose.msra.mxu0 0.0
        %810 = vmatprep.subr.mxu0 0.0
        %811 = vmatpush1.xpose.msra.mxu0 0.0
        %812 = vmatprep.subr.mxu0 0.0
        %813 = vmatpush1.xpose.msra.mxu0 0.0
        %814 = vmatprep.subr.mxu0 0.0
        %815 = vmatpush1.xpose.msra.mxu0 0.0
        %816 = vmatprep.subr.mxu0 0.0
        %817 = vmatpush1.xpose.msra.mxu0 0.0
        %818 = vmatprep.mubr.f32.mxu0 0.0
        %819 = vmatmul.mubr.f32.gmra.mrb[0].mxu0 %v750
        %v820 = vpop.f32.mrb[0].mxu0
        %v821 = vadd.f32 %v578, %v820
        %v822 = vpop.f32.mrb[0].mxu0
        %823 = vdwg.mxu0
        %v824 = vsel %vm582, %v821, -inf
        %825 = vmax.xlane.f32.xlu0 %v824
        %v826 = vpop.xlane.xlu0 %825
        %v827 = vsub.f32 %v821, %v826
        %v828 = vmul.f32 %v827, 1.442695
        %v829 = vpow.pop %v828
        %v830 = vsel %vm582, %v829, 0.0
        %831 = vadd.xlane.f32.xlu0 %v830
        %v832 = vpop.xlane.xlu0 %831
        %v833 = vrcp.pop %v832
        %v834 = vmul.f32 %v829, %v833
        %835 = vrot.lane.b32.xlu0 %v569, 56
        %v836 = vpop.permute.xlu0 %835
        %v839 = vsel %vm582, %v834, 0
        %841 = vmatprep.subr.mxu0 0.0
        %842 = vmatpush1.msra.mxu0 %v836
        %843 = vmatprep.subr.mxu0 0.0
        %844 = vmatpush1.msra.mxu0 0.0
        %845 = vmatprep.subr.mxu0 0.0
        %846 = vmatpush1.msra.mxu0 0.0
        %847 = vmatprep.subr.mxu0 0.0
        %848 = vmatpush1.msra.mxu0 0.0
        %849 = vmatprep.subr.mxu0 0.0
        %850 = vmatpush1.msra.mxu0 0.0
        %851 = vmatprep.subr.mxu0 0.0
        %852 = vmatpush1.msra.mxu0 0.0
        %853 = vmatprep.subr.mxu0 0.0
        %854 = vmatpush1.msra.mxu0 0.0
        %855 = vmatprep.subr.mxu0 0.0
        %856 = vmatpush1.msra.mxu0 0.0
        %857 = vmatprep.subr.mxu0 0.0
        %858 = vmatpush1.msra.mxu0 0.0
        %859 = vmatprep.subr.mxu0 0.0
        %860 = vmatpush1.msra.mxu0 0.0
        %861 = vmatprep.subr.mxu0 0.0
        %862 = vmatpush1.msra.mxu0 0.0
        %863 = vmatprep.subr.mxu0 0.0
        %864 = vmatpush1.msra.mxu0 0.0
        %865 = vmatprep.subr.mxu0 0.0
        %866 = vmatpush1.msra.mxu0 0.0
        %867 = vmatprep.subr.mxu0 0.0
        %868 = vmatpush1.msra.mxu0 0.0
        %869 = vmatprep.subr.mxu0 0.0
        %870 = vmatpush1.msra.mxu0 0.0
        %871 = vmatprep.subr.mxu0 0.0
        %872 = vmatpush1.msra.mxu0 0.0
        %873 = vmatprep.subr.mxu0 0.0
        %874 = vmatpush1.msra.mxu0 0.0
        %875 = vmatprep.subr.mxu0 0.0
        %876 = vmatpush1.msra.mxu0 0.0
        %877 = vmatprep.subr.mxu0 0.0
        %878 = vmatpush1.msra.mxu0 0.0
        %879 = vmatprep.subr.mxu0 0.0
        %880 = vmatpush1.msra.mxu0 0.0
        %881 = vmatprep.subr.mxu0 0.0
        %882 = vmatpush1.msra.mxu0 0.0
        %883 = vmatprep.subr.mxu0 0.0
        %884 = vmatpush1.msra.mxu0 0.0
        %885 = vmatprep.subr.mxu0 0.0
        %886 = vmatpush1.msra.mxu0 0.0
        %887 = vmatprep.subr.mxu0 0.0
        %888 = vmatpush1.msra.mxu0 0.0
        %889 = vmatprep.subr.mxu0 0.0
        %890 = vmatpush1.msra.mxu0 0.0
        %891 = vmatprep.subr.mxu0 0.0
        %892 = vmatpush1.msra.mxu0 0.0
        %893 = vmatprep.subr.mxu0 0.0
        %894 = vmatpush1.msra.mxu0 0.0
        %895 = vmatprep.subr.mxu0 0.0
        %896 = vmatpush1.msra.mxu0 0.0
        %897 = vmatprep.subr.mxu0 0.0
        %898 = vmatpush1.msra.mxu0 0.0
        %899 = vmatprep.subr.mxu0 0.0
        %900 = vmatpush1.msra.mxu0 0.0
        %901 = vmatprep.subr.mxu0 0.0
        %902 = vmatpush1.msra.mxu0 0.0
        %903 = vmatprep.subr.mxu0 0.0
        %904 = vmatpush1.msra.mxu0 0.0
        %905 = vmatprep.mubr.f32.mxu0 0.0
        %906 = vmatmul.mubr.f32.gmra.mrb[0].mxu0 %v839
        %v907 = vpop.f32.mrb[0].mxu0
        %v908 = vadd.f32 0.0, %v907
        %v909 = vpop.f32.mrb[0].mxu0
        %910 = vdwg.mxu0
        %912 = vrot.lane.b32.xlu0 %v908, 8
        %v913 = vpop.permute.xlu0 %912
        %vm915 = vcmask 130112
        %916 = vst.msk [vmem:[#allocation2] sm:$0xff] %vm915, %v913
        %917 = vrot.lane.b32.xlu0 %v572, 112
        %v918 = vpop.permute.xlu0 %917
        %919 = vrot.lane.b32.xlu0 %v569, 80
        %v920 = vpop.permute.xlu0 %919
        %v921 = vsel %vm582, %v918, 0
        %v923 = vsel %vm582, %v920, 0
        %925 = vmatprep.subr.mxu0 0.0
        %926 = vmatpush1.xpose.msra.mxu0 %v923
        %927 = vmatprep.subr.mxu0 0.0
        %928 = vmatpush1.xpose.msra.mxu0 0.0
        %929 = vmatprep.subr.mxu0 0.0
        %930 = vmatpush1.xpose.msra.mxu0 0.0
        %931 = vmatprep.subr.mxu0 0.0
        %932 = vmatpush1.xpose.msra.mxu0 0.0
        %933 = vmatprep.subr.mxu0 0.0
        %934 = vmatpush1.xpose.msra.mxu0 0.0
        %935 = vmatprep.subr.mxu0 0.0
        %936 = vmatpush1.xpose.msra.mxu0 0.0
        %937 = vmatprep.subr.mxu0 0.0
        %938 = vmatpush1.xpose.msra.mxu0 0.0
        %939 = vmatprep.subr.mxu0 0.0
        %940 = vmatpush1.xpose.msra.mxu0 0.0
        %941 = vmatprep.subr.mxu0 0.0
        %942 = vmatpush1.xpose.msra.mxu0 0.0
        %943 = vmatprep.subr.mxu0 0.0
        %944 = vmatpush1.xpose.msra.mxu0 0.0
        %945 = vmatprep.subr.mxu0 0.0
        %946 = vmatpush1.xpose.msra.mxu0 0.0
        %947 = vmatprep.subr.mxu0 0.0
        %948 = vmatpush1.xpose.msra.mxu0 0.0
        %949 = vmatprep.subr.mxu0 0.0
        %950 = vmatpush1.xpose.msra.mxu0 0.0
        %951 = vmatprep.subr.mxu0 0.0
        %952 = vmatpush1.xpose.msra.mxu0 0.0
        %953 = vmatprep.subr.mxu0 0.0
        %954 = vmatpush1.xpose.msra.mxu0 0.0
        %955 = vmatprep.subr.mxu0 0.0
        %956 = vmatpush1.xpose.msra.mxu0 0.0
        %957 = vmatprep.subr.mxu0 0.0
        %958 = vmatpush1.xpose.msra.mxu0 0.0
        %959 = vmatprep.subr.mxu0 0.0
        %960 = vmatpush1.xpose.msra.mxu0 0.0
        %961 = vmatprep.subr.mxu0 0.0
        %962 = vmatpush1.xpose.msra.mxu0 0.0
        %963 = vmatprep.subr.mxu0 0.0
        %964 = vmatpush1.xpose.msra.mxu0 0.0
        %965 = vmatprep.subr.mxu0 0.0
        %966 = vmatpush1.xpose.msra.mxu0 0.0
        %967 = vmatprep.subr.mxu0 0.0
        %968 = vmatpush1.xpose.msra.mxu0 0.0
        %969 = vmatprep.subr.mxu0 0.0
        %970 = vmatpush1.xpose.msra.mxu0 0.0
        %971 = vmatprep.subr.mxu0 0.0
        %972 = vmatpush1.xpose.msra.mxu0 0.0
        %973 = vmatprep.subr.mxu0 0.0
        %974 = vmatpush1.xpose.msra.mxu0 0.0
        %975 = vmatprep.subr.mxu0 0.0
        %976 = vmatpush1.xpose.msra.mxu0 0.0
        %977 = vmatprep.subr.mxu0 0.0
        %978 = vmatpush1.xpose.msra.mxu0 0.0
        %979 = vmatprep.subr.mxu0 0.0
        %980 = vmatpush1.xpose.msra.mxu0 0.0
        %981 = vmatprep.subr.mxu0 0.0
        %982 = vmatpush1.xpose.msra.mxu0 0.0
        %983 = vmatprep.subr.mxu0 0.0
        %984 = vmatpush1.xpose.msra.mxu0 0.0
        %985 = vmatprep.subr.mxu0 0.0
        %986 = vmatpush1.xpose.msra.mxu0 0.0
        %987 = vmatprep.subr.mxu0 0.0
        %988 = vmatpush1.xpose.msra.mxu0 0.0
        %989 = vmatprep.mubr.f32.mxu0 0.0
        %990 = vmatmul.mubr.f32.gmra.mrb[0].mxu0 %v921
        %v991 = vpop.f32.mrb[0].mxu0
        %v992 = vadd.f32 %v578, %v991
        %v993 = vpop.f32.mrb[0].mxu0
        %994 = vdwg.mxu0
        %v995 = vsel %vm582, %v992, -inf
        %996 = vmax.xlane.f32.xlu0 %v995
        %v997 = vpop.xlane.xlu0 %996
        %v998 = vsub.f32 %v992, %v997
        %v999 = vmul.f32 %v998, 1.442695
        %v1000 = vpow.pop %v999
        %v1001 = vsel %vm582, %v1000, 0.0
        %1002 = vadd.xlane.f32.xlu0 %v1001
        %v1003 = vpop.xlane.xlu0 %1002
        %v1004 = vrcp.pop %v1003
        %v1005 = vmul.f32 %v1000, %v1004
        %1006 = vrot.lane.b32.xlu0 %v569, 48
        %v1007 = vpop.permute.xlu0 %1006
        %v1010 = vsel %vm582, %v1005, 0
        %1012 = vmatprep.subr.mxu0 0.0
        %1013 = vmatpush1.msra.mxu0 %v1007
        %1014 = vmatprep.subr.mxu0 0.0
        %1015 = vmatpush1.msra.mxu0 0.0
        %1016 = vmatprep.subr.mxu0 0.0
        %1017 = vmatpush1.msra.mxu0 0.0
        %1018 = vmatprep.subr.mxu0 0.0
        %1019 = vmatpush1.msra.mxu0 0.0
        %1020 = vmatprep.subr.mxu0 0.0
        %1021 = vmatpush1.msra.mxu0 0.0
        %1022 = vmatprep.subr.mxu0 0.0
        %1023 = vmatpush1.msra.mxu0 0.0
        %1024 = vmatprep.subr.mxu0 0.0
        %1025 = vmatpush1.msra.mxu0 0.0
        %1026 = vmatprep.subr.mxu0 0.0
        %1027 = vmatpush1.msra.mxu0 0.0
        %1028 = vmatprep.subr.mxu0 0.0
        %1029 = vmatpush1.msra.mxu0 0.0
        %1030 = vmatprep.subr.mxu0 0.0
        %1031 = vmatpush1.msra.mxu0 0.0
        %1032 = vmatprep.subr.mxu0 0.0
        %1033 = vmatpush1.msra.mxu0 0.0
        %1034 = vmatprep.subr.mxu0 0.0
        %1035 = vmatpush1.msra.mxu0 0.0
        %1036 = vmatprep.subr.mxu0 0.0
        %1037 = vmatpush1.msra.mxu0 0.0
        %1038 = vmatprep.subr.mxu0 0.0
        %1039 = vmatpush1.msra.mxu0 0.0
        %1040 = vmatprep.subr.mxu0 0.0
        %1041 = vmatpush1.msra.mxu0 0.0
        %1042 = vmatprep.subr.mxu0 0.0
        %1043 = vmatpush1.msra.mxu0 0.0
        %1044 = vmatprep.subr.mxu0 0.0
        %1045 = vmatpush1.msra.mxu0 0.0
        %1046 = vmatprep.subr.mxu0 0.0
        %1047 = vmatpush1.msra.mxu0 0.0
        %1048 = vmatprep.subr.mxu0 0.0
        %1049 = vmatpush1.msra.mxu0 0.0
        %1050 = vmatprep.subr.mxu0 0.0
        %1051 = vmatpush1.msra.mxu0 0.0
        %1052 = vmatprep.subr.mxu0 0.0
        %1053 = vmatpush1.msra.mxu0 0.0
        %1054 = vmatprep.subr.mxu0 0.0
        %1055 = vmatpush1.msra.mxu0 0.0
        %1056 = vmatprep.subr.mxu0 0.0
        %1057 = vmatpush1.msra.mxu0 0.0
        %1058 = vmatprep.subr.mxu0 0.0
        %1059 = vmatpush1.msra.mxu0 0.0
        %1060 = vmatprep.subr.mxu0 0.0
        %1061 = vmatpush1.msra.mxu0 0.0
        %1062 = vmatprep.subr.mxu0 0.0
        %1063 = vmatpush1.msra.mxu0 0.0
        %1064 = vmatprep.subr.mxu0 0.0
        %1065 = vmatpush1.msra.mxu0 0.0
        %1066 = vmatprep.subr.mxu0 0.0
        %1067 = vmatpush1.msra.mxu0 0.0
        %1068 = vmatprep.subr.mxu0 0.0
        %1069 = vmatpush1.msra.mxu0 0.0
        %1070 = vmatprep.subr.mxu0 0.0
        %1071 = vmatpush1.msra.mxu0 0.0
        %1072 = vmatprep.subr.mxu0 0.0
        %1073 = vmatpush1.msra.mxu0 0.0
        %1074 = vmatprep.subr.mxu0 0.0
        %1075 = vmatpush1.msra.mxu0 0.0
        %1076 = vmatprep.mubr.f32.mxu0 0.0
        %1077 = vmatmul.mubr.f32.gmra.mrb[0].mxu0 %v1010
        %v1078 = vpop.f32.mrb[0].mxu0
        %v1079 = vadd.f32 0.0, %v1078
        %v1080 = vpop.f32.mrb[0].mxu0
        %1081 = vdwg.mxu0
        %1083 = vrot.lane.b32.xlu0 %v1079, 16
        %v1084 = vpop.permute.xlu0 %1083
        %vm1086 = vcmask 195712
        %1087 = vst.msk [vmem:[#allocation2] sm:$0xff] %vm1086, %v1084
        %1088 = vrot.lane.b32.xlu0 %v572, 104
        %v1089 = vpop.permute.xlu0 %1088
        %1090 = vrot.lane.b32.xlu0 %v569, 72
        %v1091 = vpop.permute.xlu0 %1090
        %v1092 = vsel %vm582, %v1089, 0
        %v1094 = vsel %vm582, %v1091, 0
        %1096 = vmatprep.subr.mxu0 0.0
        %1097 = vmatpush1.xpose.msra.mxu0 %v1094
        %1098 = vmatprep.subr.mxu0 0.0
        %1099 = vmatpush1.xpose.msra.mxu0 0.0
        %1100 = vmatprep.subr.mxu0 0.0
        %1101 = vmatpush1.xpose.msra.mxu0 0.0
        %1102 = vmatprep.subr.mxu0 0.0
        %1103 = vmatpush1.xpose.msra.mxu0 0.0
        %1104 = vmatprep.subr.mxu0 0.0
        %1105 = vmatpush1.xpose.msra.mxu0 0.0
        %1106 = vmatprep.subr.mxu0 0.0
        %1107 = vmatpush1.xpose.msra.mxu0 0.0
        %1108 = vmatprep.subr.mxu0 0.0
        %1109 = vmatpush1.xpose.msra.mxu0 0.0
        %1110 = vmatprep.subr.mxu0 0.0
        %1111 = vmatpush1.xpose.msra.mxu0 0.0
        %1112 = vmatprep.subr.mxu0 0.0
        %1113 = vmatpush1.xpose.msra.mxu0 0.0
        %1114 = vmatprep.subr.mxu0 0.0
        %1115 = vmatpush1.xpose.msra.mxu0 0.0
        %1116 = vmatprep.subr.mxu0 0.0
        %1117 = vmatpush1.xpose.msra.mxu0 0.0
        %1118 = vmatprep.subr.mxu0 0.0
        %1119 = vmatpush1.xpose.msra.mxu0 0.0
        %1120 = vmatprep.subr.mxu0 0.0
        %1121 = vmatpush1.xpose.msra.mxu0 0.0
        %1122 = vmatprep.subr.mxu0 0.0
        %1123 = vmatpush1.xpose.msra.mxu0 0.0
        %1124 = vmatprep.subr.mxu0 0.0
        %1125 = vmatpush1.xpose.msra.mxu0 0.0
        %1126 = vmatprep.subr.mxu0 0.0
        %1127 = vmatpush1.xpose.msra.mxu0 0.0
        %1128 = vmatprep.subr.mxu0 0.0
        %1129 = vmatpush1.xpose.msra.mxu0 0.0
        %1130 = vmatprep.subr.mxu0 0.0
        %1131 = vmatpush1.xpose.msra.mxu0 0.0
        %1132 = vmatprep.subr.mxu0 0.0
        %1133 = vmatpush1.xpose.msra.mxu0 0.0
        %1134 = vmatprep.subr.mxu0 0.0
        %1135 = vmatpush1.xpose.msra.mxu0 0.0
        %1136 = vmatprep.subr.mxu0 0.0
        %1137 = vmatpush1.xpose.msra.mxu0 0.0
        %1138 = vmatprep.subr.mxu0 0.0
        %1139 = vmatpush1.xpose.msra.mxu0 0.0
        %1140 = vmatprep.subr.mxu0 0.0
        %1141 = vmatpush1.xpose.msra.mxu0 0.0
        %1142 = vmatprep.subr.mxu0 0.0
        %1143 = vmatpush1.xpose.msra.mxu0 0.0
        %1144 = vmatprep.subr.mxu0 0.0
        %1145 = vmatpush1.xpose.msra.mxu0 0.0
        %1146 = vmatprep.subr.mxu0 0.0
        %1147 = vmatpush1.xpose.msra.mxu0 0.0
        %1148 = vmatprep.subr.mxu0 0.0
        %1149 = vmatpush1.xpose.msra.mxu0 0.0
        %1150 = vmatprep.subr.mxu0 0.0
        %1151 = vmatpush1.xpose.msra.mxu0 0.0
        %1152 = vmatprep.subr.mxu0 0.0
        %1153 = vmatpush1.xpose.msra.mxu0 0.0
        %1154 = vmatprep.subr.mxu0 0.0
        %1155 = vmatpush1.xpose.msra.mxu0 0.0
        %1156 = vmatprep.subr.mxu0 0.0
        %1157 = vmatpush1.xpose.msra.mxu0 0.0
        %1158 = vmatprep.subr.mxu0 0.0
        %1159 = vmatpush1.xpose.msra.mxu0 0.0
        %1160 = vmatprep.mubr.f32.mxu0 0.0
        %1161 = vmatmul.mubr.f32.gmra.mrb[0].mxu0 %v1092
        %v1162 = vpop.f32.mrb[0].mxu0
        %v1163 = vadd.f32 %v578, %v1162
        %v1164 = vpop.f32.mrb[0].mxu0
        %1165 = vdwg.mxu0
        %v1166 = vsel %vm582, %v1163, -inf
        %1167 = vmax.xlane.f32.xlu0 %v1166
        %v1168 = vpop.xlane.xlu0 %1167
        %v1169 = vsub.f32 %v1163, %v1168
        %v1170 = vmul.f32 %v1169, 1.442695
        %v1171 = vpow.pop %v1170
        %v1172 = vsel %vm582, %v1171, 0.0
        %1173 = vadd.xlane.f32.xlu0 %v1172
        %v1174 = vpop.xlane.xlu0 %1173
        %v1175 = vrcp.pop %v1174
        %v1176 = vmul.f32 %v1171, %v1175
        %1177 = vrot.lane.b32.xlu0 %v569, 40
        %v1178 = vpop.permute.xlu0 %1177
        %v1181 = vsel %vm582, %v1176, 0
        %1183 = vmatprep.subr.mxu0 0.0
        %1184 = vmatpush1.msra.mxu0 %v1178
        %1185 = vmatprep.subr.mxu0 0.0
        %1186 = vmatpush1.msra.mxu0 0.0
        %1187 = vmatprep.subr.mxu0 0.0
        %1188 = vmatpush1.msra.mxu0 0.0
        %1189 = vmatprep.subr.mxu0 0.0
        %1190 = vmatpush1.msra.mxu0 0.0
        %1191 = vmatprep.subr.mxu0 0.0
        %1192 = vmatpush1.msra.mxu0 0.0
        %1193 = vmatprep.subr.mxu0 0.0
        %1194 = vmatpush1.msra.mxu0 0.0
        %1195 = vmatprep.subr.mxu0 0.0
        %1196 = vmatpush1.msra.mxu0 0.0
        %1197 = vmatprep.subr.mxu0 0.0
        %1198 = vmatpush1.msra.mxu0 0.0
        %1199 = vmatprep.subr.mxu0 0.0
        %1200 = vmatpush1.msra.mxu0 0.0
        %1201 = vmatprep.subr.mxu0 0.0
        %1202 = vmatpush1.msra.mxu0 0.0
        %1203 = vmatprep.subr.mxu0 0.0
        %1204 = vmatpush1.msra.mxu0 0.0
        %1205 = vmatprep.subr.mxu0 0.0
        %1206 = vmatpush1.msra.mxu0 0.0
        %1207 = vmatprep.subr.mxu0 0.0
        %1208 = vmatpush1.msra.mxu0 0.0
        %1209 = vmatprep.subr.mxu0 0.0
        %1210 = vmatpush1.msra.mxu0 0.0
        %1211 = vmatprep.subr.mxu0 0.0
        %1212 = vmatpush1.msra.mxu0 0.0
        %1213 = vmatprep.subr.mxu0 0.0
        %1214 = vmatpush1.msra.mxu0 0.0
        %1215 = vmatprep.subr.mxu0 0.0
        %1216 = vmatpush1.msra.mxu0 0.0
        %1217 = vmatprep.subr.mxu0 0.0
        %1218 = vmatpush1.msra.mxu0 0.0
        %1219 = vmatprep.subr.mxu0 0.0
        %1220 = vmatpush1.msra.mxu0 0.0
        %1221 = vmatprep.subr.mxu0 0.0
        %1222 = vmatpush1.msra.mxu0 0.0
        %1223 = vmatprep.subr.mxu0 0.0
        %1224 = vmatpush1.msra.mxu0 0.0
        %1225 = vmatprep.subr.mxu0 0.0
        %1226 = vmatpush1.msra.mxu0 0.0
        %1227 = vmatprep.subr.mxu0 0.0
        %1228 = vmatpush1.msra.mxu0 0.0
        %1229 = vmatprep.subr.mxu0 0.0
        %1230 = vmatpush1.msra.mxu0 0.0
        %1231 = vmatprep.subr.mxu0 0.0
        %1232 = vmatpush1.msra.mxu0 0.0
        %1233 = vmatprep.subr.mxu0 0.0
        %1234 = vmatpush1.msra.mxu0 0.0
        %1235 = vmatprep.subr.mxu0 0.0
        %1236 = vmatpush1.msra.mxu0 0.0
        %1237 = vmatprep.subr.mxu0 0.0
        %1238 = vmatpush1.msra.mxu0 0.0
        %1239 = vmatprep.subr.mxu0 0.0
        %1240 = vmatpush1.msra.mxu0 0.0
        %1241 = vmatprep.subr.mxu0 0.0
        %1242 = vmatpush1.msra.mxu0 0.0
        %1243 = vmatprep.subr.mxu0 0.0
        %1244 = vmatpush1.msra.mxu0 0.0
        %1245 = vmatprep.subr.mxu0 0.0
        %1246 = vmatpush1.msra.mxu0 0.0
        %1247 = vmatprep.mubr.f32.mxu0 0.0
        %1248 = vmatmul.mubr.f32.gmra.mrb[0].mxu0 %v1181
        %v1249 = vpop.f32.mrb[0].mxu0
        %v1250 = vadd.f32 0.0, %v1249
        %v1251 = vpop.f32.mrb[0].mxu0
        %1252 = vdwg.mxu0
        %1254 = vrot.lane.b32.xlu0 %v1250, 24
        %v1255 = vpop.permute.xlu0 %1254
        %vm1257 = vcmask 261312
        %1258 = vst.msk [vmem:[#allocation2] sm:$0xff] %vm1257, %v1255
        %v1259 = vld [vmem:[#allocation2] sm:$0xff]
        %v1260 = vld [vmem:[%s5] sm:$0xff]
        %v1261 = vld [vmem:[%s5 + $0x8] sm:$0xff]
        %v1262 = vld [vmem:[%s5 + $0x10] sm:$0xff]
        %v1263 = vld [vmem:[%s5 + $0x18] sm:$0xff]
        %v1265 = vsel %vm459, %v1259, 0
        %1267 = vmatprep.subr.mxu0 0.0
        %1268 = vmatpush1.msra.mxu0 %v1260
        %1269 = vmatprep.subr.mxu0 0.0
        %1270 = vmatpush1.msra.mxu0 %v1261
        %1271 = vmatprep.subr.mxu0 0.0
        %1272 = vmatpush1.msra.mxu0 %v1262
        %1273 = vmatprep.subr.mxu0 0.0
        %1274 = vmatpush1.msra.mxu0 %v1263
        %1275 = vmatprep.subr.mxu0 0.0
        %1276 = vmatpush1.msra.mxu0 0.0
        %1277 = vmatprep.subr.mxu0 0.0
        %1278 = vmatpush1.msra.mxu0 0.0
        %1279 = vmatprep.subr.mxu0 0.0
        %1280 = vmatpush1.msra.mxu0 0.0
        %1281 = vmatprep.subr.mxu0 0.0
        %1282 = vmatpush1.msra.mxu0 0.0
        %1283 = vmatprep.subr.mxu0 0.0
        %1284 = vmatpush1.msra.mxu0 0.0
        %1285 = vmatprep.subr.mxu0 0.0
        %1286 = vmatpush1.msra.mxu0 0.0
        %1287 = vmatprep.subr.mxu0 0.0
        %1288 = vmatpush1.msra.mxu0 0.0
        %1289 = vmatprep.subr.mxu0 0.0
        %1290 = vmatpush1.msra.mxu0 0.0
        %1291 = vmatprep.subr.mxu0 0.0
        %1292 = vmatpush1.msra.mxu0 0.0
        %1293 = vmatprep.subr.mxu0 0.0
        %1294 = vmatpush1.msra.mxu0 0.0
        %1295 = vmatprep.subr.mxu0 0.0
        %1296 = vmatpush1.msra.mxu0 0.0
        %1297 = vmatprep.subr.mxu0 0.0
        %1298 = vmatpush1.msra.mxu0 0.0
        %1299 = vmatprep.subr.mxu0 0.0
        %1300 = vmatpush1.msra.mxu0 0.0
        %1301 = vmatprep.subr.mxu0 0.0
        %1302 = vmatpush1.msra.mxu0 0.0
        %1303 = vmatprep.subr.mxu0 0.0
        %1304 = vmatpush1.msra.mxu0 0.0
        %1305 = vmatprep.subr.mxu0 0.0
        %1306 = vmatpush1.msra.mxu0 0.0
        %1307 = vmatprep.subr.mxu0 0.0
        %1308 = vmatpush1.msra.mxu0 0.0
        %1309 = vmatprep.subr.mxu0 0.0
        %1310 = vmatpush1.msra.mxu0 0.0
        %1311 = vmatprep.subr.mxu0 0.0
        %1312 = vmatpush1.msra.mxu0 0.0
        %1313 = vmatprep.subr.mxu0 0.0
        %1314 = vmatpush1.msra.mxu0 0.0
        %1315 = vmatprep.subr.mxu0 0.0
        %1316 = vmatpush1.msra.mxu0 0.0
        %1317 = vmatprep.subr.mxu0 0.0
        %1318 = vmatpush1.msra.mxu0 0.0
        %1319 = vmatprep.subr.mxu0 0.0
        %1320 = vmatpush1.msra.mxu0 0.0
        %1321 = vmatprep.subr.mxu0 0.0
        %1322 = vmatpush1.msra.mxu0 0.0
        %1323 = vmatprep.subr.mxu0 0.0
        %1324 = vmatpush1.msra.mxu0 0.0
        %1325 = vmatprep.subr.mxu0 0.0
        %1326 = vmatpush1.msra.mxu0 0.0
        %1327 = vmatprep.subr.mxu0 0.0
        %1328 = vmatpush1.msra.mxu0 0.0
        %1329 = vmatprep.subr.mxu0 0.0
        %1330 = vmatpush1.msra.mxu0 0.0
        %1331 = vmatprep.mubr.f32.mxu0 0.0
        %1332 = vmatmul.mubr.f32.gmra.mrb[0].mxu0 %v1265
        %v1333 = vpop.f32.mrb[0].mxu0
        %v1334 = vadd.f32 0.0, %v1333
        %v1335 = vpop.f32.mrb[0].mxu0
        %1336 = vdwg.mxu0
        %v1337 = vadd.f32 %v456, %v1334
        %v1338 = vld [vmem:[%s6] sm:$0x1]
        %v1340 = vlaneseq
        %v1341 = vshrl.u32 %v1340, 7
        %v1342 = vsub.s32 0, %v1341
        %v1343 = vrot.slane %v1338, %v1342
        %v1345 = vadd.f32 %v1337, %v1343
        %v1346 = vld [vmem:[%s7] sm:$0x1]
        %v1347 = vld [vmem:[%s8] sm:$0x1]
        %v1348 = vsel %vm459, %v1345, 0.0
        %1349 = vadd.xlane.f32.xlu0 %v1348
        %v1350 = vpop.xlane.xlu0 %1349
        %v1351 = vmul.f32 %v1350, %v463
        %v1352 = vsub.f32 %v1345, %v1351
        %v1353 = vmul.f32 %v1352, %v1352
        %v1354 = vsel %vm459, %v1353, 0.0
        %1355 = vadd.xlane.f32.xlu0 %v1354
        %v1356 = vpop.xlane.xlu0 %1355
        %v1357 = vmul.f32 %v1356, %v463
        %v1358 = vadd.f32 %v1357, 1e-05
        %v1359 = vrsqrt.pop %v1358
        %v1360 = vmul.f32 %v1352, %v1359
        %v1362 = vlaneseq
        %v1363 = vshrl.u32 %v1362, 7
        %v1364 = vsub.s32 0, %v1363
        %v1365 = vrot.slane %v1346, %v1364
        %v1367 = vmul.f32 %v1360, %v1365
        %v1369 = vlaneseq
        %v1370 = vshrl.u32 %v1369, 7
        %v1371 = vsub.s32 0, %v1370
        %v1372 = vrot.slane %v1347, %v1371
        %v1374 = vadd.f32 %v1367, %v1372
        %v1375 = vld [vmem:[%s9] sm:$0xff]
        %v1376 = vld [vmem:[%s9 + $0x8] sm:$0xff]
        %v1377 = vld [vmem:[%s9 + $0x10] sm:$0xff]
        %v1378 = vld [vmem:[%s9 + $0x18] sm:$0xff]
        %v1379 = vld [vmem:[%s10] sm:$0x1]
        %v1381 = vlaneseq
        %v1382 = vshrl.u32 %v1381, 7
        %v1383 = vsub.s32 0, %v1382
        %v1384 = vrot.slane %v1379, %v1383
        %v1387 = vsel %vm459, %v1374, 0
        %1389 = vmatprep.subr.mxu0 0.0
        %1390 = vmatpush1.msra.mxu0 %v1375
        %1391 = vmatprep.subr.mxu0 0.0
        %1392 = vmatpush1.msra.mxu0 %v1376
        %1393 = vmatprep.subr.mxu0 0.0
        %1394 = vmatpush1.msra.mxu0 %v1377
        %1395 = vmatprep.subr.mxu0 0.0
        %1396 = vmatpush1.msra.mxu0 %v1378
        %1397 = vmatprep.subr.mxu0 0.0
        %1398 = vmatpush1.msra.mxu0 0.0
        %1399 = vmatprep.subr.mxu0 0.0
        %1400 = vmatpush1.msra.mxu0 0.0
        %1401 = vmatprep.subr.mxu0 0.0
        %1402 = vmatpush1.msra.mxu0 0.0
        %1403 = vmatprep.subr.mxu0 0.0
        %1404 = vmatpush1.msra.mxu0 0.0
        %1405 = vmatprep.subr.mxu0 0.0
        %1406 = vmatpush1.msra.mxu0 0.0
        %1407 = vmatprep.subr.mxu0 0.0
        %1408 = vmatpush1.msra.mxu0 0.0
        %1409 = vmatprep.subr.mxu0 0.0
        %1410 = vmatpush1.msra.mxu0 0.0
        %1411 = vmatprep.subr.mxu0 0.0
        %1412 = vmatpush1.msra.mxu0 0.0
        %1413 = vmatprep.subr.mxu0 0.0
        %1414 = vmatpush1.msra.mxu0 0.0
        %1415 = vmatprep.subr.mxu0 0.0
        %1416 = vmatpush1.msra.mxu0 0.0
        %1417 = vmatprep.subr.mxu0 0.0
        %1418 = vmatpush1.msra.mxu0 0.0
        %1419 = vmatprep.subr.mxu0 0.0
        %1420 = vmatpush1.msra.mxu0 0.0
        %1421 = vmatprep.subr.mxu0 0.0
        %1422 = vmatpush1.msra.mxu0 0.0
        %1423 = vmatprep.subr.mxu0 0.0
        %1424 = vmatpush1.msra.mxu0 0.0
        %1425 = vmatprep.subr.mxu0 0.0
        %1426 = vmatpush1.msra.mxu0 0.0
        %1427 = vmatprep.subr.mxu0 0.0
        %1428 = vmatpush1.msra.mxu0 0.0
        %1429 = vmatprep.subr.mxu0 0.0
        %1430 = vmatpush1.msra.mxu0 0.0
        %1431 = vmatprep.subr.mxu0 0.0
        %1432 = vmatpush1.msra.mxu0 0.0
        %1433 = vmatprep.subr.mxu0 0.0
        %1434 = vmatpush1.msra.mxu0 0.0
        %1435 = vmatprep.subr.mxu0 0.0
        %1436 = vmatpush1.msra.mxu0 0.0
        %1437 = vmatprep.subr.mxu0 0.0
        %1438 = vmatpush1.msra.mxu0 0.0
        %1439 = vmatprep.subr.mxu0 0.0
        %1440 = vmatpush1.msra.mxu0 0.0
        %1441 = vmatprep.subr.mxu0 0.0
        %1442 = vmatpush1.msra.mxu0 0.0
        %1443 = vmatprep.subr.mxu0 0.0
        %1444 = vmatpush1.msra.mxu0 0.0
        %1445 = vmatprep.subr.mxu0 0.0
        %1446 = vmatpush1.msra.mxu0 0.0
        %1447 = vmatprep.subr.mxu0 0.0
        %1448 = vmatpush1.msra.mxu0 0.0
        %1449 = vmatprep.subr.mxu0 0.0
        %1450 = vmatpush1.msra.mxu0 0.0
        %1451 = vmatprep.subr.mxu0 0.0
        %1452 = vmatpush1.msra.mxu0 0.0
        %1453 = vmatprep.mubr.f32.mxu0 0.0
        %1454 = vmatmul.mubr.f32.gmra.mrb[0].mxu0 %v1387
        %v1455 = vpop.f32.mrb[0].mxu0
        %v1456 = vadd.f32 %v1384, %v1455
        %v1457 = vpop.f32.mrb[0].mxu0
        %1458 = vdwg.mxu0
        %v1459 = vmax.f32 %v1456, 0.0
        %v1460 = vld [vmem:[%s11] sm:$0xff]
        %v1461 = vld [vmem:[%s11 + $0x8] sm:$0xff]
        %v1462 = vld [vmem:[%s11 + $0x10] sm:$0xff]
        %v1463 = vld [vmem:[%s11 + $0x18] sm:$0xff]
        %v1464 = vld [vmem:[%s11 + $0x20] sm:$0xff]
        %v1465 = vld [vmem:[%s11 + $0x28] sm:$0xff]
        %v1466 = vld [vmem:[%s11 + $0x30] sm:$0xff]
        %v1467 = vld [vmem:[%s11 + $0x38] sm:$0xff]
        %vm1468 = vcmask 523264
        %v1470 = vsel %vm1468, %v1459, 0
        %1472 = vmatprep.subr.mxu0 0.0
        %1473 = vmatpush1.msra.mxu0 %v1460
        %1474 = vmatprep.subr.mxu0 0.0
        %1475 = vmatpush1.msra.mxu0 %v1461
        %1476 = vmatprep.subr.mxu0 0.0
        %1477 = vmatpush1.msra.mxu0 %v1462
        %1478 = vmatprep.subr.mxu0 0.0
        %1479 = vmatpush1.msra.mxu0 %v1463
        %1480 = vmatprep.subr.mxu0 0.0
        %1481 = vmatpush1.msra.mxu0 %v1464
        %1482 = vmatprep.subr.mxu0 0.0
        %1483 = vmatpush1.msra.mxu0 %v1465
        %1484 = vmatprep.subr.mxu0 0.0
        %1485 = vmatpush1.msra.mxu0 %v1466
        %1486 = vmatprep.subr.mxu0 0.0
        %1487 = vmatpush1.msra.mxu0 %v1467
        %1488 = vmatprep.subr.mxu0 0.0
        %1489 = vmatpush1.msra.mxu0 0.0
        %1490 = vmatprep.subr.mxu0 0.0
        %1491 = vmatpush1.msra.mxu0 0.0
        %1492 = vmatprep.subr.mxu0 0.0
        %1493 = vmatpush1.msra.mxu0 0.0
        %1494 = vmatprep.subr.mxu0 0.0
        %1495 = vmatpush1.msra.mxu0 0.0
        %1496 = vmatprep.subr.mxu0 0.0
        %1497 = vmatpush1.msra.mxu0 0.0
        %1498 = vmatprep.subr.mxu0 0.0
        %1499 = vmatpush1.msra.mxu0 0.0
        %1500 = vmatprep.subr.mxu0 0.0
        %1501 = vmatpush1.msra.mxu0 0.0
        %1502 = vmatprep.subr.mxu0 0.0
        %1503 = vmatpush1.msra.mxu0 0.0
        %1504 = vmatprep.subr.mxu0 0.0
        %1505 = vmatpush1.msra.mxu0 0.0
        %1506 = vmatprep.subr.mxu0 0.0
        %1507 = vmatpush1.msra.mxu0 0.0
        %1508 = vmatprep.subr.mxu0 0.0
        %1509 = vmatpush1.msra.mxu0 0.0
        %1510 = vmatprep.subr.mxu0 0.0
        %1511 = vmatpush1.msra.mxu0 0.0
        %1512 = vmatprep.subr.mxu0 0.0
        %1513 = vmatpush1.msra.mxu0 0.0
        %1514 = vmatprep.subr.mxu0 0.0
        %1515 = vmatpush1.msra.mxu0 0.0
        %1516 = vmatprep.subr.mxu0 0.0
        %1517 = vmatpush1.msra.mxu0 0.0
        %1518 = vmatprep.subr.mxu0 0.0
        %1519 = vmatpush1.msra.mxu0 0.0
        %1520 = vmatprep.subr.mxu0 0.0
        %1521 = vmatpush1.msra.mxu0 0.0
        %1522 = vmatprep.subr.mxu0 0.0
        %1523 = vmatpush1.msra.mxu0 0.0
        %1524 = vmatprep.subr.mxu0 0.0
        %1525 = vmatpush1.msra.mxu0 0.0
        %1526 = vmatprep.subr.mxu0 0.0
        %1527 = vmatpush1.msra.mxu0 0.0
        %1528 = vmatprep.subr.mxu0 0.0
        %1529 = vmatpush1.msra.mxu0 0.0
        %1530 = vmatprep.subr.mxu0 0.0
        %1531 = vmatpush1.msra.mxu0 0.0
        %1532 = vmatprep.subr.mxu0 0.0
        %1533 = vmatpush1.msra.mxu0 0.0
        %1534 = vmatprep.subr.mxu0 0.0
        %1535 = vmatpush1.msra.mxu0 0.0
        %1536 = vmatprep.mubr.f32.mxu0 0.0
        %1537 = vmatmul.mubr.f32.gmra.mrb[0].mxu0 %v1470
        %v1538 = vpop.f32.mrb[0].mxu0
        %v1539 = vadd.f32 0.0, %v1538
        %v1540 = vpop.f32.mrb[0].mxu0
        %1541 = vdwg.mxu0
        %v1542 = vadd.f32 %v1345, %v1539
        %v1543 = vld [vmem:[%s12] sm:$0x1]
        %v1545 = vlaneseq
        %v1546 = vshrl.u32 %v1545, 7
        %v1547 = vsub.s32 0, %v1546
        %v1548 = vrot.slane %v1543, %v1547
        %v1550 = vadd.f32 %v1542, %v1548
        %1551 = vst.msk [vmem:[%s455] sm:$0xff] %vm459, %v1550
        %s1552 = sand.u32 %s316, 1
        %s1553 = scalar_lea.sflag [#allocation5], %s1552
        %s1554 = sand.u32 %s316, 1
        %s1555 = smul.addr %s1554, 8
        %s1556 = scalar_lea.vmem [#allocation6], %s1555
        // Predicated region
        $region77: #{tpu_custom_call.1} parent=71 // pred_check
          %p1557 = pneg %p326
        $region78: #{tpu_custom_call.1} parent=71 // pred_check_branch
          %1559 = sbr.rel (%p1557) target = $region80
        $region79: #{tpu_custom_call.1} parent=71 // pred_region
          %s1561 = ssub.s32 128, 128
          %1562 = vsyncadd %s1553, %s1561
          %s1563 = smul.addr %s30, 128
          %s1564 = scalar_lea.hbm %s13, %s1563
          %s1566 = sshll.u32 %s1556, 4
          %s1567 = int_to_ptr.vmem [resolvable:$true] %s1566
          %1569 = dma.vmem_to_hbm [thread:$0]  %s1567, 128, %s1564, %s1553
        $region80: #{tpu_custom_call.1} parent=71 // pred_fallthru
          _
      $region72: #{tpu_custom_call.1} parent=5 // pred_fallthru
        _
      %p1570 = scmp.le.s32.totalorder 2, %s25
      // Predicated region
      $region81: #{tpu_custom_call.1} parent=5 // pred_check
        %p1571 = pneg %p1570
      $region82: #{tpu_custom_call.1} parent=5 // pred_check_branch
        %1573 = sbr.rel (%p1571) target = $region84
      $region83: #{tpu_custom_call.1} parent=5 // pred_region
        %s1574 = ssub.s32 %s25, 2
        // Predicated region
        $region85: #{tpu_custom_call.1} parent=83 // pred_check
          %p1575 = pneg %p332
        $region86: #{tpu_custom_call.1} parent=83 // pred_check_branch
          %1577 = sbr.rel (%p1575) target = $region88
        $region87: #{tpu_custom_call.1} parent=83 // pred_region
          %s1578 = sand.u32 %s317, 1
          %s1579 = scalar_lea.sflag [#allocation5], %s1578
          %s1580 = sand.u32 %s317, 1
          %s1581 = smul.addr %s1580, 8
          %s1582 = scalar_lea.vmem [#allocation6], %s1581
          %1583 = dma.done %s1579, 128
        $region88: #{tpu_custom_call.1} parent=83 // pred_fallthru
          _
      $region84: #{tpu_custom_call.1} parent=5 // pred_fallthru
        _
    $region6: #{tpu_custom_call.1} parent=1 // loop_footer
      %s29 = sadd.s32 1, %s25
    $region7: #{tpu_custom_call.1} parent=1 // loop_footer_branch
      %24 = sbr.rel target = $region3
    $region8: #{tpu_custom_call.1} parent=1 // loop_exit
      _
    %1584 = vsyncpa [#allocation4], 1
    %s1585 = scalar_lea.sflag [#allocation4], 1
    %1586 = vsyncpa %s1585, 1
    %1587 = vsyncpa [#allocation5], 1
    %s1588 = scalar_lea.sflag [#allocation5], 1
    %1589 = vsyncpa %s1588, 1

// kernel: tpu_custom_call.1
$region0: #{tpu_custom_call.1}
  #allocation0 [shape = 'u32[]', space=smem, size = 0x4, offset = 0x4, fixed_abs, tag = 'smem constant byte address 0x4 - core index']
  #allocation1 [shape = 'u32[144,128]{1,0:T(1,128)}', space=vmem, size = 0x12000, scoped, tag = 'internal scratch']
  #allocation2 [shape = 'f32[1,8,32]{2,1,0:T(8,128)}', space=vmem, size = 0x1000, scoped, tag = 'scratch operand']
  %s0 = inlined_call_operand.hbm [shape: f32[2,8,32], index: 0, kind: input, shape index: {}]
  %s1 = inlined_call_operand.vmem [shape: f32[1,32], index: 1, kind: input, shape index: {}]
  %s2 = inlined_call_operand.vmem [shape: f32[1,32], index: 2, kind: input, shape index: {}]
  %s3 = inlined_call_operand.vmem [shape: f32[32,96], index: 3, kind: input, shape index: {}]
  %s4 = inlined_call_operand.vmem [shape: f32[1,96], index: 4, kind: input, shape index: {}]
  %s5 = inlined_call_operand.vmem [shape: f32[32,32], index: 5, kind: input, shape index: {}]
  %s6 = inlined_call_operand.vmem [shape: f32[1,32], index: 6, kind: input, shape index: {}]
  %s7 = inlined_call_operand.vmem [shape: f32[1,32], index: 7, kind: input, shape index: {}]
  %s8 = inlined_call_operand.vmem [shape: f32[1,32], index: 8, kind: input, shape index: {}]
  %s9 = inlined_call_operand.vmem [shape: f32[32,64], index: 9, kind: input, shape index: {}]
  %s10 = inlined_call_operand.vmem [shape: f32[1,64], index: 10, kind: input, shape index: {}]
  %s11 = inlined_call_operand.vmem [shape: f32[64,32], index: 11, kind: input, shape index: {}]
  %s12 = inlined_call_operand.vmem [shape: f32[1,32], index: 12, kind: input, shape index: {}]
  %s13 = inlined_call_operand.hbm [shape: f32[2,8,32], index: 13, kind: output, shape index: {}]
  %s14 = sld [smem:[#allocation0]]
  $region89: #{tpu_custom_call.1} parent=0
    _
  %s16 = ssub.s32 1, %s14
  %s17 = scalar_select 0, %s16, %s14
  $region1: #{tpu_custom_call.1} parent=0
    #allocation3 [shape = 'u8[8192]{0}', space=vmem, size = 0x2000, scoped, tag = 'input window, operand 0']
    #allocation4 [shape = 's32[2]{0}', space=sflag, size = 0x8, scoped, tag = 'scoped memory for tpu_custom_call.1']
    #allocation5 [shape = 's32[2]{0}', space=sflag, size = 0x8, scoped, tag = 'scoped memory for tpu_custom_call.1']
    #allocation6 [shape = 'u8[8192]{0}', space=vmem, size = 0x2000, scoped, tag = 'output window, operand 0']
    %18 = vsyncpa [#allocation4], 0
    %s19 = scalar_lea.sflag [#allocation4], 1
    %20 = vsyncpa %s19, 0
    %21 = vsyncpa [#allocation5], 0
    %s22 = scalar_lea.sflag [#allocation5], 1
    %23 = vsyncpa %s22, 0
    loop: start=0, step=1, limit=4
    $region2: #{tpu_custom_call.1} parent=1 // loop_pre_header
      _
    $region3: #{tpu_custom_call.1} parent=1 // loop_header
      %s25 = sphi 0, %s29
      %p26 = scmp.ge.s32.totalorder %s25, 4
      %s35 = sphi 0, %s37
      %s38 = sphi 0, %s35
      %s39 = sphi 0, %s38
      %s55 = sphi 0, %s39
      %s59 = sphi 0, %s59
      %s61 = sphi 0, %s59
      %s62 = sphi 0, %s61
      %s76 = sphi 0, %s62
      %s80 = sphi 0, %s80
      %s82 = sphi 0, %s80
      %s83 = sphi 0, %s82
      %s97 = sphi 0, %s83
      %s101 = sphi 0, %s101
      %s103 = sphi 0, %s101
      %s104 = sphi 0, %s103
      %s118 = sphi 0, %s104
      %s122 = sphi 0, %s122
      %s124 = sphi 0, %s122
      %s125 = sphi 0, %s124
      %s139 = sphi 0, %s125
      %s143 = sphi 0, %s143
      %s145 = sphi 0, %s143
      %s146 = sphi 0, %s145
      %s160 = sphi 0, %s146
      %s164 = sphi 0, %s164
      %s166 = sphi 0, %s164
      %s167 = sphi 0, %s166
      %s181 = sphi 0, %s167
      %s185 = sphi 0, %s185
      %s187 = sphi 0, %s185
      %s188 = sphi 0, %s187
      %s202 = sphi 0, %s188
      %s206 = sphi 0, %s206
      %s208 = sphi 0, %s206
      %s209 = sphi 0, %s208
      %s223 = sphi 0, %s209
      %s227 = sphi 0, %s227
      %s229 = sphi 0, %s227
      %s230 = sphi 0, %s229
      %s244 = sphi 0, %s230
      %s248 = sphi 0, %s248
      %s250 = sphi 0, %s248
      %s251 = sphi 0, %s250
      %s265 = sphi 0, %s251
      %s269 = sphi 0, %s269
      %s271 = sphi 0, %s269
      %s272 = sphi 0, %s271
      %s286 = sphi 0, %s272
      %s290 = sphi 0, %s290
      %s292 = sphi 0, %s290
      %s293 = sphi 0, %s292
      %s307 = sphi 0, %s293
      %s313 = sphi 0, %s315
      %s316 = sphi 0, %s313
      %s317 = sphi 0, %s316
      %s333 = sphi 0, %s317
    $region4: #{tpu_custom_call.1} parent=1 // loop_header_branch
      %28 = sbr.rel (%p26) target = $region8
    $region5: #{tpu_custom_call.1} parent=1 // loop_body
      %s30 = ssub.s32 %s25, 1
      %s31 = ssub.s32 %s25, 2
      %s32 = sadd.s32 %s25, 1
      %s33 = ssub.s32 %s25, %s32
      %p34 = scmp.eq.s32.totalorder %s33, 0
      %s36 = sadd.s32 %s35, 1
      %s37 = scalar_select %p34, %s35, %s36
      %p40 = pneg %p34
      %p41 = scmp.eq.s32.totalorder %s25, 1
      %p42 = por %p40, %p41
      %p43 = scmp.ne.s32.totalorder %s35, %s38
      %p44 = scmp.eq.s32.totalorder %s25, 0
      %p45 = por %p43, %p44
      %p46 = scmp.ne.s32.totalorder %s35, %s38
      %p47 = scmp.eq.s32.totalorder %s30, 1
      %p48 = por %p46, %p47
      %p49 = scmp.ne.s32.totalorder %s38, %s39
      %p50 = scmp.eq.s32.totalorder %s30, 0
      %p51 = por %p49, %p50
      %p52 = scmp.ne.s32.totalorder %s38, %s39
      %p53 = scmp.eq.s32.totalorder %s31, 1
      %p54 = por %p52, %p53
      %p56 = scmp.ne.s32.totalorder %s39, %s55
      %p57 = scmp.eq.s32.totalorder %s31, 0
      %p58 = por %p56, %p57
      %s60 = sadd.s32 %s59, 1
      %p63 = scmp.eq.s32.totalorder %s25, 1
      %p64 = scmp.ne.s32.totalorder %s59, %s61
      %p65 = scmp.eq.s32.totalorder %s25, 0
      %p66 = por %p64, %p65
      %p67 = scmp.ne.s32.totalorder %s59, %s61
      %p68 = scmp.eq.s32.totalorder %s30, 1
      %p69 = por %p67, %p68
      %p70 = scmp.ne.s32.totalorder %s61, %s62
      %p71 = scmp.eq.s32.totalorder %s30, 0
      %p72 = por %p70, %p71
      %p73 = scmp.ne.s32.totalorder %s61, %s62
      %p74 = scmp.eq.s32.totalorder %s31, 1
      %p75 = por %p73, %p74
      %p77 = scmp.ne.s32.totalorder %s62, %s76
      %p78 = scmp.eq.s32.totalorder %s31, 0
      %p79 = por %p77, %p78
      %s81 = sadd.s32 %s80, 1
      %p84 = scmp.eq.s32.totalorder %s25, 1
      %p85 = scmp.ne.s32.totalorder %s80, %s82
      %p86 = scmp.eq.s32.totalorder %s25, 0
      %p87 = por %p85, %p86
      %p88 = scmp.ne.s32.totalorder %s80, %s82
      %p89 = scmp.eq.s32.totalorder %s30, 1
      %p90 = por %p88, %p89
      %p91 = scmp.ne.s32.totalorder %s82, %s83
      %p92 = scmp.eq.s32.totalorder %s30, 0
      %p93 = por %p91, %p92
      %p94 = scmp.ne.s32.totalorder %s82, %s83
      %p95 = scmp.eq.s32.totalorder %s31, 1
      %p96 = por %p94, %p95
      %p98 = scmp.ne.s32.totalorder %s83, %s97
      %p99 = scmp.eq.s32.totalorder %s31, 0
      %p100 = por %p98, %p99
      %s102 = sadd.s32 %s101, 1
      %p105 = scmp.eq.s32.totalorder %s25, 1
      %p106 = scmp.ne.s32.totalorder %s101, %s103
      %p107 = scmp.eq.s32.totalorder %s25, 0
      %p108 = por %p106, %p107
      %p109 = scmp.ne.s32.totalorder %s101, %s103
      %p110 = scmp.eq.s32.totalorder %s30, 1
      %p111 = por %p109, %p110
      %p112 = scmp.ne.s32.totalorder %s103, %s104
      %p113 = scmp.eq.s32.totalorder %s30, 0
      %p114 = por %p112, %p113
      %p115 = scmp.ne.s32.totalorder %s103, %s104
      %p116 = scmp.eq.s32.totalorder %s31, 1
      %p117 = por %p115, %p116
      %p119 = scmp.ne.s32.totalorder %s104, %s118
      %p120 = scmp.eq.s32.totalorder %s31, 0
      %p121 = por %p119, %p120
      %s123 = sadd.s32 %s122, 1
      %p126 = scmp.eq.s32.totalorder %s25, 1
      %p127 = scmp.ne.s32.totalorder %s122, %s124
      %p128 = scmp.eq.s32.totalorder %s25, 0
      %p129 = por %p127, %p128
      %p130 = scmp.ne.s32.totalorder %s122, %s124
      %p131 = scmp.eq.s32.totalorder %s30, 1
      %p132 = por %p130, %p131
      %p133 = scmp.ne.s32.totalorder %s124, %s125
      %p134 = scmp.eq.s32.totalorder %s30, 0
      %p135 = por %p133, %p134
      %p136 = scmp.ne.s32.totalorder %s124, %s125
      %p137 = scmp.eq.s32.totalorder %s31, 1
      %p138 = por %p136, %p137
      %p140 = scmp.ne.s32.totalorder %s125, %s139
      %p141 = scmp.eq.s32.totalorder %s31, 0
      %p142 = por %p140, %p141
      %s144 = sadd.s32 %s143, 1
      %p147 = scmp.eq.s32.totalorder %s25, 1
      %p148 = scmp.ne.s32.totalorder %s143, %s145
      %p149 = scmp.eq.s32.totalorder %s25, 0
      %p150 = por %p148, %p149
      %p151 = scmp.ne.s32.totalorder %s143, %s145
      %p152 = scmp.eq.s32.totalorder %s30, 1
      %p153 = por %p151, %p152
      %p154 = scmp.ne.s32.totalorder %s145, %s146
      %p155 = scmp.eq.s32.totalorder %s30, 0
      %p156 = por %p154, %p155
      %p157 = scmp.ne.s32.totalorder %s145, %s146
      %p158 = scmp.eq.s32.totalorder %s31, 1
      %p159 = por %p157, %p158
      %p161 = scmp.ne.s32.totalorder %s146, %s160
      %p162 = scmp.eq.s32.totalorder %s31, 0
      %p163 = por %p161, %p162
      %s165 = sadd.s32 %s164, 1
      %p168 = scmp.eq.s32.totalorder %s25, 1
      %p169 = scmp.ne.s32.totalorder %s164, %s166
      %p170 = scmp.eq.s32.totalorder %s25, 0
      %p171 = por %p169, %p170
      %p172 = scmp.ne.s32.totalorder %s164, %s166
      %p173 = scmp.eq.s32.totalorder %s30, 1
      %p174 = por %p172, %p173
      %p175 = scmp.ne.s32.totalorder %s166, %s167
      %p176 = scmp.eq.s32.totalorder %s30, 0
      %p177 = por %p175, %p176
      %p178 = scmp.ne.s32.totalorder %s166, %s167
      %p179 = scmp.eq.s32.totalorder %s31, 1
      %p180 = por %p178, %p179
      %p182 = scmp.ne.s32.totalorder %s167, %s181
      %p183 = scmp.eq.s32.totalorder %s31, 0
      %p184 = por %p182, %p183
      %s186 = sadd.s32 %s185, 1
      %p189 = scmp.eq.s32.totalorder %s25, 1
      %p190 = scmp.ne.s32.totalorder %s185, %s187
      %p191 = scmp.eq.s32.totalorder %s25, 0
      %p192 = por %p190, %p191
      %p193 = scmp.ne.s32.totalorder %s185, %s187
      %p194 = scmp.eq.s32.totalorder %s30, 1
      %p195 = por %p193, %p194
      %p196 = scmp.ne.s32.totalorder %s187, %s188
      %p197 = scmp.eq.s32.totalorder %s30, 0
      %p198 = por %p196, %p197
      %p199 = scmp.ne.s32.totalorder %s187, %s188
      %p200 = scmp.eq.s32.totalorder %s31, 1
      %p201 = por %p199, %p200
      %p203 = scmp.ne.s32.totalorder %s188, %s202
      %p204 = scmp.eq.s32.totalorder %s31, 0
      %p205 = por %p203, %p204
      %s207 = sadd.s32 %s206, 1
      %p210 = scmp.eq.s32.totalorder %s25, 1
      %p211 = scmp.ne.s32.totalorder %s206, %s208
      %p212 = scmp.eq.s32.totalorder %s25, 0
      %p213 = por %p211, %p212
      %p214 = scmp.ne.s32.totalorder %s206, %s208
      %p215 = scmp.eq.s32.totalorder %s30, 1
      %p216 = por %p214, %p215
      %p217 = scmp.ne.s32.totalorder %s208, %s209
      %p218 = scmp.eq.s32.totalorder %s30, 0
      %p219 = por %p217, %p218
      %p220 = scmp.ne.s32.totalorder %s208, %s209
      %p221 = scmp.eq.s32.totalorder %s31, 1
      %p222 = por %p220, %p221
      %p224 = scmp.ne.s32.totalorder %s209, %s223
      %p225 = scmp.eq.s32.totalorder %s31, 0
      %p226 = por %p224, %p225
      %s228 = sadd.s32 %s227, 1
      %p231 = scmp.eq.s32.totalorder %s25, 1
      %p232 = scmp.ne.s32.totalorder %s227, %s229
      %p233 = scmp.eq.s32.totalorder %s25, 0
      %p234 = por %p232, %p233
      %p235 = scmp.ne.s32.totalorder %s227, %s229
      %p236 = scmp.eq.s32.totalorder %s30, 1
      %p237 = por %p235, %p236
      %p238 = scmp.ne.s32.totalorder %s229, %s230
      %p239 = scmp.eq.s32.totalorder %s30, 0
      %p240 = por %p238, %p239
      %p241 = scmp.ne.s32.totalorder %s229, %s230
      %p242 = scmp.eq.s32.totalorder %s31, 1
      %p243 = por %p241, %p242
      %p245 = scmp.ne.s32.totalorder %s230, %s244
      %p246 = scmp.eq.s32.totalorder %s31, 0
      %p247 = por %p245, %p246
      %s249 = sadd.s32 %s248, 1
      %p252 = scmp.eq.s32.totalorder %s25, 1
      %p253 = scmp.ne.s32.totalorder %s248, %s250
      %p254 = scmp.eq.s32.totalorder %s25, 0
      %p255 = por %p253, %p254
      %p256 = scmp.ne.s32.totalorder %s248, %s250
      %p257 = scmp.eq.s32.totalorder %s30, 1
      %p258 = por %p256, %p257
      %p259 = scmp.ne.s32.totalorder %s250, %s251
      %p260 = scmp.eq.s32.totalorder %s30, 0
      %p261 = por %p259, %p260
      %p262 = scmp.ne.s32.totalorder %s250, %s251
      %p263 = scmp.eq.s32.totalorder %s31, 1
      %p264 = por %p262, %p263
      %p266 = scmp.ne.s32.totalorder %s251, %s265
      %p267 = scmp.eq.s32.totalorder %s31, 0
      %p268 = por %p266, %p267
      %s270 = sadd.s32 %s269, 1
      %p273 = scmp.eq.s32.totalorder %s25, 1
      %p274 = scmp.ne.s32.totalorder %s269, %s271
      %p275 = scmp.eq.s32.totalorder %s25, 0
      %p276 = por %p274, %p275
      %p277 = scmp.ne.s32.totalorder %s269, %s271
      %p278 = scmp.eq.s32.totalorder %s30, 1
      %p279 = por %p277, %p278
      %p280 = scmp.ne.s32.totalorder %s271, %s272
      %p281 = scmp.eq.s32.totalorder %s30, 0
      %p282 = por %p280, %p281
      %p283 = scmp.ne.s32.totalorder %s271, %s272
      %p284 = scmp.eq.s32.totalorder %s31, 1
      %p285 = por %p283, %p284
      %p287 = scmp.ne.s32.totalorder %s272, %s286
      %p288 = scmp.eq.s32.totalorder %s31, 0
      %p289 = por %p287, %p288
      %s291 = sadd.s32 %s290, 1
      %p294 = scmp.eq.s32.totalorder %s25, 1
      %p295 = scmp.ne.s32.totalorder %s290, %s292
      %p296 = scmp.eq.s32.totalorder %s25, 0
      %p297 = por %p295, %p296
      %p298 = scmp.ne.s32.totalorder %s290, %s292
      %p299 = scmp.eq.s32.totalorder %s30, 1
      %p300 = por %p298, %p299
      %p301 = scmp.ne.s32.totalorder %s292, %s293
      %p302 = scmp.eq.s32.totalorder %s30, 0
      %p303 = por %p301, %p302
      %p304 = scmp.ne.s32.totalorder %s292, %s293
      %p305 = scmp.eq.s32.totalorder %s31, 1
      %p306 = por %p304, %p305
      %p308 = scmp.ne.s32.totalorder %s293, %s307
      %p309 = scmp.eq.s32.totalorder %s31, 0
      %p310 = por %p308, %p309
      %s311 = ssub.s32 %s25, %s32
      %p312 = scmp.eq.s32.totalorder %s311, 0
      %s314 = sadd.s32 %s313, 1
      %s315 = scalar_select %p312, %s313, %s314
      %p318 = pneg %p312
      %p319 = scmp.eq.s32.totalorder %s25, 1
      %p320 = por %p318, %p319
      %p321 = scmp.ne.s32.totalorder %s313, %s316
      %p322 = scmp.eq.s32.totalorder %s25, 0
      %p323 = por %p321, %p322
      %p324 = scmp.ne.s32.totalorder %s313, %s316
      %p325 = scmp.eq.s32.totalorder %s30, 1
      %p326 = por %p324, %p325
      %p327 = scmp.ne.s32.totalorder %s316, %s317
      %p328 = scmp.eq.s32.totalorder %s30, 0
      %p329 = por %p327, %p328
      %p330 = scmp.ne.s32.totalorder %s316, %s317
      %p331 = scmp.eq.s32.totalorder %s31, 1
      %p332 = por %p330, %p331
      %p334 = scmp.ne.s32.totalorder %s317, %s333
      %p335 = scmp.eq.s32.totalorder %s31, 0
      %p336 = por %p334, %p335
      %p337 = scmp.le.s32.totalorder 1, %s25
      %p338 = scmp.lt.s32.totalorder %s25, 3
      %p339 = pnand %p337, %p338
      %p340 = pneg %p339
      // Predicated region
      $region9: #{tpu_custom_call.1} parent=5 // pred_check
        _
      $region10: #{tpu_custom_call.1} parent=5 // pred_check_branch
        %342 = sbr.rel (%p339) target = $region12
      $region11: #{tpu_custom_call.1} parent=5 // pred_region
        %s343 = ssub.s32 %s25, 1
        // Predicated region
        $region13: #{tpu_custom_call.1} parent=11 // pred_check
          %p344 = pneg %p72
        $region14: #{tpu_custom_call.1} parent=11 // pred_check_branch
          %346 = sbr.rel (%p344) target = $region16
        $region15: #{tpu_custom_call.1} parent=11 // pred_region
          _
        $region16: #{tpu_custom_call.1} parent=11 // pred_fallthru
          _
        // Predicated region
        $region17: #{tpu_custom_call.1} parent=11 // pred_check
          %p347 = pneg %p93
        $region18: #{tpu_custom_call.1} parent=11 // pred_check_branch
          %349 = sbr.rel (%p347) target = $region20
        $region19: #{tpu_custom_call.1} parent=11 // pred_region
          _
        $region20: #{tpu_custom_call.1} parent=11 // pred_fallthru
          _
        // Predicated region
        $region21: #{tpu_custom_call.1} parent=11 // pred_check
          %p350 = pneg %p114
        $region22: #{tpu_custom_call.1} parent=11 // pred_check_branch
          %352 = sbr.rel (%p350) target = $region24
        $region23: #{tpu_custom_call.1} parent=11 // pred_region
          _
        $region24: #{tpu_custom_call.1} parent=11 // pred_fallthru
          _
        // Predicated region
        $region25: #{tpu_custom_call.1} parent=11 // pred_check
          %p353 = pneg %p135
        $region26: #{tpu_custom_call.1} parent=11 // pred_check_branch
          %355 = sbr.rel (%p353) target = $region28
        $region27: #{tpu_custom_call.1} parent=11 // pred_region
          _
        $region28: #{tpu_custom_call.1} parent=11 // pred_fallthru
          _
        // Predicated region
        $region29: #{tpu_custom_call.1} parent=11 // pred_check
          %p356 = pneg %p156
        $region30: #{tpu_custom_call.1} parent=11 // pred_check_branch
          %358 = sbr.rel (%p356) target = $region32
        $region31: #{tpu_custom_call.1} parent=11 // pred_region
          _
        $region32: #{tpu_custom_call.1} parent=11 // pred_fallthru
          _
        // Predicated region
        $region33: #{tpu_custom_call.1} parent=11 // pred_check
          %p359 = pneg %p177
        $region34: #{tpu_custom_call.1} parent=11 // pred_check_branch
          %361 = sbr.rel (%p359) target = $region36
        $region35: #{tpu_custom_call.1} parent=11 // pred_region
          _
        $region36: #{tpu_custom_call.1} parent=11 // pred_fallthru
          _
        // Predicated region
        $region37: #{tpu_custom_call.1} parent=11 // pred_check
          %p362 = pneg %p198
        $region38: #{tpu_custom_call.1} parent=11 // pred_check_branch
          %364 = sbr.rel (%p362) target = $region40
        $region39: #{tpu_custom_call.1} parent=11 // pred_region
          _
        $region40: #{tpu_custom_call.1} parent=11 // pred_fallthru
          _
        // Predicated region
        $region41: #{tpu_custom_call.1} parent=11 // pred_check
          %p365 = pneg %p219
        $region42: #{tpu_custom_call.1} parent=11 // pred_check_branch
          %367 = sbr.rel (%p365) target = $region44
        $region43: #{tpu_custom_call.1} parent=11 // pred_region
          _
        $region44: #{tpu_custom_call.1} parent=11 // pred_fallthru
          _
        // Predicated region
        $region45: #{tpu_custom_call.1} parent=11 // pred_check
          %p368 = pneg %p240
        $region46: #{tpu_custom_call.1} parent=11 // pred_check_branch
          %370 = sbr.rel (%p368) target = $region48
        $region47: #{tpu_custom_call.1} parent=11 // pred_region
          _
        $region48: #{tpu_custom_call.1} parent=11 // pred_fallthru
          _
        // Predicated region
        $region49: #{tpu_custom_call.1} parent=11 // pred_check
          %p371 = pneg %p261
        $region50: #{tpu_custom_call.1} parent=11 // pred_check_branch
          %373 = sbr.rel (%p371) target = $region52
        $region51: #{tpu_custom_call.1} parent=11 // pred_region
          _
        $region52: #{tpu_custom_call.1} parent=11 // pred_fallthru
          _
        // Predicated region
        $region53: #{tpu_custom_call.1} parent=11 // pred_check
          %p374 = pneg %p282
        $region54: #{tpu_custom_call.1} parent=11 // pred_check_branch
          %376 = sbr.rel (%p374) target = $region56
        $region55: #{tpu_custom_call.1} parent=11 // pred_region
          _
        $region56: #{tpu_custom_call.1} parent=11 // pred_fallthru
          _
        // Predicated region
        $region57: #{tpu_custom_call.1} parent=11 // pred_check
          %p377 = pneg %p303
        $region58: #{tpu_custom_call.1} parent=11 // pred_check_branch
          %379 = sbr.rel (%p377) target = $region60
        $region59: #{tpu_custom_call.1} parent=11 // pred_region
          _
        $region60: #{tpu_custom_call.1} parent=11 // pred_fallthru
          _
      $region12: #{tpu_custom_call.1} parent=5 // pred_fallthru
        _
      %p380 = scmp.lt.s32.totalorder %s25, 2
      // Predicated region
      $region61: #{tpu_custom_call.1} parent=5 // pred_check
        %p381 = pneg %p380
      $region62: #{tpu_custom_call.1} parent=5 // pred_check_branch
        %383 = sbr.rel (%p381) target = $region64
      $region63: #{tpu_custom_call.1} parent=5 // pred_region
        // Predicated region
        $region65: #{tpu_custom_call.1} parent=63 // pred_check
          %p384 = pneg %p45
        $region66: #{tpu_custom_call.1} parent=63 // pred_check_branch
          %386 = sbr.rel (%p384) target = $region68
        $region67: #{tpu_custom_call.1} parent=63 // pred_region
          %s387 = sand.u32 %s35, 1
          %s388 = scalar_lea.sflag [#allocation4], %s387
          %s389 = sand.u32 %s35, 1
          %s390 = smul.addr %s389, 8
          %s391 = scalar_lea.vmem [#allocation3], %s390
          %s393 = ssub.s32 128, 128
          %394 = vsyncadd %s388, %s393
          %s395 = smul.addr %s25, 128
          %s396 = scalar_lea.hbm %s0, %s395
          %s398 = sshll.u32 %s391, 4
          %s399 = int_to_ptr.vmem [resolvable:$true] %s398
          %401 = dma.hbm_to_vmem [thread:$0]  %s396, 128, %s399, %s388
        $region68: #{tpu_custom_call.1} parent=63 // pred_fallthru
          _
      $region64: #{tpu_custom_call.1} parent=5 // pred_fallthru
        _
      %p402 = scmp.le.s32.totalorder 1, %s25
      %p403 = scmp.lt.s32.totalorder %s25, 3
      %p404 = pnand %p402, %p403
      %p405 = pneg %p404
      // Predicated region
      $region69: #{tpu_custom_call.1} parent=5 // pred_check
        _
      $region70: #{tpu_custom_call.1} parent=5 // pred_check_branch
        %407 = sbr.rel (%p404) target = $region72
      $region71: #{tpu_custom_call.1} parent=5 // pred_region
        %s408 = ssub.s32 %s25, 1
        %s409 = sand.u32 %s38, 1
        %s410 = scalar_lea.sflag [#allocation4], %s409
        %s411 = sand.u32 %s38, 1
        %s412 = smul.addr %s411, 8
        %s413 = scalar_lea.vmem [#allocation3], %s412
        // Predicated region
        $region73: #{tpu_custom_call.1} parent=71 // pred_check
          %p414 = pneg %p51
        $region74: #{tpu_custom_call.1} parent=71 // pred_check_branch
          %416 = sbr.rel (%p414) target = $region76
        $region75: #{tpu_custom_call.1} parent=71 // pred_region
          %417 = dma.done %s410, 128
        $region76: #{tpu_custom_call.1} parent=71 // pred_fallthru
          _
        %s418 = sand.u32 %s38, 1
        %s419 = scalar_lea.sflag [#allocation4], %s418
        %s420 = sand.u32 %s38, 1
        %s421 = smul.addr %s420, 8
        %s422 = scalar_lea.vmem [#allocation3], %s421
        %p423 = pneg %p51
        %p424 = pneg %p48
        %p425 = pneg %p72
        %p426 = pneg %p69
        %p427 = pneg %p93
        %p428 = pneg %p90
        %p429 = pneg %p114
        %p430 = pneg %p111
        %p431 = pneg %p135
        %p432 = pneg %p132
        %p433 = pneg %p156
        %p434 = pneg %p153
        %p435 = pneg %p177
        %p436 = pneg %p174
        %p437 = pneg %p198
        %p438 = pneg %p195
        %p439 = pneg %p219
        %p440 = pneg %p216
        %p441 = pneg %p240
        %p442 = pneg %p237
        %p443 = pneg %p261
        %p444 = pneg %p258
        %p445 = pneg %p282
        %p446 = pneg %p279
        %p447 = pneg %p303
        %p448 = pneg %p300
        %p449 = pneg %p329
        %p450 = pneg %p326
        %s451 = sand.u32 %s316, 1
        %s452 = scalar_lea.sflag [#allocation5], %s451
        %s453 = sand.u32 %s316, 1
        %s454 = smul.addr %s453, 8
        %s455 = scalar_lea.vmem [#allocation6], %s454
        %v456 = vld [vmem:[%s413] sm:$0xff]
        %v457 = vld [vmem:[%s1] sm:$0x1]
        %v458 = vld [vmem:[%s2] sm:$0x1]
        %vm459 = vcmask 261120
        %v460 = vsel %vm459, %v456, 0.0
        %461 = vadd.xlane.f32.xlu0 %v460
        %v462 = vpop.xlane.xlu0 %461
        %v463 = vrcp.pop 32.0
        %v464 = vmul.f32 %v462, %v463
        %v465 = vsub.f32 %v456, %v464
        %v466 = vmul.f32 %v465, %v465
        %v467 = vsel %vm459, %v466, 0.0
        %468 = vadd.xlane.f32.xlu0 %v467
        %v469 = vpop.xlane.xlu0 %468
        %v470 = vmul.f32 %v469, %v463
        %v471 = vadd.f32 %v470, 1e-05
        %v472 = vrsqrt.pop %v471
        %v473 = vmul.f32 %v465, %v472
        %v475 = vlaneseq
        %v476 = vshrl.u32 %v475, 7
        %v477 = vsub.s32 0, %v476
        %v478 = vrot.slane %v457, %v477
        %v480 = vmul.f32 %v473, %v478
        %v482 = vlaneseq
        %v483 = vshrl.u32 %v482, 7
        %v484 = vsub.s32 0, %v483
        %v485 = vrot.slane %v458, %v484
        %v487 = vadd.f32 %v480, %v485
        %v488 = vld [vmem:[%s3] sm:$0xff]
        %v489 = vld [vmem:[%s3 + $0x8] sm:$0xff]
        %v490 = vld [vmem:[%s3 + $0x10] sm:$0xff]
        %v491 = vld [vmem:[%s3 + $0x18] sm:$0xff]
        %v492 = vld [vmem:[%s4] sm:$0x1]
        %v494 = vlaneseq
        %v495 = vshrl.u32 %v494, 7
        %v496 = vsub.s32 0, %v495
        %v497 = vrot.slane %v492, %v496
        %v500 = vsel %vm459, %v487, 0
        %502 = vmatprep.subr.mxu0 0.0
        %503 = vmatpush1.msra.mxu0 %v488
        %504 = vmatprep.subr.mxu0 0.0
        %505 = vmatpush1.msra.mxu0 %v489
        %506 = vmatprep.subr.mxu0 0.0
        %507 = vmatpush1.msra.mxu0 %v490
        %508 = vmatprep.subr.mxu0 0.0
        %509 = vmatpush1.msra.mxu0 %v491
        %510 = vmatprep.subr.mxu0 0.0
        %511 = vmatpush1.msra.mxu0 0.0
        %512 = vmatprep.subr.mxu0 0.0
        %513 = vmatpush1.msra.mxu0 0.0
        %514 = vmatprep.subr.mxu0 0.0
        %515 = vmatpush1.msra.mxu0 0.0
        %516 = vmatprep.subr.mxu0 0.0
        %517 = vmatpush1.msra.mxu0 0.0
        %518 = vmatprep.subr.mxu0 0.0
        %519 = vmatpush1.msra.mxu0 0.0
        %520 = vmatprep.subr.mxu0 0.0
        %521 = vmatpush1.msra.mxu0 0.0
        %522 = vmatprep.subr.mxu0 0.0
        %523 = vmatpush1.msra.mxu0 0.0
        %524 = vmatprep.subr.mxu0 0.0
        %525 = vmatpush1.msra.mxu0 0.0
        %526 = vmatprep.subr.mxu0 0.0
        %527 = vmatpush1.msra.mxu0 0.0
        %528 = vmatprep.subr.mxu0 0.0
        %529 = vmatpush1.msra.mxu0 0.0
        %530 = vmatprep.subr.mxu0 0.0
        %531 = vmatpush1.msra.mxu0 0.0
        %532 = vmatprep.subr.mxu0 0.0
        %533 = vmatpush1.msra.mxu0 0.0
        %534 = vmatprep.subr.mxu0 0.0
        %535 = vmatpush1.msra.mxu0 0.0
        %536 = vmatprep.subr.mxu0 0.0
        %537 = vmatpush1.msra.mxu0 0.0
        %538 = vmatprep.subr.mxu0 0.0
        %539 = vmatpush1.msra.mxu0 0.0
        %540 = vmatprep.subr.mxu0 0.0
        %541 = vmatpush1.msra.mxu0 0.0
        %542 = vmatprep.subr.mxu0 0.0
        %543 = vmatpush1.msra.mxu0 0.0
        %544 = vmatprep.subr.mxu0 0.0
        %545 = vmatpush1.msra.mxu0 0.0
        %546 = vmatprep.subr.mxu0 0.0
        %547 = vmatpush1.msra.mxu0 0.0
        %548 = vmatprep.subr.mxu0 0.0
        %549 = vmatpush1.msra.mxu0 0.0
        %550 = vmatprep.subr.mxu0 0.0
        %551 = vmatpush1.msra.mxu0 0.0
        %552 = vmatprep.subr.mxu0 0.0
        %553 = vmatpush1.msra.mxu0 0.0
        %554 = vmatprep.subr.mxu0 0.0
        %555 = vmatpush1.msra.mxu0 0.0
        %556 = vmatprep.subr.mxu0 0.0
        %557 = vmatpush1.msra.mxu0 0.0
        %558 = vmatprep.subr.mxu0 0.0
        %559 = vmatpush1.msra.mxu0 0.0
        %560 = vmatprep.subr.mxu0 0.0
        %561 = vmatpush1.msra.mxu0 0.0
        %562 = vmatprep.subr.mxu0 0.0
        %563 = vmatpush1.msra.mxu0 0.0
        %564 = vmatprep.subr.mxu0 0.0
        %565 = vmatpush1.msra.mxu0 0.0
        %566 = vmatprep.mubr.f32.mxu0 0.0
        %567 = vmatmul.mubr.f32.gmra.mrb[0].mxu0 %v500
        %v568 = vpop.f32.mrb[0].mxu0
        %v569 = vadd.f32 %v497, %v568
        %v570 = vpop.f32.mrb[0].mxu0
        %571 = vdwg.mxu0
        %v572 = vmul.f32 %v569, 0.35355338
        %v573 = vlaneseq
        %v574 = vshrl.u32 %v573, 7
        %v575 = vlaneseq
        %v576 = vand.u32 %v575, 127
        %vm577 = vcmp.le.s32.totalorder %v576, %v574
        %v578 = vsel %vm577, 0.0, -1e+30
        %580 = vrot.lane.b32.xlu0 %v569, 96
        %v581 = vpop.permute.xlu0 %580
        %vm582 = vcmask 64512
        %v584 = vsel %vm582, %v572, 0
        %v586 = vsel %vm582, %v581, 0
        %588 = vmatprep.subr.mxu0 0.0
        %589 = vmatpush1.xpose.msra.mxu0 %v586
        %590 = vmatprep.subr.mxu0 0.0
        %591 = vmatpush1.xpose.msra.mxu0 0.0
        %592 = vmatprep.subr.mxu0 0.0
        %593 = vmatpush1.xpose.msra.mxu0 0.0
        %594 = vmatprep.subr.mxu0 0.0
        %595 = vmatpush1.xpose.msra.mxu0 0.0
        %596 = vmatprep.subr.mxu0 0.0
        %597 = vmatpush1.xpose.msra.mxu0 0.0
        %598 = vmatprep.subr.mxu0 0.0
        %599 = vmatpush1.xpose.msra.mxu0 0.0
        %600 = vmatprep.subr.mxu0 0.0
        %601 = vmatpush1.xpose.msra.mxu0 0.0
        %602 = vmatprep.subr.mxu0 0.0
        %603 = vmatpush1.xpose.msra.mxu0 0.0
        %604 = vmatprep.subr.mxu0 0.0
        %605 = vmatpush1.xpose.msra.mxu0 0.0
        %606 = vmatprep.subr.mxu0 0.0
        %607 = vmatpush1.xpose.msra.mxu0 0.0
        %608 = vmatprep.subr.mxu0 0.0
        %609 = vmatpush1.xpose.msra.mxu0 0.0
        %610 = vmatprep.subr.mxu0 0.0
        %611 = vmatpush1.xpose.msra.mxu0 0.0
        %612 = vmatprep.subr.mxu0 0.0
        %613 = vmatpush1.xpose.msra.mxu0 0.0
        %614 = vmatprep.subr.mxu0 0.0
        %615 = vmatpush1.xpose.msra.mxu0 0.0
        %616 = vmatprep.subr.mxu0 0.0
        %617 = vmatpush1.xpose.msra.mxu0 0.0
        %618 = vmatprep.subr.mxu0 0.0
        %619 = vmatpush1.xpose.msra.mxu0 0.0
        %620 = vmatprep.subr.mxu0 0.0
        %621 = vmatpush1.xpose.msra.mxu0 0.0
        %622 = vmatprep.subr.mxu0 0.0
        %623 = vmatpush1.xpose.msra.mxu0 0.0
        %624 = vmatprep.subr.mxu0 0.0
        %625 = vmatpush1.xpose.msra.mxu0 0.0
        %626 = vmatprep.subr.mxu0 0.0
        %627 = vmatpush1.xpose.msra.mxu0 0.0
        %628 = vmatprep.subr.mxu0 0.0
        %629 = vmatpush1.xpose.msra.mxu0 0.0
        %630 = vmatprep.subr.mxu0 0.0
        %631 = vmatpush1.xpose.msra.mxu0 0.0
        %632 = vmatprep.subr.mxu0 0.0
        %633 = vmatpush1.xpose.msra.mxu0 0.0
        %634 = vmatprep.subr.mxu0 0.0
        %635 = vmatpush1.xpose.msra.mxu0 0.0
        %636 = vmatprep.subr.mxu0 0.0
        %637 = vmatpush1.xpose.msra.mxu0 0.0
        %638 = vmatprep.subr.mxu0 0.0
        %639 = vmatpush1.xpose.msra.mxu0 0.0
        %640 = vmatprep.subr.mxu0 0.0
        %641 = vmatpush1.xpose.msra.mxu0 0.0
        %642 = vmatprep.subr.mxu0 0.0
        %643 = vmatpush1.xpose.msra.mxu0 0.0
        %644 = vmatprep.subr.mxu0 0.0
        %645 = vmatpush1.xpose.msra.mxu0 0.0
        %646 = vmatprep.subr.mxu0 0.0
        %647 = vmatpush1.xpose.msra.mxu0 0.0
        %648 = vmatprep.subr.mxu0 0.0
        %649 = vmatpush1.xpose.msra.mxu0 0.0
        %650 = vmatprep.subr.mxu0 0.0
        %651 = vmatpush1.xpose.msra.mxu0 0.0
        %652 = vmatprep.mubr.f32.mxu0 0.0
        %653 = vmatmul.mubr.f32.gmra.mrb[0].mxu0 %v584
        %v654 = vpop.f32.mrb[0].mxu0
        %v655 = vadd.f32 %v578, %v654
        %v656 = vpop.f32.mrb[0].mxu0
        %657 = vdwg.mxu0
        %v658 = vsel %vm582, %v655, -inf
        %659 = vmax.xlane.f32.xlu0 %v658
        %v660 = vpop.xlane.xlu0 %659
        %v661 = vsub.f32 %v655, %v660
        %v662 = vmul.f32 %v661, 1.442695
        %v663 = vpow.pop %v662
        %v664 = vsel %vm582, %v663, 0.0
        %665 = vadd.xlane.f32.xlu0 %v664
        %v666 = vpop.xlane.xlu0 %665
        %v667 = vrcp.pop %v666
        %v668 = vmul.f32 %v663, %v667
        %669 = vrot.lane.b32.xlu0 %v569, 64
        %v670 = vpop.permute.xlu0 %669
        %v673 = vsel %vm582, %v668, 0
        %675 = vmatprep.subr.mxu0 0.0
        %676 = vmatpush1.msra.mxu0 %v670
        %677 = vmatprep.subr.mxu0 0.0
        %678 = vmatpush1.msra.mxu0 0.0
        %679 = vmatprep.subr.mxu0 0.0
        %680 = vmatpush1.msra.mxu0 0.0
        %681 = vmatprep.subr.mxu0 0.0
        %682 = vmatpush1.msra.mxu0 0.0
        %683 = vmatprep.subr.mxu0 0.0
        %684 = vmatpush1.msra.mxu0 0.0
        %685 = vmatprep.subr.mxu0 0.0
        %686 = vmatpush1.msra.mxu0 0.0
        %687 = vmatprep.subr.mxu0 0.0
        %688 = vmatpush1.msra.mxu0 0.0
        %689 = vmatprep.subr.mxu0 0.0
        %690 = vmatpush1.msra.mxu0 0.0
        %691 = vmatprep.subr.mxu0 0.0
        %692 = vmatpush1.msra.mxu0 0.0
        %693 = vmatprep.subr.mxu0 0.0
        %694 = vmatpush1.msra.mxu0 0.0
        %695 = vmatprep.subr.mxu0 0.0
        %696 = vmatpush1.msra.mxu0 0.0
        %697 = vmatprep.subr.mxu0 0.0
        %698 = vmatpush1.msra.mxu0 0.0
        %699 = vmatprep.subr.mxu0 0.0
        %700 = vmatpush1.msra.mxu0 0.0
        %701 = vmatprep.subr.mxu0 0.0
        %702 = vmatpush1.msra.mxu0 0.0
        %703 = vmatprep.subr.mxu0 0.0
        %704 = vmatpush1.msra.mxu0 0.0
        %705 = vmatprep.subr.mxu0 0.0
        %706 = vmatpush1.msra.mxu0 0.0
        %707 = vmatprep.subr.mxu0 0.0
        %708 = vmatpush1.msra.mxu0 0.0
        %709 = vmatprep.subr.mxu0 0.0
        %710 = vmatpush1.msra.mxu0 0.0
        %711 = vmatprep.subr.mxu0 0.0
        %712 = vmatpush1.msra.mxu0 0.0
        %713 = vmatprep.subr.mxu0 0.0
        %714 = vmatpush1.msra.mxu0 0.0
        %715 = vmatprep.subr.mxu0 0.0
        %716 = vmatpush1.msra.mxu0 0.0
        %717 = vmatprep.subr.mxu0 0.0
        %718 = vmatpush1.msra.mxu0 0.0
        %719 = vmatprep.subr.mxu0 0.0
        %720 = vmatpush1.msra.mxu0 0.0
        %721 = vmatprep.subr.mxu0 0.0
        %722 = vmatpush1.msra.mxu0 0.0
        %723 = vmatprep.subr.mxu0 0.0
        %724 = vmatpush1.msra.mxu0 0.0
        %725 = vmatprep.subr.mxu0 0.0
        %726 = vmatpush1.msra.mxu0 0.0
        %727 = vmatprep.subr.mxu0 0.0
        %728 = vmatpush1.msra.mxu0 0.0
        %729 = vmatprep.subr.mxu0 0.0
        %730 = vmatpush1.msra.mxu0 0.0
        %731 = vmatprep.subr.mxu0 0.0
        %732 = vmatpush1.msra.mxu0 0.0
        %733 = vmatprep.subr.mxu0 0.0
        %734 = vmatpush1.msra.mxu0 0.0
        %735 = vmatprep.subr.mxu0 0.0
        %736 = vmatpush1.msra.mxu0 0.0
        %737 = vmatprep.subr.mxu0 0.0
        %738 = vmatpush1.msra.mxu0 0.0
        %739 = vmatprep.mubr.f32.mxu0 0.0
        %740 = vmatmul.mubr.f32.gmra.mrb[0].mxu0 %v673
        %v741 = vpop.f32.mrb[0].mxu0
        %v742 = vadd.f32 0.0, %v741
        %v743 = vpop.f32.mrb[0].mxu0
        %744 = vdwg.mxu0
        %745 = vst.msk [vmem:[#allocation2] sm:$0xff] %vm582, %v742
        %746 = vrot.lane.b32.xlu0 %v572, 120
        %v747 = vpop.permute.xlu0 %746
        %748 = vrot.lane.b32.xlu0 %v569, 88
        %v749 = vpop.permute.xlu0 %748
        %v750 = vsel %vm582, %v747, 0
        %v752 = vsel %vm582, %v749, 0
        %754 = vmatprep.subr.mxu0 0.0
        %755 = vmatpush1.xpose.msra.mxu0 %v752
        %756 = vmatprep.subr.mxu0 0.0
        %757 = vmatpush1.xpose.msra.mxu0 0.0
        %758 = vmatprep.subr.mxu0 0.0
        %759 = vmatpush1.xpose.msra.mxu0 0.0
        %760 = vmatprep.subr.mxu0 0.0
        %761 = vmatpush1.xpose.msra.mxu0 0.0
        %762 = vmatprep.subr.mxu0 0.0
        %763 = vmatpush1.xpose.msra.mxu0 0.0
        %764 = vmatprep.subr.mxu0 0.0
        %765 = vmatpush1.xpose.msra.mxu0 0.0
        %766 = vmatprep.subr.mxu0 0.0
        %767 = vmatpush1.xpose.msra.mxu0 0.0
        %768 = vmatprep.subr.mxu0 0.0
        %769 = vmatpush1.xpose.msra.mxu0 0.0
        %770 = vmatprep.subr.mxu0 0.0
        %771 = vmatpush1.xpose.msra.mxu0 0.0
        %772 = vmatprep.subr.mxu0 0.0
        %773 = vmatpush1.xpose.msra.mxu0 0.0
        %774 = vmatprep.subr.mxu0 0.0
        %775 = vmatpush1.xpose.msra.mxu0 0.0
        %776 = vmatprep.subr.mxu0 0.0
        %777 = vmatpush1.xpose.msra.mxu0 0.0
        %778 = vmatprep.subr.mxu0 0.0
        %779 = vmatpush1.xpose.msra.mxu0 0.0
        %780 = vmatprep.subr.mxu0 0.0
        %781 = vmatpush1.xpose.msra.mxu0 0.0
        %782 = vmatprep.subr.mxu0 0.0
        %783 = vmatpush1.xpose.msra.mxu0 0.0
        %784 = vmatprep.subr.mxu0 0.0
        %785 = vmatpush1.xpose.msra.mxu0 0.0
        %786 = vmatprep.subr.mxu0 0.0
        %787 = vmatpush1.xpose.msra.mxu0 0.0
        %788 = vmatprep.subr.mxu0 0.0
        %789 = vmatpush1.xpose.msra.mxu0 0.0
        %790 = vmatprep.subr.mxu0 0.0
        %791 = vmatpush1.xpose.msra.mxu0 0.0
        %792 = vmatprep.subr.mxu0 0.0
        %793 = vmatpush1.xpose.msra.mxu0 0.0
        %794 = vmatprep.subr.mxu0 0.0
        %795 = vmatpush1.xpose.msra.mxu0 0.0
        %796 = vmatprep.subr.mxu0 0.0
        %797 = vmatpush1.xpose.msra.mxu0 0.0
        %798 = vmatprep.subr.mxu0 0.0
        %799 = vmatpush1.xpose.msra.mxu0 0.0
        %800 = vmatprep.subr.mxu0 0.0
        %801 = vmatpush1.xpose.msra.mxu0 0.0
        %802 = vmatprep.subr.mxu0 0.0
        %803 = vmatpush1.xpose.msra.mxu0 0.0
        %804 = vmatprep.subr.mxu0 0.0
        %805 = vmatpush1.xpose.msra.mxu0 0.0
        %806 = vmatprep.subr.mxu0 0.0
        %807 = vmatpush1.xpose.msra.mxu0 0.0
        %808 = vmatprep.subr.mxu0 0.0
        %809 = vmatpush1.xpose.msra.mxu0 0.0
        %810 = vmatprep.subr.mxu0 0.0
        %811 = vmatpush1.xpose.msra.mxu0 0.0
        %812 = vmatprep.subr.mxu0 0.0
        %813 = vmatpush1.xpose.msra.mxu0 0.0
        %814 = vmatprep.subr.mxu0 0.0
        %815 = vmatpush1.xpose.msra.mxu0 0.0
        %816 = vmatprep.subr.mxu0 0.0
        %817 = vmatpush1.xpose.msra.mxu0 0.0
        %818 = vmatprep.mubr.f32.mxu0 0.0
        %819 = vmatmul.mubr.f32.gmra.mrb[0].mxu0 %v750
        %v820 = vpop.f32.mrb[0].mxu0
        %v821 = vadd.f32 %v578, %v820
        %v822 = vpop.f32.mrb[0].mxu0
        %823 = vdwg.mxu0
        %v824 = vsel %vm582, %v821, -inf
        %825 = vmax.xlane.f32.xlu0 %v824
        %v826 = vpop.xlane.xlu0 %825
        %v827 = vsub.f32 %v821, %v826
        %v828 = vmul.f32 %v827, 1.442695
        %v829 = vpow.pop %v828
        %v830 = vsel %vm582, %v829, 0.0
        %831 = vadd.xlane.f32.xlu0 %v830
        %v832 = vpop.xlane.xlu0 %831
        %v833 = vrcp.pop %v832
        %v834 = vmul.f32 %v829, %v833
        %835 = vrot.lane.b32.xlu0 %v569, 56
        %v836 = vpop.permute.xlu0 %835
        %v839 = vsel %vm582, %v834, 0
        %841 = vmatprep.subr.mxu0 0.0
        %842 = vmatpush1.msra.mxu0 %v836
        %843 = vmatprep.subr.mxu0 0.0
        %844 = vmatpush1.msra.mxu0 0.0
        %845 = vmatprep.subr.mxu0 0.0
        %846 = vmatpush1.msra.mxu0 0.0
        %847 = vmatprep.subr.mxu0 0.0
        %848 = vmatpush1.msra.mxu0 0.0
        %849 = vmatprep.subr.mxu0 0.0
        %850 = vmatpush1.msra.mxu0 0.0
        %851 = vmatprep.subr.mxu0 0.0
        %852 = vmatpush1.msra.mxu0 0.0
        %853 = vmatprep.subr.mxu0 0.0
        %854 = vmatpush1.msra.mxu0 0.0
        %855 = vmatprep.subr.mxu0 0.0
        %856 = vmatpush1.msra.mxu0 0.0
        %857 = vmatprep.subr.mxu0 0.0
        %858 = vmatpush1.msra.mxu0 0.0
        %859 = vmatprep.subr.mxu0 0.0
        %860 = vmatpush1.msra.mxu0 0.0
        %861 = vmatprep.subr.mxu0 0.0
        %862 = vmatpush1.msra.mxu0 0.0
        %863 = vmatprep.subr.mxu0 0.0
        %864 = vmatpush1.msra.mxu0 0.0
        %865 = vmatprep.subr.mxu0 0.0
        %866 = vmatpush1.msra.mxu0 0.0
        %867 = vmatprep.subr.mxu0 0.0
        %868 = vmatpush1.msra.mxu0 0.0
        %869 = vmatprep.subr.mxu0 0.0
        %870 = vmatpush1.msra.mxu0 0.0
        %871 = vmatprep.subr.mxu0 0.0
        %872 = vmatpush1.msra.mxu0 0.0
        %873 = vmatprep.subr.mxu0 0.0
        %874 = vmatpush1.msra.mxu0 0.0
        %875 = vmatprep.subr.mxu0 0.0
        %876 = vmatpush1.msra.mxu0 0.0
        %877 = vmatprep.subr.mxu0 0.0
        %878 = vmatpush1.msra.mxu0 0.0
        %879 = vmatprep.subr.mxu0 0.0
        %880 = vmatpush1.msra.mxu0 0.0
        %881 = vmatprep.subr.mxu0 0.0
        %882 = vmatpush1.msra.mxu0 0.0
        %883 = vmatprep.subr.mxu0 0.0
        %884 = vmatpush1.msra.mxu0 0.0
        %885 = vmatprep.subr.mxu0 0.0
        %886 = vmatpush1.msra.mxu0 0.0
        %887 = vmatprep.subr.mxu0 0.0
        %888 = vmatpush1.msra.mxu0 0.0
        %889 = vmatprep.subr.mxu0 0.0
        %890 = vmatpush1.msra.mxu0 0.0
        %891 = vmatprep.subr.mxu0 0.0
        %892 = vmatpush1.msra.mxu0 0.0
        %893 = vmatprep.subr.mxu0 0.0
        %894 = vmatpush1.msra.mxu0 0.0
        %895 = vmatprep.subr.mxu0 0.0
        %896 = vmatpush1.msra.mxu0 0.0
        %897 = vmatprep.subr.mxu0 0.0
        %898 = vmatpush1.msra.mxu0 0.0
        %899 = vmatprep.subr.mxu0 0.0
        %900 = vmatpush1.msra.mxu0 0.0
        %901 = vmatprep.subr.mxu0 0.0
        %902 = vmatpush1.msra.mxu0 0.0
        %903 = vmatprep.subr.mxu0 0.0
        %904 = vmatpush1.msra.mxu0 0.0
        %905 = vmatprep.mubr.f32.mxu0 0.0
        %906 = vmatmul.mubr.f32.gmra.mrb[0].mxu0 %v839
        %v907 = vpop.f32.mrb[0].mxu0
        %v908 = vadd.f32 0.0, %v907
        %v909 = vpop.f32.mrb[0].mxu0
        %910 = vdwg.mxu0
        %912 = vrot.lane.b32.xlu0 %v908, 8
        %v913 = vpop.permute.xlu0 %912
        %vm915 = vcmask 130112
        %916 = vst.msk [vmem:[#allocation2] sm:$0xff] %vm915, %v913
        %917 = vrot.lane.b32.xlu0 %v572, 112
        %v918 = vpop.permute.xlu0 %917
        %919 = vrot.lane.b32.xlu0 %v569, 80
        %v920 = vpop.permute.xlu0 %919
        %v921 = vsel %vm582, %v918, 0
        %v923 = vsel %vm582, %v920, 0
        %925 = vmatprep.subr.mxu0 0.0
        %926 = vmatpush1.xpose.msra.mxu0 %v923
        %927 = vmatprep.subr.mxu0 0.0
        %928 = vmatpush1.xpose.msra.mxu0 0.0
        %929 = vmatprep.subr.mxu0 0.0
        %930 = vmatpush1.xpose.msra.mxu0 0.0
        %931 = vmatprep.subr.mxu0 0.0
        %932 = vmatpush1.xpose.msra.mxu0 0.0
        %933 = vmatprep.subr.mxu0 0.0
        %934 = vmatpush1.xpose.msra.mxu0 0.0
        %935 = vmatprep.subr.mxu0 0.0
        %936 = vmatpush1.xpose.msra.mxu0 0.0
        %937 = vmatprep.subr.mxu0 0.0
        %938 = vmatpush1.xpose.msra.mxu0 0.0
        %939 = vmatprep.subr.mxu0 0.0
        %940 = vmatpush1.xpose.msra.mxu0 0.0
        %941 = vmatprep.subr.mxu0 0.0
        %942 = vmatpush1.xpose.msra.mxu0 0.0
        %943 = vmatprep.subr.mxu0 0.0
        %944 = vmatpush1.xpose.msra.mxu0 0.0
        %945 = vmatprep.subr.mxu0 0.0
        %946 = vmatpush1.xpose.msra.mxu0 0.0
        %947 = vmatprep.subr.mxu0 0.0
        %948 = vmatpush1.xpose.msra.mxu0 0.0
        %949 = vmatprep.subr.mxu0 0.0
        %950 = vmatpush1.xpose.msra.mxu0 0.0
        %951 = vmatprep.subr.mxu0 0.0
        %952 = vmatpush1.xpose.msra.mxu0 0.0
        %953 = vmatprep.subr.mxu0 0.0
        %954 = vmatpush1.xpose.msra.mxu0 0.0
        %955 = vmatprep.subr.mxu0 0.0
        %956 = vmatpush1.xpose.msra.mxu0 0.0
        %957 = vmatprep.subr.mxu0 0.0
        %958 = vmatpush1.xpose.msra.mxu0 0.0
        %959 = vmatprep.subr.mxu0 0.0
        %960 = vmatpush1.xpose.msra.mxu0 0.0
        %961 = vmatprep.subr.mxu0 0.0
        %962 = vmatpush1.xpose.msra.mxu0 0.0
        %963 = vmatprep.subr.mxu0 0.0
        %964 = vmatpush1.xpose.msra.mxu0 0.0
        %965 = vmatprep.subr.mxu0 0.0
        %966 = vmatpush1.xpose.msra.mxu0 0.0
        %967 = vmatprep.subr.mxu0 0.0
        %968 = vmatpush1.xpose.msra.mxu0 0.0
        %969 = vmatprep.subr.mxu0 0.0
        %970 = vmatpush1.xpose.msra.mxu0 0.0
        %971 = vmatprep.subr.mxu0 0.0
        %972 = vmatpush1.xpose.msra.mxu0 0.0
        %973 = vmatprep.subr.mxu0 0.0
        %974 = vmatpush1.xpose.msra.mxu0 0.0
        %975 = vmatprep.subr.mxu0 0.0
        %976 = vmatpush1.xpose.msra.mxu0 0.0
        %977 = vmatprep.subr.mxu0 0.0
        %978 = vmatpush1.xpose.msra.mxu0 0.0
        %979 = vmatprep.subr.mxu0 0.0
        %980 = vmatpush1.xpose.msra.mxu0 0.0
        %981 = vmatprep.subr.mxu0 0.0
        %982 = vmatpush1.xpose.msra.mxu0 0.0
        %983 = vmatprep.subr.mxu0 0.0
        %984 = vmatpush1.xpose.msra.mxu0 0.0
        %985 = vmatprep.subr.mxu0 0.0
        %986 = vmatpush1.xpose.msra.mxu0 0.0
        %987 = vmatprep.subr.mxu0 0.0
        %988 = vmatpush1.xpose.msra.mxu0 0.0
        %989 = vmatprep.mubr.f32.mxu0 0.0
        %990 = vmatmul.mubr.f32.gmra.mrb[0].mxu0 %v921
        %v991 = vpop.f32.mrb[0].mxu0
        %v992 = vadd.f32 %v578, %v991
        %v993 = vpop.f32.mrb[0].mxu0
        %994 = vdwg.mxu0
        %v995 = vsel %vm582, %v992, -inf
        %996 = vmax.xlane.f32.xlu0 %v995
        %v997 = vpop.xlane.xlu0 %996
        %v998 = vsub.f32 %v992, %v997
        %v999 = vmul.f32 %v998, 1.442695
        %v1000 = vpow.pop %v999
        %v1001 = vsel %vm582, %v1000, 0.0
        %1002 = vadd.xlane.f32.xlu0 %v1001
        %v1003 = vpop.xlane.xlu0 %1002
        %v1004 = vrcp.pop %v1003
        %v1005 = vmul.f32 %v1000, %v1004
        %1006 = vrot.lane.b32.xlu0 %v569, 48
        %v1007 = vpop.permute.xlu0 %1006
        %v1010 = vsel %vm582, %v1005, 0
        %1012 = vmatprep.subr.mxu0 0.0
        %1013 = vmatpush1.msra.mxu0 %v1007
        %1014 = vmatprep.subr.mxu0 0.0
        %1015 = vmatpush1.msra.mxu0 0.0
        %1016 = vmatprep.subr.mxu0 0.0
        %1017 = vmatpush1.msra.mxu0 0.0
        %1018 = vmatprep.subr.mxu0 0.0
        %1019 = vmatpush1.msra.mxu0 0.0
        %1020 = vmatprep.subr.mxu0 0.0
        %1021 = vmatpush1.msra.mxu0 0.0
        %1022 = vmatprep.subr.mxu0 0.0
        %1023 = vmatpush1.msra.mxu0 0.0
        %1024 = vmatprep.subr.mxu0 0.0
        %1025 = vmatpush1.msra.mxu0 0.0
        %1026 = vmatprep.subr.mxu0 0.0
        %1027 = vmatpush1.msra.mxu0 0.0
        %1028 = vmatprep.subr.mxu0 0.0
        %1029 = vmatpush1.msra.mxu0 0.0
        %1030 = vmatprep.subr.mxu0 0.0
        %1031 = vmatpush1.msra.mxu0 0.0
        %1032 = vmatprep.subr.mxu0 0.0
        %1033 = vmatpush1.msra.mxu0 0.0
        %1034 = vmatprep.subr.mxu0 0.0
        %1035 = vmatpush1.msra.mxu0 0.0
        %1036 = vmatprep.subr.mxu0 0.0
        %1037 = vmatpush1.msra.mxu0 0.0
        %1038 = vmatprep.subr.mxu0 0.0
        %1039 = vmatpush1.msra.mxu0 0.0
        %1040 = vmatprep.subr.mxu0 0.0
        %1041 = vmatpush1.msra.mxu0 0.0
        %1042 = vmatprep.subr.mxu0 0.0
        %1043 = vmatpush1.msra.mxu0 0.0
        %1044 = vmatprep.subr.mxu0 0.0
        %1045 = vmatpush1.msra.mxu0 0.0
        %1046 = vmatprep.subr.mxu0 0.0
        %1047 = vmatpush1.msra.mxu0 0.0
        %1048 = vmatprep.subr.mxu0 0.0
        %1049 = vmatpush1.msra.mxu0 0.0
        %1050 = vmatprep.subr.mxu0 0.0
        %1051 = vmatpush1.msra.mxu0 0.0
        %1052 = vmatprep.subr.mxu0 0.0
        %1053 = vmatpush1.msra.mxu0 0.0
        %1054 = vmatprep.subr.mxu0 0.0
        %1055 = vmatpush1.msra.mxu0 0.0
        %1056 = vmatprep.subr.mxu0 0.0
        %1057 = vmatpush1.msra.mxu0 0.0
        %1058 = vmatprep.subr.mxu0 0.0
        %1059 = vmatpush1.msra.mxu0 0.0
        %1060 = vmatprep.subr.mxu0 0.0
        %1061 = vmatpush1.msra.mxu0 0.0
        %1062 = vmatprep.subr.mxu0 0.0
        %1063 = vmatpush1.msra.mxu0 0.0
        %1064 = vmatprep.subr.mxu0 0.0
        %1065 = vmatpush1.msra.mxu0 0.0
        %1066 = vmatprep.subr.mxu0 0.0
        %1067 = vmatpush1.msra.mxu0 0.0
        %1068 = vmatprep.subr.mxu0 0.0
        %1069 = vmatpush1.msra.mxu0 0.0
        %1070 = vmatprep.subr.mxu0 0.0
        %1071 = vmatpush1.msra.mxu0 0.0
        %1072 = vmatprep.subr.mxu0 0.0
        %1073 = vmatpush1.msra.mxu0 0.0
        %1074 = vmatprep.subr.mxu0 0.0
        %1075 = vmatpush1.msra.mxu0 0.0
        %1076 = vmatprep.mubr.f32.mxu0 0.0
        %1077 = vmatmul.mubr.f32.gmra.mrb[0].mxu0 %v1010
        %v1078 = vpop.f32.mrb[0].mxu0
        %v1079 = vadd.f32 0.0, %v1078
        %v1080 = vpop.f32.mrb[0].mxu0
        %1081 = vdwg.mxu0
        %1083 = vrot.lane.b32.xlu0 %v1079, 16
        %v1084 = vpop.permute.xlu0 %1083
        %vm1086 = vcmask 195712
        %1087 = vst.msk [vmem:[#allocation2] sm:$0xff] %vm1086, %v1084
        %1088 = vrot.lane.b32.xlu0 %v572, 104
        %v1089 = vpop.permute.xlu0 %1088
        %1090 = vrot.lane.b32.xlu0 %v569, 72
        %v1091 = vpop.permute.xlu0 %1090
        %v1092 = vsel %vm582, %v1089, 0
        %v1094 = vsel %vm582, %v1091, 0
        %1096 = vmatprep.subr.mxu0 0.0
        %1097 = vmatpush1.xpose.msra.mxu0 %v1094
        %1098 = vmatprep.subr.mxu0 0.0
        %1099 = vmatpush1.xpose.msra.mxu0 0.0
        %1100 = vmatprep.subr.mxu0 0.0
        %1101 = vmatpush1.xpose.msra.mxu0 0.0
        %1102 = vmatprep.subr.mxu0 0.0
        %1103 = vmatpush1.xpose.msra.mxu0 0.0
        %1104 = vmatprep.subr.mxu0 0.0
        %1105 = vmatpush1.xpose.msra.mxu0 0.0
        %1106 = vmatprep.subr.mxu0 0.0
        %1107 = vmatpush1.xpose.msra.mxu0 0.0
        %1108 = vmatprep.subr.mxu0 0.0
        %1109 = vmatpush1.xpose.msra.mxu0 0.0
        %1110 = vmatprep.subr.mxu0 0.0
        %1111 = vmatpush1.xpose.msra.mxu0 0.0
        %1112 = vmatprep.subr.mxu0 0.0
        %1113 = vmatpush1.xpose.msra.mxu0 0.0
        %1114 = vmatprep.subr.mxu0 0.0
        %1115 = vmatpush1.xpose.msra.mxu0 0.0
        %1116 = vmatprep.subr.mxu0 0.0
        %1117 = vmatpush1.xpose.msra.mxu0 0.0
        %1118 = vmatprep.subr.mxu0 0.0
        %1119 = vmatpush1.xpose.msra.mxu0 0.0
        %1120 = vmatprep.subr.mxu0 0.0
        %1121 = vmatpush1.xpose.msra.mxu0 0.0
        %1122 = vmatprep.subr.mxu0 0.0
        %1123 = vmatpush1.xpose.msra.mxu0 0.0
        %1124 = vmatprep.subr.mxu0 0.0
        %1125 = vmatpush1.xpose.msra.mxu0 0.0
        %1126 = vmatprep.subr.mxu0 0.0
        %1127 = vmatpush1.xpose.msra.mxu0 0.0
        %1128 = vmatprep.subr.mxu0 0.0
        %1129 = vmatpush1.xpose.msra.mxu0 0.0
        %1130 = vmatprep.subr.mxu0 0.0
        %1131 = vmatpush1.xpose.msra.mxu0 0.0
        %1132 = vmatprep.subr.mxu0 0.0
        %1133 = vmatpush1.xpose.msra.mxu0 0.0
        %1134 = vmatprep.subr.mxu0 0.0
        %1135 = vmatpush1.xpose.msra.mxu0 0.0
        %1136 = vmatprep.subr.mxu0 0.0
        %1137 = vmatpush1.xpose.msra.mxu0 0.0
        %1138 = vmatprep.subr.mxu0 0.0
        %1139 = vmatpush1.xpose.msra.mxu0 0.0
        %1140 = vmatprep.subr.mxu0 0.0
        %1141 = vmatpush1.xpose.msra.mxu0 0.0
        %1142 = vmatprep.subr.mxu0 0.0
        %1143 = vmatpush1.xpose.msra.mxu0 0.0
        %1144 = vmatprep.subr.mxu0 0.0
        %1145 = vmatpush1.xpose.msra.mxu0 0.0
        %1146 = vmatprep.subr.mxu0 0.0
        %1147 = vmatpush1.xpose.msra.mxu0 0.0
        %1148 = vmatprep.subr.mxu0 0.0
        %1149 = vmatpush1.xpose.msra.mxu0 0.0
        %1150 = vmatprep.subr.mxu0 0.0
        %1151 = vmatpush1.xpose.msra.mxu0 0.0
        %1152 = vmatprep.subr.mxu0 0.0
        %1153 = vmatpush1.xpose.msra.mxu0 0.0
        %1154 = vmatprep.subr.mxu0 0.0
        %1155 = vmatpush1.xpose.msra.mxu0 0.0
        %1156 = vmatprep.subr.mxu0 0.0
        %1157 = vmatpush1.xpose.msra.mxu0 0.0
        %1158 = vmatprep.subr.mxu0 0.0
        %1159 = vmatpush1.xpose.msra.mxu0 0.0
        %1160 = vmatprep.mubr.f32.mxu0 0.0
        %1161 = vmatmul.mubr.f32.gmra.mrb[0].mxu0 %v1092
        %v1162 = vpop.f32.mrb[0].mxu0
        %v1163 = vadd.f32 %v578, %v1162
        %v1164 = vpop.f32.mrb[0].mxu0
        %1165 = vdwg.mxu0
        %v1166 = vsel %vm582, %v1163, -inf
        %1167 = vmax.xlane.f32.xlu0 %v1166
        %v1168 = vpop.xlane.xlu0 %1167
        %v1169 = vsub.f32 %v1163, %v1168
        %v1170 = vmul.f32 %v1169, 1.442695
        %v1171 = vpow.pop %v1170
        %v1172 = vsel %vm582, %v1171, 0.0
        %1173 = vadd.xlane.f32.xlu0 %v1172
        %v1174 = vpop.xlane.xlu0 %1173
        %v1175 = vrcp.pop %v1174
        %v1176 = vmul.f32 %v1171, %v1175
        %1177 = vrot.lane.b32.xlu0 %v569, 40
        %v1178 = vpop.permute.xlu0 %1177
        %v1181 = vsel %vm582, %v1176, 0
        %1183 = vmatprep.subr.mxu0 0.0
        %1184 = vmatpush1.msra.mxu0 %v1178
        %1185 = vmatprep.subr.mxu0 0.0
        %1186 = vmatpush1.msra.mxu0 0.0
        %1187 = vmatprep.subr.mxu0 0.0
        %1188 = vmatpush1.msra.mxu0 0.0
        %1189 = vmatprep.subr.mxu0 0.0
        %1190 = vmatpush1.msra.mxu0 0.0
        %1191 = vmatprep.subr.mxu0 0.0
        %1192 = vmatpush1.msra.mxu0 0.0
        %1193 = vmatprep.subr.mxu0 0.0
        %1194 = vmatpush1.msra.mxu0 0.0
        %1195 = vmatprep.subr.mxu0 0.0
        %1196 = vmatpush1.msra.mxu0 0.0
        %1197 = vmatprep.subr.mxu0 0.0
        %1198 = vmatpush1.msra.mxu0 0.0
        %1199 = vmatprep.subr.mxu0 0.0
        %1200 = vmatpush1.msra.mxu0 0.0
        %1201 = vmatprep.subr.mxu0 0.0
        %1202 = vmatpush1.msra.mxu0 0.0
        %1203 = vmatprep.subr.mxu0 0.0
        %1204 = vmatpush1.msra.mxu0 0.0
        %1205 = vmatprep.subr.mxu0 0.0
        %1206 = vmatpush1.msra.mxu0 0.0
        %1207 = vmatprep.subr.mxu0 0.0
        %1208 = vmatpush1.msra.mxu0 0.0
        %1209 = vmatprep.subr.mxu0 0.0
        %1210 = vmatpush1.msra.mxu0 0.0
        %1211 = vmatprep.subr.mxu0 0.0
        %1212 = vmatpush1.msra.mxu0 0.0
        %1213 = vmatprep.subr.mxu0 0.0
        %1214 = vmatpush1.msra.mxu0 0.0
        %1215 = vmatprep.subr.mxu0 0.0
        %1216 = vmatpush1.msra.mxu0 0.0
        %1217 = vmatprep.subr.mxu0 0.0
        %1218 = vmatpush1.msra.mxu0 0.0
        %1219 = vmatprep.subr.mxu0 0.0
        %1220 = vmatpush1.msra.mxu0 0.0
        %1221 = vmatprep.subr.mxu0 0.0
        %1222 = vmatpush1.msra.mxu0 0.0
        %1223 = vmatprep.subr.mxu0 0.0
        %1224 = vmatpush1.msra.mxu0 0.0
        %1225 = vmatprep.subr.mxu0 0.0
        %1226 = vmatpush1.msra.mxu0 0.0
        %1227 = vmatprep.subr.mxu0 0.0
        %1228 = vmatpush1.msra.mxu0 0.0
        %1229 = vmatprep.subr.mxu0 0.0
        %1230 = vmatpush1.msra.mxu0 0.0
        %1231 = vmatprep.subr.mxu0 0.0
        %1232 = vmatpush1.msra.mxu0 0.0
        %1233 = vmatprep.subr.mxu0 0.0
        %1234 = vmatpush1.msra.mxu0 0.0
        %1235 = vmatprep.subr.mxu0 0.0
        %1236 = vmatpush1.msra.mxu0 0.0
        %1237 = vmatprep.subr.mxu0 0.0
        %1238 = vmatpush1.msra.mxu0 0.0
        %1239 = vmatprep.subr.mxu0 0.0
        %1240 = vmatpush1.msra.mxu0 0.0
        %1241 = vmatprep.subr.mxu0 0.0
        %1242 = vmatpush1.msra.mxu0 0.0
        %1243 = vmatprep.subr.mxu0 0.0
        %1244 = vmatpush1.msra.mxu0 0.0
        %1245 = vmatprep.subr.mxu0 0.0
        %1246 = vmatpush1.msra.mxu0 0.0
        %1247 = vmatprep.mubr.f32.mxu0 0.0
        %1248 = vmatmul.mubr.f32.gmra.mrb[0].mxu0 %v1181
        %v1249 = vpop.f32.mrb[0].mxu0
        %v1250 = vadd.f32 0.0, %v1249
        %v1251 = vpop.f32.mrb[0].mxu0
        %1252 = vdwg.mxu0
        %1254 = vrot.lane.b32.xlu0 %v1250, 24
        %v1255 = vpop.permute.xlu0 %1254
        %vm1257 = vcmask 261312
        %1258 = vst.msk [vmem:[#allocation2] sm:$0xff] %vm1257, %v1255
        %v1259 = vld [vmem:[#allocation2] sm:$0xff]
        %v1260 = vld [vmem:[%s5] sm:$0xff]
        %v1261 = vld [vmem:[%s5 + $0x8] sm:$0xff]
        %v1262 = vld [vmem:[%s5 + $0x10] sm:$0xff]
        %v1263 = vld [vmem:[%s5 + $0x18] sm:$0xff]
        %v1265 = vsel %vm459, %v1259, 0
        %1267 = vmatprep.subr.mxu0 0.0
        %1268 = vmatpush1.msra.mxu0 %v1260
        %1269 = vmatprep.subr.mxu0 0.0
        %1270 = vmatpush1.msra.mxu0 %v1261
        %1271 = vmatprep.subr.mxu0 0.0
        %1272 = vmatpush1.msra.mxu0 %v1262
        %1273 = vmatprep.subr.mxu0 0.0
        %1274 = vmatpush1.msra.mxu0 %v1263
        %1275 = vmatprep.subr.mxu0 0.0
        %1276 = vmatpush1.msra.mxu0 0.0
        %1277 = vmatprep.subr.mxu0 0.0
        %1278 = vmatpush1.msra.mxu0 0.0
        %1279 = vmatprep.subr.mxu0 0.0
        %1280 = vmatpush1.msra.mxu0 0.0
        %1281 = vmatprep.subr.mxu0 0.0
        %1282 = vmatpush1.msra.mxu0 0.0
        %1283 = vmatprep.subr.mxu0 0.0
        %1284 = vmatpush1.msra.mxu0 0.0
        %1285 = vmatprep.subr.mxu0 0.0
        %1286 = vmatpush1.msra.mxu0 0.0
        %1287 = vmatprep.subr.mxu0 0.0
        %1288 = vmatpush1.msra.mxu0 0.0
        %1289 = vmatprep.subr.mxu0 0.0
        %1290 = vmatpush1.msra.mxu0 0.0
        %1291 = vmatprep.subr.mxu0 0.0
        %1292 = vmatpush1.msra.mxu0 0.0
        %1293 = vmatprep.subr.mxu0 0.0
        %1294 = vmatpush1.msra.mxu0 0.0
        %1295 = vmatprep.subr.mxu0 0.0
        %1296 = vmatpush1.msra.mxu0 0.0
        %1297 = vmatprep.subr.mxu0 0.0
        %1298 = vmatpush1.msra.mxu0 0.0
        %1299 = vmatprep.subr.mxu0 0.0
        %1300 = vmatpush1.msra.mxu0 0.0
        %1301 = vmatprep.subr.mxu0 0.0
        %1302 = vmatpush1.msra.mxu0 0.0
        %1303 = vmatprep.subr.mxu0 0.0
        %1304 = vmatpush1.msra.mxu0 0.0
        %1305 = vmatprep.subr.mxu0 0.0
        %1306 = vmatpush1.msra.mxu0 0.0
        %1307 = vmatprep.subr.mxu0 0.0
        %1308 = vmatpush1.msra.mxu0 0.0
        %1309 = vmatprep.subr.mxu0 0.0
        %1310 = vmatpush1.msra.mxu0 0.0
        %1311 = vmatprep.subr.mxu0 0.0
        %1312 = vmatpush1.msra.mxu0 0.0
        %1313 = vmatprep.subr.mxu0 0.0
        %1314 = vmatpush1.msra.mxu0 0.0
        %1315 = vmatprep.subr.mxu0 0.0
        %1316 = vmatpush1.msra.mxu0 0.0
        %1317 = vmatprep.subr.mxu0 0.0
        %1318 = vmatpush1.msra.mxu0 0.0
        %1319 = vmatprep.subr.mxu0 0.0
        %1320 = vmatpush1.msra.mxu0 0.0
        %1321 = vmatprep.subr.mxu0 0.0
        %1322 = vmatpush1.msra.mxu0 0.0
        %1323 = vmatprep.subr.mxu0 0.0
        %1324 = vmatpush1.msra.mxu0 0.0
        %1325 = vmatprep.subr.mxu0 0.0
        %1326 = vmatpush1.msra.mxu0 0.0
        %1327 = vmatprep.subr.mxu0 0.0
        %1328 = vmatpush1.msra.mxu0 0.0
        %1329 = vmatprep.subr.mxu0 0.0
        %1330 = vmatpush1.msra.mxu0 0.0
        %1331 = vmatprep.mubr.f32.mxu0 0.0
        %1332 = vmatmul.mubr.f32.gmra.mrb[0].mxu0 %v1265
        %v1333 = vpop.f32.mrb[0].mxu0
        %v1334 = vadd.f32 0.0, %v1333
        %v1335 = vpop.f32.mrb[0].mxu0
        %1336 = vdwg.mxu0
        %v1337 = vadd.f32 %v456, %v1334
        %v1338 = vld [vmem:[%s6] sm:$0x1]
        %v1340 = vlaneseq
        %v1341 = vshrl.u32 %v1340, 7
        %v1342 = vsub.s32 0, %v1341
        %v1343 = vrot.slane %v1338, %v1342
        %v1345 = vadd.f32 %v1337, %v1343
        %v1346 = vld [vmem:[%s7] sm:$0x1]
        %v1347 = vld [vmem:[%s8] sm:$0x1]
        %v1348 = vsel %vm459, %v1345, 0.0
        %1349 = vadd.xlane.f32.xlu0 %v1348
        %v1350 = vpop.xlane.xlu0 %1349
        %v1351 = vmul.f32 %v1350, %v463
        %v1352 = vsub.f32 %v1345, %v1351
        %v1353 = vmul.f32 %v1352, %v1352
        %v1354 = vsel %vm459, %v1353, 0.0
        %1355 = vadd.xlane.f32.xlu0 %v1354
        %v1356 = vpop.xlane.xlu0 %1355
        %v1357 = vmul.f32 %v1356, %v463
        %v1358 = vadd.f32 %v1357, 1e-05
        %v1359 = vrsqrt.pop %v1358
        %v1360 = vmul.f32 %v1352, %v1359
        %v1362 = vlaneseq
        %v1363 = vshrl.u32 %v1362, 7
        %v1364 = vsub.s32 0, %v1363
        %v1365 = vrot.slane %v1346, %v1364
        %v1367 = vmul.f32 %v1360, %v1365
        %v1369 = vlaneseq
        %v1370 = vshrl.u32 %v1369, 7
        %v1371 = vsub.s32 0, %v1370
        %v1372 = vrot.slane %v1347, %v1371
        %v1374 = vadd.f32 %v1367, %v1372
        %v1375 = vld [vmem:[%s9] sm:$0xff]
        %v1376 = vld [vmem:[%s9 + $0x8] sm:$0xff]
        %v1377 = vld [vmem:[%s9 + $0x10] sm:$0xff]
        %v1378 = vld [vmem:[%s9 + $0x18] sm:$0xff]
        %v1379 = vld [vmem:[%s10] sm:$0x1]
        %v1381 = vlaneseq
        %v1382 = vshrl.u32 %v1381, 7
        %v1383 = vsub.s32 0, %v1382
        %v1384 = vrot.slane %v1379, %v1383
        %v1387 = vsel %vm459, %v1374, 0
        %1389 = vmatprep.subr.mxu0 0.0
        %1390 = vmatpush1.msra.mxu0 %v1375
        %1391 = vmatprep.subr.mxu0 0.0
        %1392 = vmatpush1.msra.mxu0 %v1376
        %1393 = vmatprep.subr.mxu0 0.0
        %1394 = vmatpush1.msra.mxu0 %v1377
        %1395 = vmatprep.subr.mxu0 0.0
        %1396 = vmatpush1.msra.mxu0 %v1378
        %1397 = vmatprep.subr.mxu0 0.0
        %1398 = vmatpush1.msra.mxu0 0.0
        %1399 = vmatprep.subr.mxu0 0.0
        %1400 = vmatpush1.msra.mxu0 0.0
        %1401 = vmatprep.subr.mxu0 0.0
        %1402 = vmatpush1.msra.mxu0 0.0
        %1403 = vmatprep.subr.mxu0 0.0
        %1404 = vmatpush1.msra.mxu0 0.0
        %1405 = vmatprep.subr.mxu0 0.0
        %1406 = vmatpush1.msra.mxu0 0.0
        %1407 = vmatprep.subr.mxu0 0.0
        %1408 = vmatpush1.msra.mxu0 0.0
        %1409 = vmatprep.subr.mxu0 0.0
        %1410 = vmatpush1.msra.mxu0 0.0
        %1411 = vmatprep.subr.mxu0 0.0
        %1412 = vmatpush1.msra.mxu0 0.0
        %1413 = vmatprep.subr.mxu0 0.0
        %1414 = vmatpush1.msra.mxu0 0.0
        %1415 = vmatprep.subr.mxu0 0.0
        %1416 = vmatpush1.msra.mxu0 0.0
        %1417 = vmatprep.subr.mxu0 0.0
        %1418 = vmatpush1.msra.mxu0 0.0
        %1419 = vmatprep.subr.mxu0 0.0
        %1420 = vmatpush1.msra.mxu0 0.0
        %1421 = vmatprep.subr.mxu0 0.0
        %1422 = vmatpush1.msra.mxu0 0.0
        %1423 = vmatprep.subr.mxu0 0.0
        %1424 = vmatpush1.msra.mxu0 0.0
        %1425 = vmatprep.subr.mxu0 0.0
        %1426 = vmatpush1.msra.mxu0 0.0
        %1427 = vmatprep.subr.mxu0 0.0
        %1428 = vmatpush1.msra.mxu0 0.0
        %1429 = vmatprep.subr.mxu0 0.0
        %1430 = vmatpush1.msra.mxu0 0.0
        %1431 = vmatprep.subr.mxu0 0.0
        %1432 = vmatpush1.msra.mxu0 0.0
        %1433 = vmatprep.subr.mxu0 0.0
        %1434 = vmatpush1.msra.mxu0 0.0
        %1435 = vmatprep.subr.mxu0 0.0
        %1436 = vmatpush1.msra.mxu0 0.0
        %1437 = vmatprep.subr.mxu0 0.0
        %1438 = vmatpush1.msra.mxu0 0.0
        %1439 = vmatprep.subr.mxu0 0.0
        %1440 = vmatpush1.msra.mxu0 0.0
        %1441 = vmatprep.subr.mxu0 0.0
        %1442 = vmatpush1.msra.mxu0 0.0
        %1443 = vmatprep.subr.mxu0 0.0
        %1444 = vmatpush1.msra.mxu0 0.0
        %1445 = vmatprep.subr.mxu0 0.0
        %1446 = vmatpush1.msra.mxu0 0.0
        %1447 = vmatprep.subr.mxu0 0.0
        %1448 = vmatpush1.msra.mxu0 0.0
        %1449 = vmatprep.subr.mxu0 0.0
        %1450 = vmatpush1.msra.mxu0 0.0
        %1451 = vmatprep.subr.mxu0 0.0
        %1452 = vmatpush1.msra.mxu0 0.0
        %1453 = vmatprep.mubr.f32.mxu0 0.0
        %1454 = vmatmul.mubr.f32.gmra.mrb[0].mxu0 %v1387
        %v1455 = vpop.f32.mrb[0].mxu0
        %v1456 = vadd.f32 %v1384, %v1455
        %v1457 = vpop.f32.mrb[0].mxu0
        %1458 = vdwg.mxu0
        %v1459 = vmax.f32 %v1456, 0.0
        %v1460 = vld [vmem:[%s11] sm:$0xff]
        %v1461 = vld [vmem:[%s11 + $0x8] sm:$0xff]
        %v1462 = vld [vmem:[%s11 + $0x10] sm:$0xff]
        %v1463 = vld [vmem:[%s11 + $0x18] sm:$0xff]
        %v1464 = vld [vmem:[%s11 + $0x20] sm:$0xff]
        %v1465 = vld [vmem:[%s11 + $0x28] sm:$0xff]
        %v1466 = vld [vmem:[%s11 + $0x30] sm:$0xff]
        %v1467 = vld [vmem:[%s11 + $0x38] sm:$0xff]
        %vm1468 = vcmask 523264
        %v1470 = vsel %vm1468, %v1459, 0
        %1472 = vmatprep.subr.mxu0 0.0
        %1473 = vmatpush1.msra.mxu0 %v1460
        %1474 = vmatprep.subr.mxu0 0.0
        %1475 = vmatpush1.msra.mxu0 %v1461
        %1476 = vmatprep.subr.mxu0 0.0
        %1477 = vmatpush1.msra.mxu0 %v1462
        %1478 = vmatprep.subr.mxu0 0.0
        %1479 = vmatpush1.msra.mxu0 %v1463
        %1480 = vmatprep.subr.mxu0 0.0
        %1481 = vmatpush1.msra.mxu0 %v1464
        %1482 = vmatprep.subr.mxu0 0.0
        %1483 = vmatpush1.msra.mxu0 %v1465
        %1484 = vmatprep.subr.mxu0 0.0
        %1485 = vmatpush1.msra.mxu0 %v1466
        %1486 = vmatprep.subr.mxu0 0.0
        %1487 = vmatpush1.msra.mxu0 %v1467
        %1488 = vmatprep.subr.mxu0 0.0
        %1489 = vmatpush1.msra.mxu0 0.0
        %1490 = vmatprep.subr.mxu0 0.0
        %1491 = vmatpush1.msra.mxu0 0.0
        %1492 = vmatprep.subr.mxu0 0.0
        %1493 = vmatpush1.msra.mxu0 0.0
        %1494 = vmatprep.subr.mxu0 0.0
        %1495 = vmatpush1.msra.mxu0 0.0
        %1496 = vmatprep.subr.mxu0 0.0
        %1497 = vmatpush1.msra.mxu0 0.0
        %1498 = vmatprep.subr.mxu0 0.0
        %1499 = vmatpush1.msra.mxu0 0.0
        %1500 = vmatprep.subr.mxu0 0.0
        %1501 = vmatpush1.msra.mxu0 0.0
        %1502 = vmatprep.subr.mxu0 0.0
        %1503 = vmatpush1.msra.mxu0 0.0
        %1504 = vmatprep.subr.mxu0 0.0
        %1505 = vmatpush1.msra.mxu0 0.0
        %1506 = vmatprep.subr.mxu0 0.0
        %1507 = vmatpush1.msra.mxu0 0.0
        %1508 = vmatprep.subr.mxu0 0.0
        %1509 = vmatpush1.msra.mxu0 0.0
        %1510 = vmatprep.subr.mxu0 0.0
        %1511 = vmatpush1.msra.mxu0 0.0
        %1512 = vmatprep.subr.mxu0 0.0
        %1513 = vmatpush1.msra.mxu0 0.0
        %1514 = vmatprep.subr.mxu0 0.0
        %1515 = vmatpush1.msra.mxu0 0.0
        %1516 = vmatprep.subr.mxu0 0.0
        %1517 = vmatpush1.msra.mxu0 0.0
        %1518 = vmatprep.subr.mxu0 0.0
        %1519 = vmatpush1.msra.mxu0 0.0
        %1520 = vmatprep.subr.mxu0 0.0
        %1521 = vmatpush1.msra.mxu0 0.0
        %1522 = vmatprep.subr.mxu0 0.0
        %1523 = vmatpush1.msra.mxu0 0.0
        %1524 = vmatprep.subr.mxu0 0.0
        %1525 = vmatpush1.msra.mxu0 0.0
        %1526 = vmatprep.subr.mxu0 0.0
        %1527 = vmatpush1.msra.mxu0 0.0
        %1528 = vmatprep.subr.mxu0 0.0
        %1529 = vmatpush1.msra.mxu0 0.0
        %1530 = vmatprep.subr.mxu0 0.0
        %1531 = vmatpush1.msra.mxu0 0.0
        %1532 = vmatprep.subr.mxu0 0.0
        %1533 = vmatpush1.msra.mxu0 0.0
        %1534 = vmatprep.subr.mxu0 0.0
        %1535 = vmatpush1.msra.mxu0 0.0
        %1536 = vmatprep.mubr.f32.mxu0 0.0
        %1537 = vmatmul.mubr.f32.gmra.mrb[0].mxu0 %v1470
        %v1538 = vpop.f32.mrb[0].mxu0
        %v1539 = vadd.f32 0.0, %v1538
        %v1540 = vpop.f32.mrb[0].mxu0
        %1541 = vdwg.mxu0
        %v1542 = vadd.f32 %v1345, %v1539
        %v1543 = vld [vmem:[%s12] sm:$0x1]
        %v1545 = vlaneseq
        %v1546 = vshrl.u32 %v1545, 7
        %v1547 = vsub.s32 0, %v1546
        %v1548 = vrot.slane %v1543, %v1547
        %v1550 = vadd.f32 %v1542, %v1548
        %1551 = vst.msk [vmem:[%s455] sm:$0xff] %vm459, %v1550
        %s1552 = sand.u32 %s316, 1
        %s1553 = scalar_lea.sflag [#allocation5], %s1552
        %s1554 = sand.u32 %s316, 1
        %s1555 = smul.addr %s1554, 8
        %s1556 = scalar_lea.vmem [#allocation6], %s1555
        // Predicated region
        $region77: #{tpu_custom_call.1} parent=71 // pred_check
          %p1557 = pneg %p326
        $region78: #{tpu_custom_call.1} parent=71 // pred_check_branch
          %1559 = sbr.rel (%p1557) target = $region80
        $region79: #{tpu_custom_call.1} parent=71 // pred_region
          %s1561 = ssub.s32 128, 128
          %1562 = vsyncadd %s1553, %s1561
          %s1563 = smul.addr %s30, 128
          %s1564 = scalar_lea.hbm %s13, %s1563
          %s1566 = sshll.u32 %s1556, 4
          %s1567 = int_to_ptr.vmem [resolvable:$true] %s1566
          %1569 = dma.vmem_to_hbm [thread:$0]  %s1567, 128, %s1564, %s1553
        $region80: #{tpu_custom_call.1} parent=71 // pred_fallthru
          _
      $region72: #{tpu_custom_call.1} parent=5 // pred_fallthru
        _
      %p1570 = scmp.le.s32.totalorder 2, %s25
      // Predicated region
      $region81: #{tpu_custom_call.1} parent=5 // pred_check
        %p1571 = pneg %p1570
      $region82: #{tpu_custom_call.1} parent=5 // pred_check_branch
        %1573 = sbr.rel (%p1571) target = $region84
      $region83: #{tpu_custom_call.1} parent=5 // pred_region
        %s1574 = ssub.s32 %s25, 2
        // Predicated region
        $region85: #{tpu_custom_call.1} parent=83 // pred_check
          %p1575 = pneg %p332
        $region86: #{tpu_custom_call.1} parent=83 // pred_check_branch
          %1577 = sbr.rel (%p1575) target = $region88
        $region87: #{tpu_custom_call.1} parent=83 // pred_region
          %s1578 = sand.u32 %s317, 1
          %s1579 = scalar_lea.sflag [#allocation5], %s1578
          %s1580 = sand.u32 %s317, 1
          %s1581 = smul.addr %s1580, 8
          %s1582 = scalar_lea.vmem [#allocation6], %s1581
          %1583 = dma.done %s1579, 128
        $region88: #{tpu_custom_call.1} parent=83 // pred_fallthru
          _
      $region84: #{tpu_custom_call.1} parent=5 // pred_fallthru
        _
    $region6: #{tpu_custom_call.1} parent=1 // loop_footer
      %s29 = sadd.s32 1, %s25
    $region7: #{tpu_custom_call.1} parent=1 // loop_footer_branch
      %24 = sbr.rel target = $region3
    $region8: #{tpu_custom_call.1} parent=1 // loop_exit
      _
    %1584 = vsyncpa [#allocation4], 1
    %s1585 = scalar_lea.sflag [#allocation4], 1
    %1586 = vsyncpa %s1585, 1
    %1587 = vsyncpa [#allocation5], 1
    %s1588 = scalar_lea.sflag [#allocation5], 1
    %1589 = vsyncpa %s1588, 1

</llo_original>
